<compile_context>
chip_gen: v7x
topology: tpu7x:2x2x1
jax: 0.10.0
libtpu: 0.0.40
codegen_flags: <defaults>
</compile_context>

<pallas_src>
import functools

import numpy as np
import jax
import jax.numpy as jnp
from jax import lax
from jax.experimental import pallas as pl
from jax.experimental.pallas import tpu as pltpu

_LANES = 128   # EPG configuration order k lives along the 128-lane axis.
_SUBL = 8      # output sublanes (0..5 used: Fp_re/im, Fm_re/im, Z_re/im)
_NROWS = 24    # coefficient-table rows: re/im of 12 complex coefficients


def _epg_kernel(tab_ref, out_ref, state_ref, *, n_states, chunk, unroll):
    """One chunk of the N-pulse EPG recurrence.

    tab_ref  : SMEM (24, N_pad) f32 — per-pulse fused coefficients (relaxation,
               B0 precession and RF rotation folded in the wrapper). Rows are
               re/im of [B_pp, B_pm, B_pz, C_p, B_mp, B_mm, B_mz, C_m,
                         B_zp, B_zm, B_zz, C_z].
    out_ref  : VMEM (chunk, 8, 128) f32 — post-shift states after each pulse,
               sublanes 0..5 = Fp_re, Fp_im, Fm_re, Fm_im, Z_re, Z_im.
    state_ref: VMEM (6, 1, 128) f32 scratch — state carried across chunks.
    """
    n = pl.program_id(0)
    L = out_ref.shape[2]
    base = n * chunk

    lane = lax.broadcasted_iota(jnp.int32, (1, L), 1)
    zeros = jnp.zeros((1, L), jnp.float32)
    # Post-shift kill masks. Reference sets Fp[0]=0 and Fm[-1]=0; lanes >=
    # n_states are padding and must never leak back into physical lanes (the
    # only inward data path is the Fm shift, which fm_kill cuts every pulse).
    # NOTE: if this layout is ever lane-batched over multiple simulations,
    # these masks must become segment-aligned per simulation.
    fp_kill = jnp.logical_or(lane == 0, lane >= n_states)
    fm_kill = lane >= (n_states - 1)

    @pl.when(n == 0)
    def _():
        for s in range(6):
            state_ref[s] = zeros
        state_ref[4] = jnp.where(lane == 0, 1.0, 0.0).astype(jnp.float32)

    init = tuple(state_ref[s] for s in range(6))

    def body(j, carry):
        fp_re, fp_im, fm_re, fm_im, z_re, z_im = carry
        i = base + j

        app_r = tab_ref[0, i];  app_i = tab_ref[1, i]
        apm_r = tab_ref[2, i];  apm_i = tab_ref[3, i]
        apz_r = tab_ref[4, i];  apz_i = tab_ref[5, i]
        cp_r  = tab_ref[6, i];  cp_i  = tab_ref[7, i]
        amp_r = tab_ref[8, i];  amp_i = tab_ref[9, i]
        amm_r = tab_ref[10, i]; amm_i = tab_ref[11, i]
        amz_r = tab_ref[12, i]; amz_i = tab_ref[13, i]
        cm_r  = tab_ref[14, i]; cm_i  = tab_ref[15, i]
        azp_r = tab_ref[16, i]; azp_i = tab_ref[17, i]
        azm_r = tab_ref[18, i]; azm_i = tab_ref[19, i]
        azz_r = tab_ref[20, i]; azz_i = tab_ref[21, i]
        cz_r  = tab_ref[22, i]; cz_i  = tab_ref[23, i]

        # Fused relax + B0 precession + RF rotation: 9 complex MACs + consts.
        #   Fp' = B_pp*Fp + B_pm*conj(Fm) + B_pz*Z + C_p
        #   Fm' = B_mp*conj(Fp) + B_mm*Fm + B_mz*Z + C_m
        #   Z'  = B_zp*Fp + B_zm*Fm + B_zz*Z + C_z
        fpn_re = (app_r * fp_re - app_i * fp_im
                  + apm_r * fm_re + apm_i * fm_im
                  + apz_r * z_re - apz_i * z_im + cp_r)
        fpn_im = (app_r * fp_im + app_i * fp_re
                  + apm_i * fm_re - apm_r * fm_im
                  + apz_r * z_im + apz_i * z_re + cp_i)
        fmn_re = (amp_r * fp_re + amp_i * fp_im
                  + amm_r * fm_re - amm_i * fm_im
                  + amz_r * z_re - amz_i * z_im + cm_r)
        fmn_im = (amp_i * fp_re - amp_r * fp_im
                  + amm_r * fm_im + amm_i * fm_re
                  + amz_r * z_im + amz_i * z_re + cm_i)
        zn_re = (azp_r * fp_re - azp_i * fp_im
                 + azm_r * fm_re - azm_i * fm_im
                 + azz_r * z_re - azz_i * z_im + cz_r)
        zn_im = (azp_i * fp_re + azp_r * fp_im
                 + azm_i * fm_re + azm_r * fm_im
                 + azz_i * z_re + azz_r * z_im + cz_i)

        # EPG gradient shift: XLU rolls (Fm shift of -1 expressed as +L-1,
        # pltpu.roll requires non-negative shifts) + one select per plane.
        fp_re = jnp.where(fp_kill, 0.0, pltpu.roll(fpn_re, shift=1, axis=1))
        fp_im = jnp.where(fp_kill, 0.0, pltpu.roll(fpn_im, shift=1, axis=1))
        fm_re = jnp.where(fm_kill, 0.0, pltpu.roll(fmn_re, shift=L - 1, axis=1))
        fm_im = jnp.where(fm_kill, 0.0, pltpu.roll(fmn_im, shift=L - 1, axis=1))
        z_re = zn_re
        z_im = zn_im

        # Direct single-sublane stores (no cross-sublane concatenate/relayout);
        # padding sublanes 6..7 are never written.
        out_ref[j, pl.ds(0, 1), :] = fp_re
        out_ref[j, pl.ds(1, 1), :] = fp_im
        out_ref[j, pl.ds(2, 1), :] = fm_re
        out_ref[j, pl.ds(3, 1), :] = fm_im
        out_ref[j, pl.ds(4, 1), :] = z_re
        out_ref[j, pl.ds(5, 1), :] = z_im

        return (fp_re, fp_im, fm_re, fm_im, z_re, z_im)

    final = lax.fori_loop(0, chunk, body, init, unroll=unroll)

    # Carry state to the next chunk.
    for s in range(6):
        state_ref[s] = final[s]


def epg_simulation(flip_angles, phases, T1, T2, TR, TE, B0=0.0, B1=1.0,
                   n_states=21, max_chunk=256):
    """Pallas-backed equivalent of EPGSimulation(n_states).forward(...).

    Returns stacked complex64 arrays (Fp, Fm, Z), each of shape (N, n_states);
    use `epg_simulation_states` for the module's list-of-tuples view.
    """
    del TE  # unused by the reference forward pass as well
    if n_states > _LANES:
        # TODO(synk): n_states > 128 would need a multi-vreg state layout.
        raise NotImplementedError("n_states must be <= 128")
    N = int(flip_angles.shape[0])
    S = int(n_states)

    chunk = int(min(max_chunk, N))
    n_chunks = -(-N // chunk)
    N_pad = n_chunks * chunk

    # ---- fold relaxation + B0 precession + RF rotation into coefficients ----
    TRf = jnp.float32(TR)
    E1 = jnp.exp(-TRf / jnp.float32(T1))
    E2 = jnp.exp(-TRf / jnp.float32(T2))
    one_m_E1 = 1.0 - E1
    phi = jnp.float32(2.0 * np.pi * B0 * TR / 1000.0)
    eip = jnp.exp(1j * phi).astype(jnp.complex64)
    emip = jnp.conj(eip)
    E2p = E2 * eip        # E2 * e^{+i phi}
    E2m = E2 * emip       # E2 * e^{-i phi}

    flip_eff = jnp.asarray(flip_angles, jnp.float32) * jnp.float32(B1)
    ph = jnp.asarray(phases, jnp.float32)
    ca = jnp.cos(0.5 * flip_eff)
    sa = jnp.sin(0.5 * flip_eff)
    c2, s2, cs = ca * ca, sa * sa, ca * sa
    dz = c2 - s2
    eb = jnp.exp(1j * ph).astype(jnp.complex64)
    e2b = eb * eb
    emb = jnp.conj(eb)
    em2b = jnp.conj(e2b)
    j_cs_eb = 1j * cs * eb
    j_cs_emb = 1j * cs * emb

    coeffs = [
        c2 * E2p,                                # B_pp
        s2 * E2p * e2b,                          # B_pm  (acts on conj(Fm))
        j_cs_eb * E1,                            # B_pz
        j_cs_eb * one_m_E1,                      # C_p
        s2 * E2m * em2b,                         # B_mp  (acts on conj(Fp))
        c2 * E2m,                                # B_mm
        -j_cs_emb * E1,                          # B_mz
        -j_cs_emb * one_m_E1,                    # C_m
        -j_cs_emb * E2p,                         # B_zp
        j_cs_eb * E2m,                           # B_zm
        (dz * E1).astype(jnp.complex64),         # B_zz
        (dz * one_m_E1).astype(jnp.complex64),   # C_z
    ]
    rows = []
    for c in coeffs:
        c = jnp.asarray(c, jnp.complex64)
        rows.append(jnp.real(c).astype(jnp.float32))
        rows.append(jnp.imag(c).astype(jnp.float32))
    tab = jnp.stack(rows, axis=0)                        # (24, N)
    if N_pad > N:
        # Zero coefficients => zero padded-pulse states; their output rows are
        # discarded below and the carry is never used past the last real pulse.
        tab = jnp.pad(tab, ((0, 0), (0, N_pad - N)))

    unroll = min(8, chunk)
    kernel = functools.partial(_epg_kernel, n_states=S, chunk=chunk,
                               unroll=unroll)
    out = pl.pallas_call(
        kernel,
        out_shape=jax.ShapeDtypeStruct((N_pad, _SUBL, _LANES), jnp.float32),
        grid_spec=pltpu.PrefetchScalarGridSpec(
            num_scalar_prefetch=1,                       # tab -> SMEM
            grid=(n_chunks,),
            in_specs=[],
            out_specs=pl.BlockSpec((chunk, _SUBL, _LANES),
                                   lambda n, tab: (n, 0, 0)),
            scratch_shapes=[pltpu.VMEM((6, 1, _LANES), jnp.float32)]),
        compiler_params=pltpu.CompilerParams(
            dimension_semantics=("arbitrary",)),
    )(tab)

    out = out[:N]
    Fp = (out[:, 0, :S] + 1j * out[:, 1, :S]).astype(jnp.complex64)
    Fm = (out[:, 2, :S] + 1j * out[:, 3, :S]).astype(jnp.complex64)
    Z = (out[:, 4, :S] + 1j * out[:, 5, :S]).astype(jnp.complex64)
    return Fp, Fm, Z


def epg_simulation_states(*args, **kwargs):
    """Spec-parity view: list of per-pulse (Fp, Fm, Z) tuples."""
    Fp, Fm, Z = epg_simulation(*args, **kwargs)
    return [(Fp[i], Fm[i], Z[i]) for i in range(Fp.shape[0])]


def _epg_reference(flip, phases, T1, T2, TR, B0, B1, n_states):
    """Pure NumPy re-implementation of the PyTorch forward (default config)."""
    N = len(flip)
    Fp = np.zeros(n_states, dtype=np.complex64)
    Fm = np.zeros(n_states, dtype=np.complex64)
    Z = np.zeros(n_states, dtype=np.complex64)
    Z[0] = 1.0
    E1 = np.float32(np.exp(-TR / T1))
    E2 = np.float32(np.exp(-TR / T2))
    phi = np.float32(2.0 * np.pi * B0 * TR / 1000.0)
    states = []
    for i in range(N):
        Fp = E2 * Fp
        Fm = E2 * Fm
        Z = E1 * Z + (1.0 - E1)
        Fp = Fp * np.exp(1j * phi)
        Fm = Fm * np.exp(-1j * phi)
        a = np.float32(flip[i] * B1)
        b = np.float32(phases[i])
        ca = np.cos(a / 2.0)
        sa = np.sin(a / 2.0)
        eb = np.exp(1j * b)
        emb = np.exp(-1j * b)
        Fp_n = ca**2 * Fp + sa**2 * np.conj(Fm) * eb**2 + 1j * ca * sa * (Z * eb)
        Fm_n = sa**2 * np.conj(Fp) * emb**2 + ca**2 * Fm - 1j * ca * sa * (Z * emb)
        Z_n = -1j * sa * ca * (Fp * emb - Fm * eb) + (ca**2 - sa**2) * Z
        Fp, Fm, Z = Fp_n, Fm_n, Z_n
        Fp = np.roll(Fp, 1)
        Fm = np.roll(Fm, -1)
        Fp[0] = 0.0
        Fm[-1] = 0.0
        states.append((Fp.copy(), Fm.copy(), Z.copy()))
    return states


if __name__ == "__main__":
    # TODO(synk): optional branches (diffusion, flow, MQC, MT/CEST multi-pool,
    # grad spoiling, chemical shifts) are disabled in the default module config
    # and are not implemented in the kernel.
    key = jax.random.PRNGKey(0)
    k1, k2 = jax.random.split(key)

    N = 8            # number of RF pulses (sequence length)
    n_states = 21    # EPG configuration states (module default)
    flip_angles = jax.random.uniform(k1, (N,), jnp.float32,
                                     minval=0.1, maxval=np.pi / 2)
    phases = jax.random.uniform(k2, (N,), jnp.float32,
                                minval=0.0, maxval=np.pi)
    T1, T2, TR, TE = 1000.0, 80.0, 10.0, 5.0
    B0, B1 = 5.0, 0.95

    Fp, Fm, Z = epg_simulation(flip_angles, phases, T1, T2, TR, TE,
                               B0=B0, B1=B1, n_states=n_states)
    jax.block_until_ready((Fp, Fm, Z))

    # Verify against a pure NumPy re-implementation of the reference forward.
    ref = _epg_reference(np.asarray(flip_angles), np.asarray(phases),
                         T1, T2, TR, B0, B1, n_states)
    ref_Fp = np.stack([r[0] for r in ref])
    ref_Fm = np.stack([r[1] for r in ref])
    ref_Z = np.stack([r[2] for r in ref])
    np.testing.assert_allclose(np.asarray(Fp), ref_Fp, rtol=1e-4, atol=1e-4)
    np.testing.assert_allclose(np.asarray(Fm), ref_Fm, rtol=1e-4, atol=1e-4)
    np.testing.assert_allclose(np.asarray(Z), ref_Z, rtol=1e-4, atol=1e-4)

    print("KERNEL_OK")
</pallas_src>

<mosaic_0001>
module attributes {stable_mosaic.version = 11 : i64} {
  func.func @_epg_kernel(%arg0: i32, %arg1: memref<24x8xf32, #tpu.memory_space<smem>>, %arg2: memref<8x8x128xf32, #tpu.memory_space<vmem>>, %arg3: memref<6x1x128xf32, #tpu.memory_space<vmem>>) attributes {dimension_semantics = [#tpu.dimension_semantics<arbitrary>], iteration_bounds = array<i64: 1>, scalar_prefetch = 1 : i64, scratch_operands = 1 : i64, tpu.core_type = #tpu.core_type<tc>, window_params = [{transform_indices = @transform_0, window_bounds = array<i64: 8, 8, 128>}]} {
    %c8_i32 = arith.constant 8 : i32
    %0 = arith.muli %arg0, %c8_i32 : i32
    %1 = tpu.iota {dimensions = array<i32: 1>} : vector<1x128xi32>
    %cst = arith.constant 0.000000e+00 : f32
    %2 = vector.broadcast %cst : f32 to vector<1x128xf32>
    %c0_i32 = arith.constant 0 : i32
    %3 = vector.broadcast %c0_i32 : i32 to vector<1x128xi32>
    %4 = arith.cmpi eq, %1, %3 : vector<1x128xi32>
    %c21_i32 = arith.constant 21 : i32
    %5 = vector.broadcast %c21_i32 : i32 to vector<1x128xi32>
    %6 = arith.cmpi sge, %1, %5 : vector<1x128xi32>
    %7 = arith.ori %4, %6 : vector<1x128xi1>
    %c20_i32 = arith.constant 20 : i32
    %8 = vector.broadcast %c20_i32 : i32 to vector<1x128xi32>
    %9 = arith.cmpi sge, %1, %8 : vector<1x128xi32>
    %c0_i32_0 = arith.constant 0 : i32
    %10 = arith.cmpi eq, %arg0, %c0_i32_0 : i32
    %11 = arith.extui %10 : i1 to i32
    %c0_i32_1 = arith.constant 0 : i32
    %12 = arith.cmpi ne, %11, %c0_i32_1 : i32
    scf.if %12 {
      %c0_367 = arith.constant 0 : index
      %c0_368 = arith.constant 0 : index
      %c0_369 = arith.constant 0 : index
      %1635 = vector.load %arg3[%c0_367, %c0_368, %c0_369] : memref<6x1x128xf32, #tpu.memory_space<vmem>>, vector<1x1x128xf32>
      %1636 = vector.shape_cast %1635 : vector<1x1x128xf32> to vector<1x128xf32>
      %1637 = vector.shape_cast %2 : vector<1x128xf32> to vector<1x1x128xf32>
      tpu.vector_store %arg3[%c0_367, %c0_368, %c0_369], %1637 {strides = array<i32>} : memref<6x1x128xf32, #tpu.memory_space<vmem>>, vector<1x1x128xf32>,
      %c1_370 = arith.constant 1 : index
      %c0_371 = arith.constant 0 : index
      %c0_372 = arith.constant 0 : index
      %1638 = vector.load %arg3[%c1_370, %c0_371, %c0_372] : memref<6x1x128xf32, #tpu.memory_space<vmem>>, vector<1x1x128xf32>
      %1639 = vector.shape_cast %1638 : vector<1x1x128xf32> to vector<1x128xf32>
      %1640 = vector.shape_cast %2 : vector<1x128xf32> to vector<1x1x128xf32>
      tpu.vector_store %arg3[%c1_370, %c0_371, %c0_372], %1640 {strides = array<i32>} : memref<6x1x128xf32, #tpu.memory_space<vmem>>, vector<1x1x128xf32>,
      %c2_373 = arith.constant 2 : index
      %c0_374 = arith.constant 0 : index
      %c0_375 = arith.constant 0 : index
      %1641 = vector.load %arg3[%c2_373, %c0_374, %c0_375] : memref<6x1x128xf32, #tpu.memory_space<vmem>>, vector<1x1x128xf32>
      %1642 = vector.shape_cast %1641 : vector<1x1x128xf32> to vector<1x128xf32>
      %1643 = vector.shape_cast %2 : vector<1x128xf32> to vector<1x1x128xf32>
      tpu.vector_store %arg3[%c2_373, %c0_374, %c0_375], %1643 {strides = array<i32>} : memref<6x1x128xf32, #tpu.memory_space<vmem>>, vector<1x1x128xf32>,
      %c3_376 = arith.constant 3 : index
      %c0_377 = arith.constant 0 : index
      %c0_378 = arith.constant 0 : index
      %1644 = vector.load %arg3[%c3_376, %c0_377, %c0_378] : memref<6x1x128xf32, #tpu.memory_space<vmem>>, vector<1x1x128xf32>
      %1645 = vector.shape_cast %1644 : vector<1x1x128xf32> to vector<1x128xf32>
      %1646 = vector.shape_cast %2 : vector<1x128xf32> to vector<1x1x128xf32>
      tpu.vector_store %arg3[%c3_376, %c0_377, %c0_378], %1646 {strides = array<i32>} : memref<6x1x128xf32, #tpu.memory_space<vmem>>, vector<1x1x128xf32>,
      %c4_379 = arith.constant 4 : index
      %c0_380 = arith.constant 0 : index
      %c0_381 = arith.constant 0 : index
      %1647 = vector.load %arg3[%c4_379, %c0_380, %c0_381] : memref<6x1x128xf32, #tpu.memory_space<vmem>>, vector<1x1x128xf32>
      %1648 = vector.shape_cast %1647 : vector<1x1x128xf32> to vector<1x128xf32>
      %1649 = vector.shape_cast %2 : vector<1x128xf32> to vector<1x1x128xf32>
      tpu.vector_store %arg3[%c4_379, %c0_380, %c0_381], %1649 {strides = array<i32>} : memref<6x1x128xf32, #tpu.memory_space<vmem>>, vector<1x1x128xf32>,
      %c5_382 = arith.constant 5 : index
      %c0_383 = arith.constant 0 : index
      %c0_384 = arith.constant 0 : index
      %1650 = vector.load %arg3[%c5_382, %c0_383, %c0_384] : memref<6x1x128xf32, #tpu.memory_space<vmem>>, vector<1x1x128xf32>
      %1651 = vector.shape_cast %1650 : vector<1x1x128xf32> to vector<1x128xf32>
      %1652 = vector.shape_cast %2 : vector<1x128xf32> to vector<1x1x128xf32>
      tpu.vector_store %arg3[%c5_382, %c0_383, %c0_384], %1652 {strides = array<i32>} : memref<6x1x128xf32, #tpu.memory_space<vmem>>, vector<1x1x128xf32>,
      %c0_i32_385 = arith.constant 0 : i32
      %1653 = vector.broadcast %c0_i32_385 : i32 to vector<1x128xi32>
      %1654 = arith.cmpi eq, %1, %1653 : vector<1x128xi32>
      %cst_386 = arith.constant 1.000000e+00 : f32
      %cst_387 = arith.constant 0.000000e+00 : f32
      %1655 = vector.broadcast %cst_386 : f32 to vector<1x128xf32>
      %1656 = vector.broadcast %cst_387 : f32 to vector<1x128xf32>
      %1657 = arith.select %1654, %1655, %1656 : vector<1x128xi1>, vector<1x128xf32>
      %c4_388 = arith.constant 4 : index
      %c0_389 = arith.constant 0 : index
      %c0_390 = arith.constant 0 : index
      %1658 = vector.load %arg3[%c4_388, %c0_389, %c0_390] : memref<6x1x128xf32, #tpu.memory_space<vmem>>, vector<1x1x128xf32>
      %1659 = vector.shape_cast %1658 : vector<1x1x128xf32> to vector<1x128xf32>
      %1660 = vector.shape_cast %1657 : vector<1x128xf32> to vector<1x1x128xf32>
      tpu.vector_store %arg3[%c4_388, %c0_389, %c0_390], %1660 {strides = array<i32>} : memref<6x1x128xf32, #tpu.memory_space<vmem>>, vector<1x1x128xf32>,
    } else {
    }
    %c0 = arith.constant 0 : index
    %c0_2 = arith.constant 0 : index
    %c0_3 = arith.constant 0 : index
    %13 = vector.load %arg3[%c0, %c0_2, %c0_3] : memref<6x1x128xf32, #tpu.memory_space<vmem>>, vector<1x1x128xf32>
    %14 = vector.shape_cast %13 : vector<1x1x128xf32> to vector<1x128xf32>
    %c1 = arith.constant 1 : index
    %c0_4 = arith.constant 0 : index
    %c0_5 = arith.constant 0 : index
    %15 = vector.load %arg3[%c1, %c0_4, %c0_5] : memref<6x1x128xf32, #tpu.memory_space<vmem>>, vector<1x1x128xf32>
    %16 = vector.shape_cast %15 : vector<1x1x128xf32> to vector<1x128xf32>
    %c2 = arith.constant 2 : index
    %c0_6 = arith.constant 0 : index
    %c0_7 = arith.constant 0 : index
    %17 = vector.load %arg3[%c2, %c0_6, %c0_7] : memref<6x1x128xf32, #tpu.memory_space<vmem>>, vector<1x1x128xf32>
    %18 = vector.shape_cast %17 : vector<1x1x128xf32> to vector<1x128xf32>
    %c3 = arith.constant 3 : index
    %c0_8 = arith.constant 0 : index
    %c0_9 = arith.constant 0 : index
    %19 = vector.load %arg3[%c3, %c0_8, %c0_9] : memref<6x1x128xf32, #tpu.memory_space<vmem>>, vector<1x1x128xf32>
    %20 = vector.shape_cast %19 : vector<1x1x128xf32> to vector<1x128xf32>
    %c4 = arith.constant 4 : index
    %c0_10 = arith.constant 0 : index
    %c0_11 = arith.constant 0 : index
    %21 = vector.load %arg3[%c4, %c0_10, %c0_11] : memref<6x1x128xf32, #tpu.memory_space<vmem>>, vector<1x1x128xf32>
    %22 = vector.shape_cast %21 : vector<1x1x128xf32> to vector<1x128xf32>
    %c5 = arith.constant 5 : index
    %c0_12 = arith.constant 0 : index
    %c0_13 = arith.constant 0 : index
    %23 = vector.load %arg3[%c5, %c0_12, %c0_13] : memref<6x1x128xf32, #tpu.memory_space<vmem>>, vector<1x1x128xf32>
    %24 = vector.shape_cast %23 : vector<1x1x128xf32> to vector<1x128xf32>
    %c0_i32_14 = arith.constant 0 : i32
    %25 = arith.addi %0, %c0_i32_14 : i32
    %c0_15 = arith.constant 0 : index
    %26 = arith.index_cast %25 : i32 to index
    %27 = memref.load %arg1[%c0_15, %26] : memref<24x8xf32, #tpu.memory_space<smem>>
    %c1_16 = arith.constant 1 : index
    %28 = arith.index_cast %25 : i32 to index
    %29 = memref.load %arg1[%c1_16, %28] : memref<24x8xf32, #tpu.memory_space<smem>>
    %c2_17 = arith.constant 2 : index
    %30 = arith.index_cast %25 : i32 to index
    %31 = memref.load %arg1[%c2_17, %30] : memref<24x8xf32, #tpu.memory_space<smem>>
    %c3_18 = arith.constant 3 : index
    %32 = arith.index_cast %25 : i32 to index
    %33 = memref.load %arg1[%c3_18, %32] : memref<24x8xf32, #tpu.memory_space<smem>>
    %c4_19 = arith.constant 4 : index
    %34 = arith.index_cast %25 : i32 to index
    %35 = memref.load %arg1[%c4_19, %34] : memref<24x8xf32, #tpu.memory_space<smem>>
    %c5_20 = arith.constant 5 : index
    %36 = arith.index_cast %25 : i32 to index
    %37 = memref.load %arg1[%c5_20, %36] : memref<24x8xf32, #tpu.memory_space<smem>>
    %c6 = arith.constant 6 : index
    %38 = arith.index_cast %25 : i32 to index
    %39 = memref.load %arg1[%c6, %38] : memref<24x8xf32, #tpu.memory_space<smem>>
    %c7 = arith.constant 7 : index
    %40 = arith.index_cast %25 : i32 to index
    %41 = memref.load %arg1[%c7, %40] : memref<24x8xf32, #tpu.memory_space<smem>>
    %c8 = arith.constant 8 : index
    %42 = arith.index_cast %25 : i32 to index
    %43 = memref.load %arg1[%c8, %42] : memref<24x8xf32, #tpu.memory_space<smem>>
    %c9 = arith.constant 9 : index
    %44 = arith.index_cast %25 : i32 to index
    %45 = memref.load %arg1[%c9, %44] : memref<24x8xf32, #tpu.memory_space<smem>>
    %c10 = arith.constant 10 : index
    %46 = arith.index_cast %25 : i32 to index
    %47 = memref.load %arg1[%c10, %46] : memref<24x8xf32, #tpu.memory_space<smem>>
    %c11 = arith.constant 11 : index
    %48 = arith.index_cast %25 : i32 to index
    %49 = memref.load %arg1[%c11, %48] : memref<24x8xf32, #tpu.memory_space<smem>>
    %c12 = arith.constant 12 : index
    %50 = arith.index_cast %25 : i32 to index
    %51 = memref.load %arg1[%c12, %50] : memref<24x8xf32, #tpu.memory_space<smem>>
    %c13 = arith.constant 13 : index
    %52 = arith.index_cast %25 : i32 to index
    %53 = memref.load %arg1[%c13, %52] : memref<24x8xf32, #tpu.memory_space<smem>>
    %c14 = arith.constant 14 : index
    %54 = arith.index_cast %25 : i32 to index
    %55 = memref.load %arg1[%c14, %54] : memref<24x8xf32, #tpu.memory_space<smem>>
    %c15 = arith.constant 15 : index
    %56 = arith.index_cast %25 : i32 to index
    %57 = memref.load %arg1[%c15, %56] : memref<24x8xf32, #tpu.memory_space<smem>>
    %c16 = arith.constant 16 : index
    %58 = arith.index_cast %25 : i32 to index
    %59 = memref.load %arg1[%c16, %58] : memref<24x8xf32, #tpu.memory_space<smem>>
    %c17 = arith.constant 17 : index
    %60 = arith.index_cast %25 : i32 to index
    %61 = memref.load %arg1[%c17, %60] : memref<24x8xf32, #tpu.memory_space<smem>>
    %c18 = arith.constant 18 : index
    %62 = arith.index_cast %25 : i32 to index
    %63 = memref.load %arg1[%c18, %62] : memref<24x8xf32, #tpu.memory_space<smem>>
    %c19 = arith.constant 19 : index
    %64 = arith.index_cast %25 : i32 to index
    %65 = memref.load %arg1[%c19, %64] : memref<24x8xf32, #tpu.memory_space<smem>>
    %c20 = arith.constant 20 : index
    %66 = arith.index_cast %25 : i32 to index
    %67 = memref.load %arg1[%c20, %66] : memref<24x8xf32, #tpu.memory_space<smem>>
    %c21 = arith.constant 21 : index
    %68 = arith.index_cast %25 : i32 to index
    %69 = memref.load %arg1[%c21, %68] : memref<24x8xf32, #tpu.memory_space<smem>>
    %c22 = arith.constant 22 : index
    %70 = arith.index_cast %25 : i32 to index
    %71 = memref.load %arg1[%c22, %70] : memref<24x8xf32, #tpu.memory_space<smem>>
    %c23 = arith.constant 23 : index
    %72 = arith.index_cast %25 : i32 to index
    %73 = memref.load %arg1[%c23, %72] : memref<24x8xf32, #tpu.memory_space<smem>>
    %74 = vector.broadcast %27 : f32 to vector<1x128xf32>
    %75 = arith.mulf %74, %14 : vector<1x128xf32>
    %76 = vector.broadcast %29 : f32 to vector<1x128xf32>
    %77 = arith.mulf %76, %16 : vector<1x128xf32>
    %78 = arith.subf %75, %77 : vector<1x128xf32>
    %79 = vector.broadcast %31 : f32 to vector<1x128xf32>
    %80 = arith.mulf %79, %18 : vector<1x128xf32>
    %81 = arith.addf %78, %80 : vector<1x128xf32>
    %82 = vector.broadcast %33 : f32 to vector<1x128xf32>
    %83 = arith.mulf %82, %20 : vector<1x128xf32>
    %84 = arith.addf %81, %83 : vector<1x128xf32>
    %85 = vector.broadcast %35 : f32 to vector<1x128xf32>
    %86 = arith.mulf %85, %22 : vector<1x128xf32>
    %87 = arith.addf %84, %86 : vector<1x128xf32>
    %88 = vector.broadcast %37 : f32 to vector<1x128xf32>
    %89 = arith.mulf %88, %24 : vector<1x128xf32>
    %90 = arith.subf %87, %89 : vector<1x128xf32>
    %91 = vector.broadcast %39 : f32 to vector<1x128xf32>
    %92 = arith.addf %90, %91 : vector<1x128xf32>
    %93 = vector.broadcast %27 : f32 to vector<1x128xf32>
    %94 = arith.mulf %93, %16 : vector<1x128xf32>
    %95 = vector.broadcast %29 : f32 to vector<1x128xf32>
    %96 = arith.mulf %95, %14 : vector<1x128xf32>
    %97 = arith.addf %94, %96 : vector<1x128xf32>
    %98 = vector.broadcast %33 : f32 to vector<1x128xf32>
    %99 = arith.mulf %98, %18 : vector<1x128xf32>
    %100 = arith.addf %97, %99 : vector<1x128xf32>
    %101 = vector.broadcast %31 : f32 to vector<1x128xf32>
    %102 = arith.mulf %101, %20 : vector<1x128xf32>
    %103 = arith.subf %100, %102 : vector<1x128xf32>
    %104 = vector.broadcast %35 : f32 to vector<1x128xf32>
    %105 = arith.mulf %104, %24 : vector<1x128xf32>
    %106 = arith.addf %103, %105 : vector<1x128xf32>
    %107 = vector.broadcast %37 : f32 to vector<1x128xf32>
    %108 = arith.mulf %107, %22 : vector<1x128xf32>
    %109 = arith.addf %106, %108 : vector<1x128xf32>
    %110 = vector.broadcast %41 : f32 to vector<1x128xf32>
    %111 = arith.addf %109, %110 : vector<1x128xf32>
    %112 = vector.broadcast %43 : f32 to vector<1x128xf32>
    %113 = arith.mulf %112, %14 : vector<1x128xf32>
    %114 = vector.broadcast %45 : f32 to vector<1x128xf32>
    %115 = arith.mulf %114, %16 : vector<1x128xf32>
    %116 = arith.addf %113, %115 : vector<1x128xf32>
    %117 = vector.broadcast %47 : f32 to vector<1x128xf32>
    %118 = arith.mulf %117, %18 : vector<1x128xf32>
    %119 = arith.addf %116, %118 : vector<1x128xf32>
    %120 = vector.broadcast %49 : f32 to vector<1x128xf32>
    %121 = arith.mulf %120, %20 : vector<1x128xf32>
    %122 = arith.subf %119, %121 : vector<1x128xf32>
    %123 = vector.broadcast %51 : f32 to vector<1x128xf32>
    %124 = arith.mulf %123, %22 : vector<1x128xf32>
    %125 = arith.addf %122, %124 : vector<1x128xf32>
    %126 = vector.broadcast %53 : f32 to vector<1x128xf32>
    %127 = arith.mulf %126, %24 : vector<1x128xf32>
    %128 = arith.subf %125, %127 : vector<1x128xf32>
    %129 = vector.broadcast %55 : f32 to vector<1x128xf32>
    %130 = arith.addf %128, %129 : vector<1x128xf32>
    %131 = vector.broadcast %45 : f32 to vector<1x128xf32>
    %132 = arith.mulf %131, %14 : vector<1x128xf32>
    %133 = vector.broadcast %43 : f32 to vector<1x128xf32>
    %134 = arith.mulf %133, %16 : vector<1x128xf32>
    %135 = arith.subf %132, %134 : vector<1x128xf32>
    %136 = vector.broadcast %47 : f32 to vector<1x128xf32>
    %137 = arith.mulf %136, %20 : vector<1x128xf32>
    %138 = arith.addf %135, %137 : vector<1x128xf32>
    %139 = vector.broadcast %49 : f32 to vector<1x128xf32>
    %140 = arith.mulf %139, %18 : vector<1x128xf32>
    %141 = arith.addf %138, %140 : vector<1x128xf32>
    %142 = vector.broadcast %51 : f32 to vector<1x128xf32>
    %143 = arith.mulf %142, %24 : vector<1x128xf32>
    %144 = arith.addf %141, %143 : vector<1x128xf32>
    %145 = vector.broadcast %53 : f32 to vector<1x128xf32>
    %146 = arith.mulf %145, %22 : vector<1x128xf32>
    %147 = arith.addf %144, %146 : vector<1x128xf32>
    %148 = vector.broadcast %57 : f32 to vector<1x128xf32>
    %149 = arith.addf %147, %148 : vector<1x128xf32>
    %150 = vector.broadcast %59 : f32 to vector<1x128xf32>
    %151 = arith.mulf %150, %14 : vector<1x128xf32>
    %152 = vector.broadcast %61 : f32 to vector<1x128xf32>
    %153 = arith.mulf %152, %16 : vector<1x128xf32>
    %154 = arith.subf %151, %153 : vector<1x128xf32>
    %155 = vector.broadcast %63 : f32 to vector<1x128xf32>
    %156 = arith.mulf %155, %18 : vector<1x128xf32>
    %157 = arith.addf %154, %156 : vector<1x128xf32>
    %158 = vector.broadcast %65 : f32 to vector<1x128xf32>
    %159 = arith.mulf %158, %20 : vector<1x128xf32>
    %160 = arith.subf %157, %159 : vector<1x128xf32>
    %161 = vector.broadcast %67 : f32 to vector<1x128xf32>
    %162 = arith.mulf %161, %22 : vector<1x128xf32>
    %163 = arith.addf %160, %162 : vector<1x128xf32>
    %164 = vector.broadcast %69 : f32 to vector<1x128xf32>
    %165 = arith.mulf %164, %24 : vector<1x128xf32>
    %166 = arith.subf %163, %165 : vector<1x128xf32>
    %167 = vector.broadcast %71 : f32 to vector<1x128xf32>
    %168 = arith.addf %166, %167 : vector<1x128xf32>
    %169 = vector.broadcast %61 : f32 to vector<1x128xf32>
    %170 = arith.mulf %169, %14 : vector<1x128xf32>
    %171 = vector.broadcast %59 : f32 to vector<1x128xf32>
    %172 = arith.mulf %171, %16 : vector<1x128xf32>
    %173 = arith.addf %170, %172 : vector<1x128xf32>
    %174 = vector.broadcast %65 : f32 to vector<1x128xf32>
    %175 = arith.mulf %174, %18 : vector<1x128xf32>
    %176 = arith.addf %173, %175 : vector<1x128xf32>
    %177 = vector.broadcast %63 : f32 to vector<1x128xf32>
    %178 = arith.mulf %177, %20 : vector<1x128xf32>
    %179 = arith.addf %176, %178 : vector<1x128xf32>
    %180 = vector.broadcast %69 : f32 to vector<1x128xf32>
    %181 = arith.mulf %180, %22 : vector<1x128xf32>
    %182 = arith.addf %179, %181 : vector<1x128xf32>
    %183 = vector.broadcast %67 : f32 to vector<1x128xf32>
    %184 = arith.mulf %183, %24 : vector<1x128xf32>
    %185 = arith.addf %182, %184 : vector<1x128xf32>
    %186 = vector.broadcast %73 : f32 to vector<1x128xf32>
    %187 = arith.addf %185, %186 : vector<1x128xf32>
    %c1_i32 = arith.constant 1 : i32
    %188 = tpu.dynamic_rotate %92 by %c1_i32 dim 1 : vector<1x128xf32>, i32 -> vector<1x128xf32>
    %cst_21 = arith.constant 0.000000e+00 : f32
    %189 = vector.broadcast %cst_21 : f32 to vector<1x128xf32>
    %190 = arith.select %7, %189, %188 : vector<1x128xi1>, vector<1x128xf32>
    %c1_i32_22 = arith.constant 1 : i32
    %191 = tpu.dynamic_rotate %111 by %c1_i32_22 dim 1 : vector<1x128xf32>, i32 -> vector<1x128xf32>
    %cst_23 = arith.constant 0.000000e+00 : f32
    %192 = vector.broadcast %cst_23 : f32 to vector<1x128xf32>
    %193 = arith.select %7, %192, %191 : vector<1x128xi1>, vector<1x128xf32>
    %c127_i32 = arith.constant 127 : i32
    %194 = tpu.dynamic_rotate %130 by %c127_i32 dim 1 : vector<1x128xf32>, i32 -> vector<1x128xf32>
    %cst_24 = arith.constant 0.000000e+00 : f32
    %195 = vector.broadcast %cst_24 : f32 to vector<1x128xf32>
    %196 = arith.select %9, %195, %194 : vector<1x128xi1>, vector<1x128xf32>
    %c127_i32_25 = arith.constant 127 : i32
    %197 = tpu.dynamic_rotate %149 by %c127_i32_25 dim 1 : vector<1x128xf32>, i32 -> vector<1x128xf32>
    %cst_26 = arith.constant 0.000000e+00 : f32
    %198 = vector.broadcast %cst_26 : f32 to vector<1x128xf32>
    %199 = arith.select %9, %198, %197 : vector<1x128xi1>, vector<1x128xf32>
    %200 = arith.index_cast %c0_i32_14 : i32 to index
    %c0_27 = arith.constant 0 : index
    %c0_28 = arith.constant 0 : index
    %201 = vector.load %arg2[%200, %c0_27, %c0_28] : memref<8x8x128xf32, #tpu.memory_space<vmem>>, vector<1x1x128xf32>
    %202 = vector.shape_cast %201 : vector<1x1x128xf32> to vector<1x128xf32>
    %203 = vector.shape_cast %190 : vector<1x128xf32> to vector<1x1x128xf32>
    tpu.vector_store %arg2[%200, %c0_27, %c0_28], %203 {strides = array<i32>} : memref<8x8x128xf32, #tpu.memory_space<vmem>>, vector<1x1x128xf32>,
    %204 = arith.index_cast %c0_i32_14 : i32 to index
    %c1_29 = arith.constant 1 : index
    %c0_30 = arith.constant 0 : index
    %205 = vector.load %arg2[%204, %c1_29, %c0_30] : memref<8x8x128xf32, #tpu.memory_space<vmem>>, vector<1x1x128xf32>
    %206 = vector.shape_cast %205 : vector<1x1x128xf32> to vector<1x128xf32>
    %207 = vector.shape_cast %193 : vector<1x128xf32> to vector<1x1x128xf32>
    tpu.vector_store %arg2[%204, %c1_29, %c0_30], %207 {strides = array<i32>} : memref<8x8x128xf32, #tpu.memory_space<vmem>>, vector<1x1x128xf32>,
    %208 = arith.index_cast %c0_i32_14 : i32 to index
    %c2_31 = arith.constant 2 : index
    %c0_32 = arith.constant 0 : index
    %209 = vector.load %arg2[%208, %c2_31, %c0_32] : memref<8x8x128xf32, #tpu.memory_space<vmem>>, vector<1x1x128xf32>
    %210 = vector.shape_cast %209 : vector<1x1x128xf32> to vector<1x128xf32>
    %211 = vector.shape_cast %196 : vector<1x128xf32> to vector<1x1x128xf32>
    tpu.vector_store %arg2[%208, %c2_31, %c0_32], %211 {strides = array<i32>} : memref<8x8x128xf32, #tpu.memory_space<vmem>>, vector<1x1x128xf32>,
    %212 = arith.index_cast %c0_i32_14 : i32 to index
    %c3_33 = arith.constant 3 : index
    %c0_34 = arith.constant 0 : index
    %213 = vector.load %arg2[%212, %c3_33, %c0_34] : memref<8x8x128xf32, #tpu.memory_space<vmem>>, vector<1x1x128xf32>
    %214 = vector.shape_cast %213 : vector<1x1x128xf32> to vector<1x128xf32>
    %215 = vector.shape_cast %199 : vector<1x128xf32> to vector<1x1x128xf32>
    tpu.vector_store %arg2[%212, %c3_33, %c0_34], %215 {strides = array<i32>} : memref<8x8x128xf32, #tpu.memory_space<vmem>>, vector<1x1x128xf32>,
    %216 = arith.index_cast %c0_i32_14 : i32 to index
    %c4_35 = arith.constant 4 : index
    %c0_36 = arith.constant 0 : index
    %217 = vector.load %arg2[%216, %c4_35, %c0_36] : memref<8x8x128xf32, #tpu.memory_space<vmem>>, vector<1x1x128xf32>
    %218 = vector.shape_cast %217 : vector<1x1x128xf32> to vector<1x128xf32>
    %219 = vector.shape_cast %168 : vector<1x128xf32> to vector<1x1x128xf32>
    tpu.vector_store %arg2[%216, %c4_35, %c0_36], %219 {strides = array<i32>} : memref<8x8x128xf32, #tpu.memory_space<vmem>>, vector<1x1x128xf32>,
    %220 = arith.index_cast %c0_i32_14 : i32 to index
    %c5_37 = arith.constant 5 : index
    %c0_38 = arith.constant 0 : index
    %221 = vector.load %arg2[%220, %c5_37, %c0_38] : memref<8x8x128xf32, #tpu.memory_space<vmem>>, vector<1x1x128xf32>
    %222 = vector.shape_cast %221 : vector<1x1x128xf32> to vector<1x128xf32>
    %223 = vector.shape_cast %187 : vector<1x128xf32> to vector<1x1x128xf32>
    tpu.vector_store %arg2[%220, %c5_37, %c0_38], %223 {strides = array<i32>} : memref<8x8x128xf32, #tpu.memory_space<vmem>>, vector<1x1x128xf32>,
    %c1_i32_39 = arith.constant 1 : i32
    %224 = arith.addi %0, %c1_i32_39 : i32
    %c0_40 = arith.constant 0 : index
    %225 = arith.index_cast %224 : i32 to index
    %226 = memref.load %arg1[%c0_40, %225] : memref<24x8xf32, #tpu.memory_space<smem>>
    %c1_41 = arith.constant 1 : index
    %227 = arith.index_cast %224 : i32 to index
    %228 = memref.load %arg1[%c1_41, %227] : memref<24x8xf32, #tpu.memory_space<smem>>
    %c2_42 = arith.constant 2 : index
    %229 = arith.index_cast %224 : i32 to index
    %230 = memref.load %arg1[%c2_42, %229] : memref<24x8xf32, #tpu.memory_space<smem>>
    %c3_43 = arith.constant 3 : index
    %231 = arith.index_cast %224 : i32 to index
    %232 = memref.load %arg1[%c3_43, %231] : memref<24x8xf32, #tpu.memory_space<smem>>
    %c4_44 = arith.constant 4 : index
    %233 = arith.index_cast %224 : i32 to index
    %234 = memref.load %arg1[%c4_44, %233] : memref<24x8xf32, #tpu.memory_space<smem>>
    %c5_45 = arith.constant 5 : index
    %235 = arith.index_cast %224 : i32 to index
    %236 = memref.load %arg1[%c5_45, %235] : memref<24x8xf32, #tpu.memory_space<smem>>
    %c6_46 = arith.constant 6 : index
    %237 = arith.index_cast %224 : i32 to index
    %238 = memref.load %arg1[%c6_46, %237] : memref<24x8xf32, #tpu.memory_space<smem>>
    %c7_47 = arith.constant 7 : index
    %239 = arith.index_cast %224 : i32 to index
    %240 = memref.load %arg1[%c7_47, %239] : memref<24x8xf32, #tpu.memory_space<smem>>
    %c8_48 = arith.constant 8 : index
    %241 = arith.index_cast %224 : i32 to index
    %242 = memref.load %arg1[%c8_48, %241] : memref<24x8xf32, #tpu.memory_space<smem>>
    %c9_49 = arith.constant 9 : index
    %243 = arith.index_cast %224 : i32 to index
    %244 = memref.load %arg1[%c9_49, %243] : memref<24x8xf32, #tpu.memory_space<smem>>
    %c10_50 = arith.constant 10 : index
    %245 = arith.index_cast %224 : i32 to index
    %246 = memref.load %arg1[%c10_50, %245] : memref<24x8xf32, #tpu.memory_space<smem>>
    %c11_51 = arith.constant 11 : index
    %247 = arith.index_cast %224 : i32 to index
    %248 = memref.load %arg1[%c11_51, %247] : memref<24x8xf32, #tpu.memory_space<smem>>
    %c12_52 = arith.constant 12 : index
    %249 = arith.index_cast %224 : i32 to index
    %250 = memref.load %arg1[%c12_52, %249] : memref<24x8xf32, #tpu.memory_space<smem>>
    %c13_53 = arith.constant 13 : index
    %251 = arith.index_cast %224 : i32 to index
    %252 = memref.load %arg1[%c13_53, %251] : memref<24x8xf32, #tpu.memory_space<smem>>
    %c14_54 = arith.constant 14 : index
    %253 = arith.index_cast %224 : i32 to index
    %254 = memref.load %arg1[%c14_54, %253] : memref<24x8xf32, #tpu.memory_space<smem>>
    %c15_55 = arith.constant 15 : index
    %255 = arith.index_cast %224 : i32 to index
    %256 = memref.load %arg1[%c15_55, %255] : memref<24x8xf32, #tpu.memory_space<smem>>
    %c16_56 = arith.constant 16 : index
    %257 = arith.index_cast %224 : i32 to index
    %258 = memref.load %arg1[%c16_56, %257] : memref<24x8xf32, #tpu.memory_space<smem>>
    %c17_57 = arith.constant 17 : index
    %259 = arith.index_cast %224 : i32 to index
    %260 = memref.load %arg1[%c17_57, %259] : memref<24x8xf32, #tpu.memory_space<smem>>
    %c18_58 = arith.constant 18 : index
    %261 = arith.index_cast %224 : i32 to index
    %262 = memref.load %arg1[%c18_58, %261] : memref<24x8xf32, #tpu.memory_space<smem>>
    %c19_59 = arith.constant 19 : index
    %263 = arith.index_cast %224 : i32 to index
    %264 = memref.load %arg1[%c19_59, %263] : memref<24x8xf32, #tpu.memory_space<smem>>
    %c20_60 = arith.constant 20 : index
    %265 = arith.index_cast %224 : i32 to index
    %266 = memref.load %arg1[%c20_60, %265] : memref<24x8xf32, #tpu.memory_space<smem>>
    %c21_61 = arith.constant 21 : index
    %267 = arith.index_cast %224 : i32 to index
    %268 = memref.load %arg1[%c21_61, %267] : memref<24x8xf32, #tpu.memory_space<smem>>
    %c22_62 = arith.constant 22 : index
    %269 = arith.index_cast %224 : i32 to index
    %270 = memref.load %arg1[%c22_62, %269] : memref<24x8xf32, #tpu.memory_space<smem>>
    %c23_63 = arith.constant 23 : index
    %271 = arith.index_cast %224 : i32 to index
    %272 = memref.load %arg1[%c23_63, %271] : memref<24x8xf32, #tpu.memory_space<smem>>
    %273 = vector.broadcast %226 : f32 to vector<1x128xf32>
    %274 = arith.mulf %273, %190 : vector<1x128xf32>
    %275 = vector.broadcast %228 : f32 to vector<1x128xf32>
    %276 = arith.mulf %275, %193 : vector<1x128xf32>
    %277 = arith.subf %274, %276 : vector<1x128xf32>
    %278 = vector.broadcast %230 : f32 to vector<1x128xf32>
    %279 = arith.mulf %278, %196 : vector<1x128xf32>
    %280 = arith.addf %277, %279 : vector<1x128xf32>
    %281 = vector.broadcast %232 : f32 to vector<1x128xf32>
    %282 = arith.mulf %281, %199 : vector<1x128xf32>
    %283 = arith.addf %280, %282 : vector<1x128xf32>
    %284 = vector.broadcast %234 : f32 to vector<1x128xf32>
    %285 = arith.mulf %284, %168 : vector<1x128xf32>
    %286 = arith.addf %283, %285 : vector<1x128xf32>
    %287 = vector.broadcast %236 : f32 to vector<1x128xf32>
    %288 = arith.mulf %287, %187 : vector<1x128xf32>
    %289 = arith.subf %286, %288 : vector<1x128xf32>
    %290 = vector.broadcast %238 : f32 to vector<1x128xf32>
    %291 = arith.addf %289, %290 : vector<1x128xf32>
    %292 = vector.broadcast %226 : f32 to vector<1x128xf32>
    %293 = arith.mulf %292, %193 : vector<1x128xf32>
    %294 = vector.broadcast %228 : f32 to vector<1x128xf32>
    %295 = arith.mulf %294, %190 : vector<1x128xf32>
    %296 = arith.addf %293, %295 : vector<1x128xf32>
    %297 = vector.broadcast %232 : f32 to vector<1x128xf32>
    %298 = arith.mulf %297, %196 : vector<1x128xf32>
    %299 = arith.addf %296, %298 : vector<1x128xf32>
    %300 = vector.broadcast %230 : f32 to vector<1x128xf32>
    %301 = arith.mulf %300, %199 : vector<1x128xf32>
    %302 = arith.subf %299, %301 : vector<1x128xf32>
    %303 = vector.broadcast %234 : f32 to vector<1x128xf32>
    %304 = arith.mulf %303, %187 : vector<1x128xf32>
    %305 = arith.addf %302, %304 : vector<1x128xf32>
    %306 = vector.broadcast %236 : f32 to vector<1x128xf32>
    %307 = arith.mulf %306, %168 : vector<1x128xf32>
    %308 = arith.addf %305, %307 : vector<1x128xf32>
    %309 = vector.broadcast %240 : f32 to vector<1x128xf32>
    %310 = arith.addf %308, %309 : vector<1x128xf32>
    %311 = vector.broadcast %242 : f32 to vector<1x128xf32>
    %312 = arith.mulf %311, %190 : vector<1x128xf32>
    %313 = vector.broadcast %244 : f32 to vector<1x128xf32>
    %314 = arith.mulf %313, %193 : vector<1x128xf32>
    %315 = arith.addf %312, %314 : vector<1x128xf32>
    %316 = vector.broadcast %246 : f32 to vector<1x128xf32>
    %317 = arith.mulf %316, %196 : vector<1x128xf32>
    %318 = arith.addf %315, %317 : vector<1x128xf32>
    %319 = vector.broadcast %248 : f32 to vector<1x128xf32>
    %320 = arith.mulf %319, %199 : vector<1x128xf32>
    %321 = arith.subf %318, %320 : vector<1x128xf32>
    %322 = vector.broadcast %250 : f32 to vector<1x128xf32>
    %323 = arith.mulf %322, %168 : vector<1x128xf32>
    %324 = arith.addf %321, %323 : vector<1x128xf32>
    %325 = vector.broadcast %252 : f32 to vector<1x128xf32>
    %326 = arith.mulf %325, %187 : vector<1x128xf32>
    %327 = arith.subf %324, %326 : vector<1x128xf32>
    %328 = vector.broadcast %254 : f32 to vector<1x128xf32>
    %329 = arith.addf %327, %328 : vector<1x128xf32>
    %330 = vector.broadcast %244 : f32 to vector<1x128xf32>
    %331 = arith.mulf %330, %190 : vector<1x128xf32>
    %332 = vector.broadcast %242 : f32 to vector<1x128xf32>
    %333 = arith.mulf %332, %193 : vector<1x128xf32>
    %334 = arith.subf %331, %333 : vector<1x128xf32>
    %335 = vector.broadcast %246 : f32 to vector<1x128xf32>
    %336 = arith.mulf %335, %199 : vector<1x128xf32>
    %337 = arith.addf %334, %336 : vector<1x128xf32>
    %338 = vector.broadcast %248 : f32 to vector<1x128xf32>
    %339 = arith.mulf %338, %196 : vector<1x128xf32>
    %340 = arith.addf %337, %339 : vector<1x128xf32>
    %341 = vector.broadcast %250 : f32 to vector<1x128xf32>
    %342 = arith.mulf %341, %187 : vector<1x128xf32>
    %343 = arith.addf %340, %342 : vector<1x128xf32>
    %344 = vector.broadcast %252 : f32 to vector<1x128xf32>
    %345 = arith.mulf %344, %168 : vector<1x128xf32>
    %346 = arith.addf %343, %345 : vector<1x128xf32>
    %347 = vector.broadcast %256 : f32 to vector<1x128xf32>
    %348 = arith.addf %346, %347 : vector<1x128xf32>
    %349 = vector.broadcast %258 : f32 to vector<1x128xf32>
    %350 = arith.mulf %349, %190 : vector<1x128xf32>
    %351 = vector.broadcast %260 : f32 to vector<1x128xf32>
    %352 = arith.mulf %351, %193 : vector<1x128xf32>
    %353 = arith.subf %350, %352 : vector<1x128xf32>
    %354 = vector.broadcast %262 : f32 to vector<1x128xf32>
    %355 = arith.mulf %354, %196 : vector<1x128xf32>
    %356 = arith.addf %353, %355 : vector<1x128xf32>
    %357 = vector.broadcast %264 : f32 to vector<1x128xf32>
    %358 = arith.mulf %357, %199 : vector<1x128xf32>
    %359 = arith.subf %356, %358 : vector<1x128xf32>
    %360 = vector.broadcast %266 : f32 to vector<1x128xf32>
    %361 = arith.mulf %360, %168 : vector<1x128xf32>
    %362 = arith.addf %359, %361 : vector<1x128xf32>
    %363 = vector.broadcast %268 : f32 to vector<1x128xf32>
    %364 = arith.mulf %363, %187 : vector<1x128xf32>
    %365 = arith.subf %362, %364 : vector<1x128xf32>
    %366 = vector.broadcast %270 : f32 to vector<1x128xf32>
    %367 = arith.addf %365, %366 : vector<1x128xf32>
    %368 = vector.broadcast %260 : f32 to vector<1x128xf32>
    %369 = arith.mulf %368, %190 : vector<1x128xf32>
    %370 = vector.broadcast %258 : f32 to vector<1x128xf32>
    %371 = arith.mulf %370, %193 : vector<1x128xf32>
    %372 = arith.addf %369, %371 : vector<1x128xf32>
    %373 = vector.broadcast %264 : f32 to vector<1x128xf32>
    %374 = arith.mulf %373, %196 : vector<1x128xf32>
    %375 = arith.addf %372, %374 : vector<1x128xf32>
    %376 = vector.broadcast %262 : f32 to vector<1x128xf32>
    %377 = arith.mulf %376, %199 : vector<1x128xf32>
    %378 = arith.addf %375, %377 : vector<1x128xf32>
    %379 = vector.broadcast %268 : f32 to vector<1x128xf32>
    %380 = arith.mulf %379, %168 : vector<1x128xf32>
    %381 = arith.addf %378, %380 : vector<1x128xf32>
    %382 = vector.broadcast %266 : f32 to vector<1x128xf32>
    %383 = arith.mulf %382, %187 : vector<1x128xf32>
    %384 = arith.addf %381, %383 : vector<1x128xf32>
    %385 = vector.broadcast %272 : f32 to vector<1x128xf32>
    %386 = arith.addf %384, %385 : vector<1x128xf32>
    %c1_i32_64 = arith.constant 1 : i32
    %387 = tpu.dynamic_rotate %291 by %c1_i32_64 dim 1 : vector<1x128xf32>, i32 -> vector<1x128xf32>
    %cst_65 = arith.constant 0.000000e+00 : f32
    %388 = vector.broadcast %cst_65 : f32 to vector<1x128xf32>
    %389 = arith.select %7, %388, %387 : vector<1x128xi1>, vector<1x128xf32>
    %c1_i32_66 = arith.constant 1 : i32
    %390 = tpu.dynamic_rotate %310 by %c1_i32_66 dim 1 : vector<1x128xf32>, i32 -> vector<1x128xf32>
    %cst_67 = arith.constant 0.000000e+00 : f32
    %391 = vector.broadcast %cst_67 : f32 to vector<1x128xf32>
    %392 = arith.select %7, %391, %390 : vector<1x128xi1>, vector<1x128xf32>
    %c127_i32_68 = arith.constant 127 : i32
    %393 = tpu.dynamic_rotate %329 by %c127_i32_68 dim 1 : vector<1x128xf32>, i32 -> vector<1x128xf32>
    %cst_69 = arith.constant 0.000000e+00 : f32
    %394 = vector.broadcast %cst_69 : f32 to vector<1x128xf32>
    %395 = arith.select %9, %394, %393 : vector<1x128xi1>, vector<1x128xf32>
    %c127_i32_70 = arith.constant 127 : i32
    %396 = tpu.dynamic_rotate %348 by %c127_i32_70 dim 1 : vector<1x128xf32>, i32 -> vector<1x128xf32>
    %cst_71 = arith.constant 0.000000e+00 : f32
    %397 = vector.broadcast %cst_71 : f32 to vector<1x128xf32>
    %398 = arith.select %9, %397, %396 : vector<1x128xi1>, vector<1x128xf32>
    %399 = arith.index_cast %c1_i32_39 : i32 to index
    %c0_72 = arith.constant 0 : index
    %c0_73 = arith.constant 0 : index
    %400 = vector.load %arg2[%399, %c0_72, %c0_73] : memref<8x8x128xf32, #tpu.memory_space<vmem>>, vector<1x1x128xf32>
    %401 = vector.shape_cast %400 : vector<1x1x128xf32> to vector<1x128xf32>
    %402 = vector.shape_cast %389 : vector<1x128xf32> to vector<1x1x128xf32>
    tpu.vector_store %arg2[%399, %c0_72, %c0_73], %402 {strides = array<i32>} : memref<8x8x128xf32, #tpu.memory_space<vmem>>, vector<1x1x128xf32>,
    %403 = arith.index_cast %c1_i32_39 : i32 to index
    %c1_74 = arith.constant 1 : index
    %c0_75 = arith.constant 0 : index
    %404 = vector.load %arg2[%403, %c1_74, %c0_75] : memref<8x8x128xf32, #tpu.memory_space<vmem>>, vector<1x1x128xf32>
    %405 = vector.shape_cast %404 : vector<1x1x128xf32> to vector<1x128xf32>
    %406 = vector.shape_cast %392 : vector<1x128xf32> to vector<1x1x128xf32>
    tpu.vector_store %arg2[%403, %c1_74, %c0_75], %406 {strides = array<i32>} : memref<8x8x128xf32, #tpu.memory_space<vmem>>, vector<1x1x128xf32>,
    %407 = arith.index_cast %c1_i32_39 : i32 to index
    %c2_76 = arith.constant 2 : index
    %c0_77 = arith.constant 0 : index
    %408 = vector.load %arg2[%407, %c2_76, %c0_77] : memref<8x8x128xf32, #tpu.memory_space<vmem>>, vector<1x1x128xf32>
    %409 = vector.shape_cast %408 : vector<1x1x128xf32> to vector<1x128xf32>
    %410 = vector.shape_cast %395 : vector<1x128xf32> to vector<1x1x128xf32>
    tpu.vector_store %arg2[%407, %c2_76, %c0_77], %410 {strides = array<i32>} : memref<8x8x128xf32, #tpu.memory_space<vmem>>, vector<1x1x128xf32>,
    %411 = arith.index_cast %c1_i32_39 : i32 to index
    %c3_78 = arith.constant 3 : index
    %c0_79 = arith.constant 0 : index
    %412 = vector.load %arg2[%411, %c3_78, %c0_79] : memref<8x8x128xf32, #tpu.memory_space<vmem>>, vector<1x1x128xf32>
    %413 = vector.shape_cast %412 : vector<1x1x128xf32> to vector<1x128xf32>
    %414 = vector.shape_cast %398 : vector<1x128xf32> to vector<1x1x128xf32>
    tpu.vector_store %arg2[%411, %c3_78, %c0_79], %414 {strides = array<i32>} : memref<8x8x128xf32, #tpu.memory_space<vmem>>, vector<1x1x128xf32>,
    %415 = arith.index_cast %c1_i32_39 : i32 to index
    %c4_80 = arith.constant 4 : index
    %c0_81 = arith.constant 0 : index
    %416 = vector.load %arg2[%415, %c4_80, %c0_81] : memref<8x8x128xf32, #tpu.memory_space<vmem>>, vector<1x1x128xf32>
    %417 = vector.shape_cast %416 : vector<1x1x128xf32> to vector<1x128xf32>
    %418 = vector.shape_cast %367 : vector<1x128xf32> to vector<1x1x128xf32>
    tpu.vector_store %arg2[%415, %c4_80, %c0_81], %418 {strides = array<i32>} : memref<8x8x128xf32, #tpu.memory_space<vmem>>, vector<1x1x128xf32>,
    %419 = arith.index_cast %c1_i32_39 : i32 to index
    %c5_82 = arith.constant 5 : index
    %c0_83 = arith.constant 0 : index
    %420 = vector.load %arg2[%419, %c5_82, %c0_83] : memref<8x8x128xf32, #tpu.memory_space<vmem>>, vector<1x1x128xf32>
    %421 = vector.shape_cast %420 : vector<1x1x128xf32> to vector<1x128xf32>
    %422 = vector.shape_cast %386 : vector<1x128xf32> to vector<1x1x128xf32>
    tpu.vector_store %arg2[%419, %c5_82, %c0_83], %422 {strides = array<i32>} : memref<8x8x128xf32, #tpu.memory_space<vmem>>, vector<1x1x128xf32>,
    %c2_i32 = arith.constant 2 : i32
    %423 = arith.addi %0, %c2_i32 : i32
    %c0_84 = arith.constant 0 : index
    %424 = arith.index_cast %423 : i32 to index
    %425 = memref.load %arg1[%c0_84, %424] : memref<24x8xf32, #tpu.memory_space<smem>>
    %c1_85 = arith.constant 1 : index
    %426 = arith.index_cast %423 : i32 to index
    %427 = memref.load %arg1[%c1_85, %426] : memref<24x8xf32, #tpu.memory_space<smem>>
    %c2_86 = arith.constant 2 : index
    %428 = arith.index_cast %423 : i32 to index
    %429 = memref.load %arg1[%c2_86, %428] : memref<24x8xf32, #tpu.memory_space<smem>>
    %c3_87 = arith.constant 3 : index
    %430 = arith.index_cast %423 : i32 to index
    %431 = memref.load %arg1[%c3_87, %430] : memref<24x8xf32, #tpu.memory_space<smem>>
    %c4_88 = arith.constant 4 : index
    %432 = arith.index_cast %423 : i32 to index
    %433 = memref.load %arg1[%c4_88, %432] : memref<24x8xf32, #tpu.memory_space<smem>>
    %c5_89 = arith.constant 5 : index
    %434 = arith.index_cast %423 : i32 to index
    %435 = memref.load %arg1[%c5_89, %434] : memref<24x8xf32, #tpu.memory_space<smem>>
    %c6_90 = arith.constant 6 : index
    %436 = arith.index_cast %423 : i32 to index
    %437 = memref.load %arg1[%c6_90, %436] : memref<24x8xf32, #tpu.memory_space<smem>>
    %c7_91 = arith.constant 7 : index
    %438 = arith.index_cast %423 : i32 to index
    %439 = memref.load %arg1[%c7_91, %438] : memref<24x8xf32, #tpu.memory_space<smem>>
    %c8_92 = arith.constant 8 : index
    %440 = arith.index_cast %423 : i32 to index
    %441 = memref.load %arg1[%c8_92, %440] : memref<24x8xf32, #tpu.memory_space<smem>>
    %c9_93 = arith.constant 9 : index
    %442 = arith.index_cast %423 : i32 to index
    %443 = memref.load %arg1[%c9_93, %442] : memref<24x8xf32, #tpu.memory_space<smem>>
    %c10_94 = arith.constant 10 : index
    %444 = arith.index_cast %423 : i32 to index
    %445 = memref.load %arg1[%c10_94, %444] : memref<24x8xf32, #tpu.memory_space<smem>>
    %c11_95 = arith.constant 11 : index
    %446 = arith.index_cast %423 : i32 to index
    %447 = memref.load %arg1[%c11_95, %446] : memref<24x8xf32, #tpu.memory_space<smem>>
    %c12_96 = arith.constant 12 : index
    %448 = arith.index_cast %423 : i32 to index
    %449 = memref.load %arg1[%c12_96, %448] : memref<24x8xf32, #tpu.memory_space<smem>>
    %c13_97 = arith.constant 13 : index
    %450 = arith.index_cast %423 : i32 to index
    %451 = memref.load %arg1[%c13_97, %450] : memref<24x8xf32, #tpu.memory_space<smem>>
    %c14_98 = arith.constant 14 : index
    %452 = arith.index_cast %423 : i32 to index
    %453 = memref.load %arg1[%c14_98, %452] : memref<24x8xf32, #tpu.memory_space<smem>>
    %c15_99 = arith.constant 15 : index
    %454 = arith.index_cast %423 : i32 to index
    %455 = memref.load %arg1[%c15_99, %454] : memref<24x8xf32, #tpu.memory_space<smem>>
    %c16_100 = arith.constant 16 : index
    %456 = arith.index_cast %423 : i32 to index
    %457 = memref.load %arg1[%c16_100, %456] : memref<24x8xf32, #tpu.memory_space<smem>>
    %c17_101 = arith.constant 17 : index
    %458 = arith.index_cast %423 : i32 to index
    %459 = memref.load %arg1[%c17_101, %458] : memref<24x8xf32, #tpu.memory_space<smem>>
    %c18_102 = arith.constant 18 : index
    %460 = arith.index_cast %423 : i32 to index
    %461 = memref.load %arg1[%c18_102, %460] : memref<24x8xf32, #tpu.memory_space<smem>>
    %c19_103 = arith.constant 19 : index
    %462 = arith.index_cast %423 : i32 to index
    %463 = memref.load %arg1[%c19_103, %462] : memref<24x8xf32, #tpu.memory_space<smem>>
    %c20_104 = arith.constant 20 : index
    %464 = arith.index_cast %423 : i32 to index
    %465 = memref.load %arg1[%c20_104, %464] : memref<24x8xf32, #tpu.memory_space<smem>>
    %c21_105 = arith.constant 21 : index
    %466 = arith.index_cast %423 : i32 to index
    %467 = memref.load %arg1[%c21_105, %466] : memref<24x8xf32, #tpu.memory_space<smem>>
    %c22_106 = arith.constant 22 : index
    %468 = arith.index_cast %423 : i32 to index
    %469 = memref.load %arg1[%c22_106, %468] : memref<24x8xf32, #tpu.memory_space<smem>>
    %c23_107 = arith.constant 23 : index
    %470 = arith.index_cast %423 : i32 to index
    %471 = memref.load %arg1[%c23_107, %470] : memref<24x8xf32, #tpu.memory_space<smem>>
    %472 = vector.broadcast %425 : f32 to vector<1x128xf32>
    %473 = arith.mulf %472, %389 : vector<1x128xf32>
    %474 = vector.broadcast %427 : f32 to vector<1x128xf32>
    %475 = arith.mulf %474, %392 : vector<1x128xf32>
    %476 = arith.subf %473, %475 : vector<1x128xf32>
    %477 = vector.broadcast %429 : f32 to vector<1x128xf32>
    %478 = arith.mulf %477, %395 : vector<1x128xf32>
    %479 = arith.addf %476, %478 : vector<1x128xf32>
    %480 = vector.broadcast %431 : f32 to vector<1x128xf32>
    %481 = arith.mulf %480, %398 : vector<1x128xf32>
    %482 = arith.addf %479, %481 : vector<1x128xf32>
    %483 = vector.broadcast %433 : f32 to vector<1x128xf32>
    %484 = arith.mulf %483, %367 : vector<1x128xf32>
    %485 = arith.addf %482, %484 : vector<1x128xf32>
    %486 = vector.broadcast %435 : f32 to vector<1x128xf32>
    %487 = arith.mulf %486, %386 : vector<1x128xf32>
    %488 = arith.subf %485, %487 : vector<1x128xf32>
    %489 = vector.broadcast %437 : f32 to vector<1x128xf32>
    %490 = arith.addf %488, %489 : vector<1x128xf32>
    %491 = vector.broadcast %425 : f32 to vector<1x128xf32>
    %492 = arith.mulf %491, %392 : vector<1x128xf32>
    %493 = vector.broadcast %427 : f32 to vector<1x128xf32>
    %494 = arith.mulf %493, %389 : vector<1x128xf32>
    %495 = arith.addf %492, %494 : vector<1x128xf32>
    %496 = vector.broadcast %431 : f32 to vector<1x128xf32>
    %497 = arith.mulf %496, %395 : vector<1x128xf32>
    %498 = arith.addf %495, %497 : vector<1x128xf32>
    %499 = vector.broadcast %429 : f32 to vector<1x128xf32>
    %500 = arith.mulf %499, %398 : vector<1x128xf32>
    %501 = arith.subf %498, %500 : vector<1x128xf32>
    %502 = vector.broadcast %433 : f32 to vector<1x128xf32>
    %503 = arith.mulf %502, %386 : vector<1x128xf32>
    %504 = arith.addf %501, %503 : vector<1x128xf32>
    %505 = vector.broadcast %435 : f32 to vector<1x128xf32>
    %506 = arith.mulf %505, %367 : vector<1x128xf32>
    %507 = arith.addf %504, %506 : vector<1x128xf32>
    %508 = vector.broadcast %439 : f32 to vector<1x128xf32>
    %509 = arith.addf %507, %508 : vector<1x128xf32>
    %510 = vector.broadcast %441 : f32 to vector<1x128xf32>
    %511 = arith.mulf %510, %389 : vector<1x128xf32>
    %512 = vector.broadcast %443 : f32 to vector<1x128xf32>
    %513 = arith.mulf %512, %392 : vector<1x128xf32>
    %514 = arith.addf %511, %513 : vector<1x128xf32>
    %515 = vector.broadcast %445 : f32 to vector<1x128xf32>
    %516 = arith.mulf %515, %395 : vector<1x128xf32>
    %517 = arith.addf %514, %516 : vector<1x128xf32>
    %518 = vector.broadcast %447 : f32 to vector<1x128xf32>
    %519 = arith.mulf %518, %398 : vector<1x128xf32>
    %520 = arith.subf %517, %519 : vector<1x128xf32>
    %521 = vector.broadcast %449 : f32 to vector<1x128xf32>
    %522 = arith.mulf %521, %367 : vector<1x128xf32>
    %523 = arith.addf %520, %522 : vector<1x128xf32>
    %524 = vector.broadcast %451 : f32 to vector<1x128xf32>
    %525 = arith.mulf %524, %386 : vector<1x128xf32>
    %526 = arith.subf %523, %525 : vector<1x128xf32>
    %527 = vector.broadcast %453 : f32 to vector<1x128xf32>
    %528 = arith.addf %526, %527 : vector<1x128xf32>
    %529 = vector.broadcast %443 : f32 to vector<1x128xf32>
    %530 = arith.mulf %529, %389 : vector<1x128xf32>
    %531 = vector.broadcast %441 : f32 to vector<1x128xf32>
    %532 = arith.mulf %531, %392 : vector<1x128xf32>
    %533 = arith.subf %530, %532 : vector<1x128xf32>
    %534 = vector.broadcast %445 : f32 to vector<1x128xf32>
    %535 = arith.mulf %534, %398 : vector<1x128xf32>
    %536 = arith.addf %533, %535 : vector<1x128xf32>
    %537 = vector.broadcast %447 : f32 to vector<1x128xf32>
    %538 = arith.mulf %537, %395 : vector<1x128xf32>
    %539 = arith.addf %536, %538 : vector<1x128xf32>
    %540 = vector.broadcast %449 : f32 to vector<1x128xf32>
    %541 = arith.mulf %540, %386 : vector<1x128xf32>
    %542 = arith.addf %539, %541 : vector<1x128xf32>
    %543 = vector.broadcast %451 : f32 to vector<1x128xf32>
    %544 = arith.mulf %543, %367 : vector<1x128xf32>
    %545 = arith.addf %542, %544 : vector<1x128xf32>
    %546 = vector.broadcast %455 : f32 to vector<1x128xf32>
    %547 = arith.addf %545, %546 : vector<1x128xf32>
    %548 = vector.broadcast %457 : f32 to vector<1x128xf32>
    %549 = arith.mulf %548, %389 : vector<1x128xf32>
    %550 = vector.broadcast %459 : f32 to vector<1x128xf32>
    %551 = arith.mulf %550, %392 : vector<1x128xf32>
    %552 = arith.subf %549, %551 : vector<1x128xf32>
    %553 = vector.broadcast %461 : f32 to vector<1x128xf32>
    %554 = arith.mulf %553, %395 : vector<1x128xf32>
    %555 = arith.addf %552, %554 : vector<1x128xf32>
    %556 = vector.broadcast %463 : f32 to vector<1x128xf32>
    %557 = arith.mulf %556, %398 : vector<1x128xf32>
    %558 = arith.subf %555, %557 : vector<1x128xf32>
    %559 = vector.broadcast %465 : f32 to vector<1x128xf32>
    %560 = arith.mulf %559, %367 : vector<1x128xf32>
    %561 = arith.addf %558, %560 : vector<1x128xf32>
    %562 = vector.broadcast %467 : f32 to vector<1x128xf32>
    %563 = arith.mulf %562, %386 : vector<1x128xf32>
    %564 = arith.subf %561, %563 : vector<1x128xf32>
    %565 = vector.broadcast %469 : f32 to vector<1x128xf32>
    %566 = arith.addf %564, %565 : vector<1x128xf32>
    %567 = vector.broadcast %459 : f32 to vector<1x128xf32>
    %568 = arith.mulf %567, %389 : vector<1x128xf32>
    %569 = vector.broadcast %457 : f32 to vector<1x128xf32>
    %570 = arith.mulf %569, %392 : vector<1x128xf32>
    %571 = arith.addf %568, %570 : vector<1x128xf32>
    %572 = vector.broadcast %463 : f32 to vector<1x128xf32>
    %573 = arith.mulf %572, %395 : vector<1x128xf32>
    %574 = arith.addf %571, %573 : vector<1x128xf32>
    %575 = vector.broadcast %461 : f32 to vector<1x128xf32>
    %576 = arith.mulf %575, %398 : vector<1x128xf32>
    %577 = arith.addf %574, %576 : vector<1x128xf32>
    %578 = vector.broadcast %467 : f32 to vector<1x128xf32>
    %579 = arith.mulf %578, %367 : vector<1x128xf32>
    %580 = arith.addf %577, %579 : vector<1x128xf32>
    %581 = vector.broadcast %465 : f32 to vector<1x128xf32>
    %582 = arith.mulf %581, %386 : vector<1x128xf32>
    %583 = arith.addf %580, %582 : vector<1x128xf32>
    %584 = vector.broadcast %471 : f32 to vector<1x128xf32>
    %585 = arith.addf %583, %584 : vector<1x128xf32>
    %c1_i32_108 = arith.constant 1 : i32
    %586 = tpu.dynamic_rotate %490 by %c1_i32_108 dim 1 : vector<1x128xf32>, i32 -> vector<1x128xf32>
    %cst_109 = arith.constant 0.000000e+00 : f32
    %587 = vector.broadcast %cst_109 : f32 to vector<1x128xf32>
    %588 = arith.select %7, %587, %586 : vector<1x128xi1>, vector<1x128xf32>
    %c1_i32_110 = arith.constant 1 : i32
    %589 = tpu.dynamic_rotate %509 by %c1_i32_110 dim 1 : vector<1x128xf32>, i32 -> vector<1x128xf32>
    %cst_111 = arith.constant 0.000000e+00 : f32
    %590 = vector.broadcast %cst_111 : f32 to vector<1x128xf32>
    %591 = arith.select %7, %590, %589 : vector<1x128xi1>, vector<1x128xf32>
    %c127_i32_112 = arith.constant 127 : i32
    %592 = tpu.dynamic_rotate %528 by %c127_i32_112 dim 1 : vector<1x128xf32>, i32 -> vector<1x128xf32>
    %cst_113 = arith.constant 0.000000e+00 : f32
    %593 = vector.broadcast %cst_113 : f32 to vector<1x128xf32>
    %594 = arith.select %9, %593, %592 : vector<1x128xi1>, vector<1x128xf32>
    %c127_i32_114 = arith.constant 127 : i32
    %595 = tpu.dynamic_rotate %547 by %c127_i32_114 dim 1 : vector<1x128xf32>, i32 -> vector<1x128xf32>
    %cst_115 = arith.constant 0.000000e+00 : f32
    %596 = vector.broadcast %cst_115 : f32 to vector<1x128xf32>
    %597 = arith.select %9, %596, %595 : vector<1x128xi1>, vector<1x128xf32>
    %598 = arith.index_cast %c2_i32 : i32 to index
    %c0_116 = arith.constant 0 : index
    %c0_117 = arith.constant 0 : index
    %599 = vector.load %arg2[%598, %c0_116, %c0_117] : memref<8x8x128xf32, #tpu.memory_space<vmem>>, vector<1x1x128xf32>
    %600 = vector.shape_cast %599 : vector<1x1x128xf32> to vector<1x128xf32>
    %601 = vector.shape_cast %588 : vector<1x128xf32> to vector<1x1x128xf32>
    tpu.vector_store %arg2[%598, %c0_116, %c0_117], %601 {strides = array<i32>} : memref<8x8x128xf32, #tpu.memory_space<vmem>>, vector<1x1x128xf32>,
    %602 = arith.index_cast %c2_i32 : i32 to index
    %c1_118 = arith.constant 1 : index
    %c0_119 = arith.constant 0 : index
    %603 = vector.load %arg2[%602, %c1_118, %c0_119] : memref<8x8x128xf32, #tpu.memory_space<vmem>>, vector<1x1x128xf32>
    %604 = vector.shape_cast %603 : vector<1x1x128xf32> to vector<1x128xf32>
    %605 = vector.shape_cast %591 : vector<1x128xf32> to vector<1x1x128xf32>
    tpu.vector_store %arg2[%602, %c1_118, %c0_119], %605 {strides = array<i32>} : memref<8x8x128xf32, #tpu.memory_space<vmem>>, vector<1x1x128xf32>,
    %606 = arith.index_cast %c2_i32 : i32 to index
    %c2_120 = arith.constant 2 : index
    %c0_121 = arith.constant 0 : index
    %607 = vector.load %arg2[%606, %c2_120, %c0_121] : memref<8x8x128xf32, #tpu.memory_space<vmem>>, vector<1x1x128xf32>
    %608 = vector.shape_cast %607 : vector<1x1x128xf32> to vector<1x128xf32>
    %609 = vector.shape_cast %594 : vector<1x128xf32> to vector<1x1x128xf32>
    tpu.vector_store %arg2[%606, %c2_120, %c0_121], %609 {strides = array<i32>} : memref<8x8x128xf32, #tpu.memory_space<vmem>>, vector<1x1x128xf32>,
    %610 = arith.index_cast %c2_i32 : i32 to index
    %c3_122 = arith.constant 3 : index
    %c0_123 = arith.constant 0 : index
    %611 = vector.load %arg2[%610, %c3_122, %c0_123] : memref<8x8x128xf32, #tpu.memory_space<vmem>>, vector<1x1x128xf32>
    %612 = vector.shape_cast %611 : vector<1x1x128xf32> to vector<1x128xf32>
    %613 = vector.shape_cast %597 : vector<1x128xf32> to vector<1x1x128xf32>
    tpu.vector_store %arg2[%610, %c3_122, %c0_123], %613 {strides = array<i32>} : memref<8x8x128xf32, #tpu.memory_space<vmem>>, vector<1x1x128xf32>,
    %614 = arith.index_cast %c2_i32 : i32 to index
    %c4_124 = arith.constant 4 : index
    %c0_125 = arith.constant 0 : index
    %615 = vector.load %arg2[%614, %c4_124, %c0_125] : memref<8x8x128xf32, #tpu.memory_space<vmem>>, vector<1x1x128xf32>
    %616 = vector.shape_cast %615 : vector<1x1x128xf32> to vector<1x128xf32>
    %617 = vector.shape_cast %566 : vector<1x128xf32> to vector<1x1x128xf32>
    tpu.vector_store %arg2[%614, %c4_124, %c0_125], %617 {strides = array<i32>} : memref<8x8x128xf32, #tpu.memory_space<vmem>>, vector<1x1x128xf32>,
    %618 = arith.index_cast %c2_i32 : i32 to index
    %c5_126 = arith.constant 5 : index
    %c0_127 = arith.constant 0 : index
    %619 = vector.load %arg2[%618, %c5_126, %c0_127] : memref<8x8x128xf32, #tpu.memory_space<vmem>>, vector<1x1x128xf32>
    %620 = vector.shape_cast %619 : vector<1x1x128xf32> to vector<1x128xf32>
    %621 = vector.shape_cast %585 : vector<1x128xf32> to vector<1x1x128xf32>
    tpu.vector_store %arg2[%618, %c5_126, %c0_127], %621 {strides = array<i32>} : memref<8x8x128xf32, #tpu.memory_space<vmem>>, vector<1x1x128xf32>,
    %c3_i32 = arith.constant 3 : i32
    %622 = arith.addi %0, %c3_i32 : i32
    %c0_128 = arith.constant 0 : index
    %623 = arith.index_cast %622 : i32 to index
    %624 = memref.load %arg1[%c0_128, %623] : memref<24x8xf32, #tpu.memory_space<smem>>
    %c1_129 = arith.constant 1 : index
    %625 = arith.index_cast %622 : i32 to index
    %626 = memref.load %arg1[%c1_129, %625] : memref<24x8xf32, #tpu.memory_space<smem>>
    %c2_130 = arith.constant 2 : index
    %627 = arith.index_cast %622 : i32 to index
    %628 = memref.load %arg1[%c2_130, %627] : memref<24x8xf32, #tpu.memory_space<smem>>
    %c3_131 = arith.constant 3 : index
    %629 = arith.index_cast %622 : i32 to index
    %630 = memref.load %arg1[%c3_131, %629] : memref<24x8xf32, #tpu.memory_space<smem>>
    %c4_132 = arith.constant 4 : index
    %631 = arith.index_cast %622 : i32 to index
    %632 = memref.load %arg1[%c4_132, %631] : memref<24x8xf32, #tpu.memory_space<smem>>
    %c5_133 = arith.constant 5 : index
    %633 = arith.index_cast %622 : i32 to index
    %634 = memref.load %arg1[%c5_133, %633] : memref<24x8xf32, #tpu.memory_space<smem>>
    %c6_134 = arith.constant 6 : index
    %635 = arith.index_cast %622 : i32 to index
    %636 = memref.load %arg1[%c6_134, %635] : memref<24x8xf32, #tpu.memory_space<smem>>
    %c7_135 = arith.constant 7 : index
    %637 = arith.index_cast %622 : i32 to index
    %638 = memref.load %arg1[%c7_135, %637] : memref<24x8xf32, #tpu.memory_space<smem>>
    %c8_136 = arith.constant 8 : index
    %639 = arith.index_cast %622 : i32 to index
    %640 = memref.load %arg1[%c8_136, %639] : memref<24x8xf32, #tpu.memory_space<smem>>
    %c9_137 = arith.constant 9 : index
    %641 = arith.index_cast %622 : i32 to index
    %642 = memref.load %arg1[%c9_137, %641] : memref<24x8xf32, #tpu.memory_space<smem>>
    %c10_138 = arith.constant 10 : index
    %643 = arith.index_cast %622 : i32 to index
    %644 = memref.load %arg1[%c10_138, %643] : memref<24x8xf32, #tpu.memory_space<smem>>
    %c11_139 = arith.constant 11 : index
    %645 = arith.index_cast %622 : i32 to index
    %646 = memref.load %arg1[%c11_139, %645] : memref<24x8xf32, #tpu.memory_space<smem>>
    %c12_140 = arith.constant 12 : index
    %647 = arith.index_cast %622 : i32 to index
    %648 = memref.load %arg1[%c12_140, %647] : memref<24x8xf32, #tpu.memory_space<smem>>
    %c13_141 = arith.constant 13 : index
    %649 = arith.index_cast %622 : i32 to index
    %650 = memref.load %arg1[%c13_141, %649] : memref<24x8xf32, #tpu.memory_space<smem>>
    %c14_142 = arith.constant 14 : index
    %651 = arith.index_cast %622 : i32 to index
    %652 = memref.load %arg1[%c14_142, %651] : memref<24x8xf32, #tpu.memory_space<smem>>
    %c15_143 = arith.constant 15 : index
    %653 = arith.index_cast %622 : i32 to index
    %654 = memref.load %arg1[%c15_143, %653] : memref<24x8xf32, #tpu.memory_space<smem>>
    %c16_144 = arith.constant 16 : index
    %655 = arith.index_cast %622 : i32 to index
    %656 = memref.load %arg1[%c16_144, %655] : memref<24x8xf32, #tpu.memory_space<smem>>
    %c17_145 = arith.constant 17 : index
    %657 = arith.index_cast %622 : i32 to index
    %658 = memref.load %arg1[%c17_145, %657] : memref<24x8xf32, #tpu.memory_space<smem>>
    %c18_146 = arith.constant 18 : index
    %659 = arith.index_cast %622 : i32 to index
    %660 = memref.load %arg1[%c18_146, %659] : memref<24x8xf32, #tpu.memory_space<smem>>
    %c19_147 = arith.constant 19 : index
    %661 = arith.index_cast %622 : i32 to index
    %662 = memref.load %arg1[%c19_147, %661] : memref<24x8xf32, #tpu.memory_space<smem>>
    %c20_148 = arith.constant 20 : index
    %663 = arith.index_cast %622 : i32 to index
    %664 = memref.load %arg1[%c20_148, %663] : memref<24x8xf32, #tpu.memory_space<smem>>
    %c21_149 = arith.constant 21 : index
    %665 = arith.index_cast %622 : i32 to index
    %666 = memref.load %arg1[%c21_149, %665] : memref<24x8xf32, #tpu.memory_space<smem>>
    %c22_150 = arith.constant 22 : index
    %667 = arith.index_cast %622 : i32 to index
    %668 = memref.load %arg1[%c22_150, %667] : memref<24x8xf32, #tpu.memory_space<smem>>
    %c23_151 = arith.constant 23 : index
    %669 = arith.index_cast %622 : i32 to index
    %670 = memref.load %arg1[%c23_151, %669] : memref<24x8xf32, #tpu.memory_space<smem>>
    %671 = vector.broadcast %624 : f32 to vector<1x128xf32>
    %672 = arith.mulf %671, %588 : vector<1x128xf32>
    %673 = vector.broadcast %626 : f32 to vector<1x128xf32>
    %674 = arith.mulf %673, %591 : vector<1x128xf32>
    %675 = arith.subf %672, %674 : vector<1x128xf32>
    %676 = vector.broadcast %628 : f32 to vector<1x128xf32>
    %677 = arith.mulf %676, %594 : vector<1x128xf32>
    %678 = arith.addf %675, %677 : vector<1x128xf32>
    %679 = vector.broadcast %630 : f32 to vector<1x128xf32>
    %680 = arith.mulf %679, %597 : vector<1x128xf32>
    %681 = arith.addf %678, %680 : vector<1x128xf32>
    %682 = vector.broadcast %632 : f32 to vector<1x128xf32>
    %683 = arith.mulf %682, %566 : vector<1x128xf32>
    %684 = arith.addf %681, %683 : vector<1x128xf32>
    %685 = vector.broadcast %634 : f32 to vector<1x128xf32>
    %686 = arith.mulf %685, %585 : vector<1x128xf32>
    %687 = arith.subf %684, %686 : vector<1x128xf32>
    %688 = vector.broadcast %636 : f32 to vector<1x128xf32>
    %689 = arith.addf %687, %688 : vector<1x128xf32>
    %690 = vector.broadcast %624 : f32 to vector<1x128xf32>
    %691 = arith.mulf %690, %591 : vector<1x128xf32>
    %692 = vector.broadcast %626 : f32 to vector<1x128xf32>
    %693 = arith.mulf %692, %588 : vector<1x128xf32>
    %694 = arith.addf %691, %693 : vector<1x128xf32>
    %695 = vector.broadcast %630 : f32 to vector<1x128xf32>
    %696 = arith.mulf %695, %594 : vector<1x128xf32>
    %697 = arith.addf %694, %696 : vector<1x128xf32>
    %698 = vector.broadcast %628 : f32 to vector<1x128xf32>
    %699 = arith.mulf %698, %597 : vector<1x128xf32>
    %700 = arith.subf %697, %699 : vector<1x128xf32>
    %701 = vector.broadcast %632 : f32 to vector<1x128xf32>
    %702 = arith.mulf %701, %585 : vector<1x128xf32>
    %703 = arith.addf %700, %702 : vector<1x128xf32>
    %704 = vector.broadcast %634 : f32 to vector<1x128xf32>
    %705 = arith.mulf %704, %566 : vector<1x128xf32>
    %706 = arith.addf %703, %705 : vector<1x128xf32>
    %707 = vector.broadcast %638 : f32 to vector<1x128xf32>
    %708 = arith.addf %706, %707 : vector<1x128xf32>
    %709 = vector.broadcast %640 : f32 to vector<1x128xf32>
    %710 = arith.mulf %709, %588 : vector<1x128xf32>
    %711 = vector.broadcast %642 : f32 to vector<1x128xf32>
    %712 = arith.mulf %711, %591 : vector<1x128xf32>
    %713 = arith.addf %710, %712 : vector<1x128xf32>
    %714 = vector.broadcast %644 : f32 to vector<1x128xf32>
    %715 = arith.mulf %714, %594 : vector<1x128xf32>
    %716 = arith.addf %713, %715 : vector<1x128xf32>
    %717 = vector.broadcast %646 : f32 to vector<1x128xf32>
    %718 = arith.mulf %717, %597 : vector<1x128xf32>
    %719 = arith.subf %716, %718 : vector<1x128xf32>
    %720 = vector.broadcast %648 : f32 to vector<1x128xf32>
    %721 = arith.mulf %720, %566 : vector<1x128xf32>
    %722 = arith.addf %719, %721 : vector<1x128xf32>
    %723 = vector.broadcast %650 : f32 to vector<1x128xf32>
    %724 = arith.mulf %723, %585 : vector<1x128xf32>
    %725 = arith.subf %722, %724 : vector<1x128xf32>
    %726 = vector.broadcast %652 : f32 to vector<1x128xf32>
    %727 = arith.addf %725, %726 : vector<1x128xf32>
    %728 = vector.broadcast %642 : f32 to vector<1x128xf32>
    %729 = arith.mulf %728, %588 : vector<1x128xf32>
    %730 = vector.broadcast %640 : f32 to vector<1x128xf32>
    %731 = arith.mulf %730, %591 : vector<1x128xf32>
    %732 = arith.subf %729, %731 : vector<1x128xf32>
    %733 = vector.broadcast %644 : f32 to vector<1x128xf32>
    %734 = arith.mulf %733, %597 : vector<1x128xf32>
    %735 = arith.addf %732, %734 : vector<1x128xf32>
    %736 = vector.broadcast %646 : f32 to vector<1x128xf32>
    %737 = arith.mulf %736, %594 : vector<1x128xf32>
    %738 = arith.addf %735, %737 : vector<1x128xf32>
    %739 = vector.broadcast %648 : f32 to vector<1x128xf32>
    %740 = arith.mulf %739, %585 : vector<1x128xf32>
    %741 = arith.addf %738, %740 : vector<1x128xf32>
    %742 = vector.broadcast %650 : f32 to vector<1x128xf32>
    %743 = arith.mulf %742, %566 : vector<1x128xf32>
    %744 = arith.addf %741, %743 : vector<1x128xf32>
    %745 = vector.broadcast %654 : f32 to vector<1x128xf32>
    %746 = arith.addf %744, %745 : vector<1x128xf32>
    %747 = vector.broadcast %656 : f32 to vector<1x128xf32>
    %748 = arith.mulf %747, %588 : vector<1x128xf32>
    %749 = vector.broadcast %658 : f32 to vector<1x128xf32>
    %750 = arith.mulf %749, %591 : vector<1x128xf32>
    %751 = arith.subf %748, %750 : vector<1x128xf32>
    %752 = vector.broadcast %660 : f32 to vector<1x128xf32>
    %753 = arith.mulf %752, %594 : vector<1x128xf32>
    %754 = arith.addf %751, %753 : vector<1x128xf32>
    %755 = vector.broadcast %662 : f32 to vector<1x128xf32>
    %756 = arith.mulf %755, %597 : vector<1x128xf32>
    %757 = arith.subf %754, %756 : vector<1x128xf32>
    %758 = vector.broadcast %664 : f32 to vector<1x128xf32>
    %759 = arith.mulf %758, %566 : vector<1x128xf32>
    %760 = arith.addf %757, %759 : vector<1x128xf32>
    %761 = vector.broadcast %666 : f32 to vector<1x128xf32>
    %762 = arith.mulf %761, %585 : vector<1x128xf32>
    %763 = arith.subf %760, %762 : vector<1x128xf32>
    %764 = vector.broadcast %668 : f32 to vector<1x128xf32>
    %765 = arith.addf %763, %764 : vector<1x128xf32>
    %766 = vector.broadcast %658 : f32 to vector<1x128xf32>
    %767 = arith.mulf %766, %588 : vector<1x128xf32>
    %768 = vector.broadcast %656 : f32 to vector<1x128xf32>
    %769 = arith.mulf %768, %591 : vector<1x128xf32>
    %770 = arith.addf %767, %769 : vector<1x128xf32>
    %771 = vector.broadcast %662 : f32 to vector<1x128xf32>
    %772 = arith.mulf %771, %594 : vector<1x128xf32>
    %773 = arith.addf %770, %772 : vector<1x128xf32>
    %774 = vector.broadcast %660 : f32 to vector<1x128xf32>
    %775 = arith.mulf %774, %597 : vector<1x128xf32>
    %776 = arith.addf %773, %775 : vector<1x128xf32>
    %777 = vector.broadcast %666 : f32 to vector<1x128xf32>
    %778 = arith.mulf %777, %566 : vector<1x128xf32>
    %779 = arith.addf %776, %778 : vector<1x128xf32>
    %780 = vector.broadcast %664 : f32 to vector<1x128xf32>
    %781 = arith.mulf %780, %585 : vector<1x128xf32>
    %782 = arith.addf %779, %781 : vector<1x128xf32>
    %783 = vector.broadcast %670 : f32 to vector<1x128xf32>
    %784 = arith.addf %782, %783 : vector<1x128xf32>
    %c1_i32_152 = arith.constant 1 : i32
    %785 = tpu.dynamic_rotate %689 by %c1_i32_152 dim 1 : vector<1x128xf32>, i32 -> vector<1x128xf32>
    %cst_153 = arith.constant 0.000000e+00 : f32
    %786 = vector.broadcast %cst_153 : f32 to vector<1x128xf32>
    %787 = arith.select %7, %786, %785 : vector<1x128xi1>, vector<1x128xf32>
    %c1_i32_154 = arith.constant 1 : i32
    %788 = tpu.dynamic_rotate %708 by %c1_i32_154 dim 1 : vector<1x128xf32>, i32 -> vector<1x128xf32>
    %cst_155 = arith.constant 0.000000e+00 : f32
    %789 = vector.broadcast %cst_155 : f32 to vector<1x128xf32>
    %790 = arith.select %7, %789, %788 : vector<1x128xi1>, vector<1x128xf32>
    %c127_i32_156 = arith.constant 127 : i32
    %791 = tpu.dynamic_rotate %727 by %c127_i32_156 dim 1 : vector<1x128xf32>, i32 -> vector<1x128xf32>
    %cst_157 = arith.constant 0.000000e+00 : f32
    %792 = vector.broadcast %cst_157 : f32 to vector<1x128xf32>
    %793 = arith.select %9, %792, %791 : vector<1x128xi1>, vector<1x128xf32>
    %c127_i32_158 = arith.constant 127 : i32
    %794 = tpu.dynamic_rotate %746 by %c127_i32_158 dim 1 : vector<1x128xf32>, i32 -> vector<1x128xf32>
    %cst_159 = arith.constant 0.000000e+00 : f32
    %795 = vector.broadcast %cst_159 : f32 to vector<1x128xf32>
    %796 = arith.select %9, %795, %794 : vector<1x128xi1>, vector<1x128xf32>
    %797 = arith.index_cast %c3_i32 : i32 to index
    %c0_160 = arith.constant 0 : index
    %c0_161 = arith.constant 0 : index
    %798 = vector.load %arg2[%797, %c0_160, %c0_161] : memref<8x8x128xf32, #tpu.memory_space<vmem>>, vector<1x1x128xf32>
    %799 = vector.shape_cast %798 : vector<1x1x128xf32> to vector<1x128xf32>
    %800 = vector.shape_cast %787 : vector<1x128xf32> to vector<1x1x128xf32>
    tpu.vector_store %arg2[%797, %c0_160, %c0_161], %800 {strides = array<i32>} : memref<8x8x128xf32, #tpu.memory_space<vmem>>, vector<1x1x128xf32>,
    %801 = arith.index_cast %c3_i32 : i32 to index
    %c1_162 = arith.constant 1 : index
    %c0_163 = arith.constant 0 : index
    %802 = vector.load %arg2[%801, %c1_162, %c0_163] : memref<8x8x128xf32, #tpu.memory_space<vmem>>, vector<1x1x128xf32>
    %803 = vector.shape_cast %802 : vector<1x1x128xf32> to vector<1x128xf32>
    %804 = vector.shape_cast %790 : vector<1x128xf32> to vector<1x1x128xf32>
    tpu.vector_store %arg2[%801, %c1_162, %c0_163], %804 {strides = array<i32>} : memref<8x8x128xf32, #tpu.memory_space<vmem>>, vector<1x1x128xf32>,
    %805 = arith.index_cast %c3_i32 : i32 to index
    %c2_164 = arith.constant 2 : index
    %c0_165 = arith.constant 0 : index
    %806 = vector.load %arg2[%805, %c2_164, %c0_165] : memref<8x8x128xf32, #tpu.memory_space<vmem>>, vector<1x1x128xf32>
    %807 = vector.shape_cast %806 : vector<1x1x128xf32> to vector<1x128xf32>
    %808 = vector.shape_cast %793 : vector<1x128xf32> to vector<1x1x128xf32>
    tpu.vector_store %arg2[%805, %c2_164, %c0_165], %808 {strides = array<i32>} : memref<8x8x128xf32, #tpu.memory_space<vmem>>, vector<1x1x128xf32>,
    %809 = arith.index_cast %c3_i32 : i32 to index
    %c3_166 = arith.constant 3 : index
    %c0_167 = arith.constant 0 : index
    %810 = vector.load %arg2[%809, %c3_166, %c0_167] : memref<8x8x128xf32, #tpu.memory_space<vmem>>, vector<1x1x128xf32>
    %811 = vector.shape_cast %810 : vector<1x1x128xf32> to vector<1x128xf32>
    %812 = vector.shape_cast %796 : vector<1x128xf32> to vector<1x1x128xf32>
    tpu.vector_store %arg2[%809, %c3_166, %c0_167], %812 {strides = array<i32>} : memref<8x8x128xf32, #tpu.memory_space<vmem>>, vector<1x1x128xf32>,
    %813 = arith.index_cast %c3_i32 : i32 to index
    %c4_168 = arith.constant 4 : index
    %c0_169 = arith.constant 0 : index
    %814 = vector.load %arg2[%813, %c4_168, %c0_169] : memref<8x8x128xf32, #tpu.memory_space<vmem>>, vector<1x1x128xf32>
    %815 = vector.shape_cast %814 : vector<1x1x128xf32> to vector<1x128xf32>
    %816 = vector.shape_cast %765 : vector<1x128xf32> to vector<1x1x128xf32>
    tpu.vector_store %arg2[%813, %c4_168, %c0_169], %816 {strides = array<i32>} : memref<8x8x128xf32, #tpu.memory_space<vmem>>, vector<1x1x128xf32>,
    %817 = arith.index_cast %c3_i32 : i32 to index
    %c5_170 = arith.constant 5 : index
    %c0_171 = arith.constant 0 : index
    %818 = vector.load %arg2[%817, %c5_170, %c0_171] : memref<8x8x128xf32, #tpu.memory_space<vmem>>, vector<1x1x128xf32>
    %819 = vector.shape_cast %818 : vector<1x1x128xf32> to vector<1x128xf32>
    %820 = vector.shape_cast %784 : vector<1x128xf32> to vector<1x1x128xf32>
    tpu.vector_store %arg2[%817, %c5_170, %c0_171], %820 {strides = array<i32>} : memref<8x8x128xf32, #tpu.memory_space<vmem>>, vector<1x1x128xf32>,
    %c4_i32 = arith.constant 4 : i32
    %821 = arith.addi %0, %c4_i32 : i32
    %c0_172 = arith.constant 0 : index
    %822 = arith.index_cast %821 : i32 to index
    %823 = memref.load %arg1[%c0_172, %822] : memref<24x8xf32, #tpu.memory_space<smem>>
    %c1_173 = arith.constant 1 : index
    %824 = arith.index_cast %821 : i32 to index
    %825 = memref.load %arg1[%c1_173, %824] : memref<24x8xf32, #tpu.memory_space<smem>>
    %c2_174 = arith.constant 2 : index
    %826 = arith.index_cast %821 : i32 to index
    %827 = memref.load %arg1[%c2_174, %826] : memref<24x8xf32, #tpu.memory_space<smem>>
    %c3_175 = arith.constant 3 : index
    %828 = arith.index_cast %821 : i32 to index
    %829 = memref.load %arg1[%c3_175, %828] : memref<24x8xf32, #tpu.memory_space<smem>>
    %c4_176 = arith.constant 4 : index
    %830 = arith.index_cast %821 : i32 to index
    %831 = memref.load %arg1[%c4_176, %830] : memref<24x8xf32, #tpu.memory_space<smem>>
    %c5_177 = arith.constant 5 : index
    %832 = arith.index_cast %821 : i32 to index
    %833 = memref.load %arg1[%c5_177, %832] : memref<24x8xf32, #tpu.memory_space<smem>>
    %c6_178 = arith.constant 6 : index
    %834 = arith.index_cast %821 : i32 to index
    %835 = memref.load %arg1[%c6_178, %834] : memref<24x8xf32, #tpu.memory_space<smem>>
    %c7_179 = arith.constant 7 : index
    %836 = arith.index_cast %821 : i32 to index
    %837 = memref.load %arg1[%c7_179, %836] : memref<24x8xf32, #tpu.memory_space<smem>>
    %c8_180 = arith.constant 8 : index
    %838 = arith.index_cast %821 : i32 to index
    %839 = memref.load %arg1[%c8_180, %838] : memref<24x8xf32, #tpu.memory_space<smem>>
    %c9_181 = arith.constant 9 : index
    %840 = arith.index_cast %821 : i32 to index
    %841 = memref.load %arg1[%c9_181, %840] : memref<24x8xf32, #tpu.memory_space<smem>>
    %c10_182 = arith.constant 10 : index
    %842 = arith.index_cast %821 : i32 to index
    %843 = memref.load %arg1[%c10_182, %842] : memref<24x8xf32, #tpu.memory_space<smem>>
    %c11_183 = arith.constant 11 : index
    %844 = arith.index_cast %821 : i32 to index
    %845 = memref.load %arg1[%c11_183, %844] : memref<24x8xf32, #tpu.memory_space<smem>>
    %c12_184 = arith.constant 12 : index
    %846 = arith.index_cast %821 : i32 to index
    %847 = memref.load %arg1[%c12_184, %846] : memref<24x8xf32, #tpu.memory_space<smem>>
    %c13_185 = arith.constant 13 : index
    %848 = arith.index_cast %821 : i32 to index
    %849 = memref.load %arg1[%c13_185, %848] : memref<24x8xf32, #tpu.memory_space<smem>>
    %c14_186 = arith.constant 14 : index
    %850 = arith.index_cast %821 : i32 to index
    %851 = memref.load %arg1[%c14_186, %850] : memref<24x8xf32, #tpu.memory_space<smem>>
    %c15_187 = arith.constant 15 : index
    %852 = arith.index_cast %821 : i32 to index
    %853 = memref.load %arg1[%c15_187, %852] : memref<24x8xf32, #tpu.memory_space<smem>>
    %c16_188 = arith.constant 16 : index
    %854 = arith.index_cast %821 : i32 to index
    %855 = memref.load %arg1[%c16_188, %854] : memref<24x8xf32, #tpu.memory_space<smem>>
    %c17_189 = arith.constant 17 : index
    %856 = arith.index_cast %821 : i32 to index
    %857 = memref.load %arg1[%c17_189, %856] : memref<24x8xf32, #tpu.memory_space<smem>>
    %c18_190 = arith.constant 18 : index
    %858 = arith.index_cast %821 : i32 to index
    %859 = memref.load %arg1[%c18_190, %858] : memref<24x8xf32, #tpu.memory_space<smem>>
    %c19_191 = arith.constant 19 : index
    %860 = arith.index_cast %821 : i32 to index
    %861 = memref.load %arg1[%c19_191, %860] : memref<24x8xf32, #tpu.memory_space<smem>>
    %c20_192 = arith.constant 20 : index
    %862 = arith.index_cast %821 : i32 to index
    %863 = memref.load %arg1[%c20_192, %862] : memref<24x8xf32, #tpu.memory_space<smem>>
    %c21_193 = arith.constant 21 : index
    %864 = arith.index_cast %821 : i32 to index
    %865 = memref.load %arg1[%c21_193, %864] : memref<24x8xf32, #tpu.memory_space<smem>>
    %c22_194 = arith.constant 22 : index
    %866 = arith.index_cast %821 : i32 to index
    %867 = memref.load %arg1[%c22_194, %866] : memref<24x8xf32, #tpu.memory_space<smem>>
    %c23_195 = arith.constant 23 : index
    %868 = arith.index_cast %821 : i32 to index
    %869 = memref.load %arg1[%c23_195, %868] : memref<24x8xf32, #tpu.memory_space<smem>>
    %870 = vector.broadcast %823 : f32 to vector<1x128xf32>
    %871 = arith.mulf %870, %787 : vector<1x128xf32>
    %872 = vector.broadcast %825 : f32 to vector<1x128xf32>
    %873 = arith.mulf %872, %790 : vector<1x128xf32>
    %874 = arith.subf %871, %873 : vector<1x128xf32>
    %875 = vector.broadcast %827 : f32 to vector<1x128xf32>
    %876 = arith.mulf %875, %793 : vector<1x128xf32>
    %877 = arith.addf %874, %876 : vector<1x128xf32>
    %878 = vector.broadcast %829 : f32 to vector<1x128xf32>
    %879 = arith.mulf %878, %796 : vector<1x128xf32>
    %880 = arith.addf %877, %879 : vector<1x128xf32>
    %881 = vector.broadcast %831 : f32 to vector<1x128xf32>
    %882 = arith.mulf %881, %765 : vector<1x128xf32>
    %883 = arith.addf %880, %882 : vector<1x128xf32>
    %884 = vector.broadcast %833 : f32 to vector<1x128xf32>
    %885 = arith.mulf %884, %784 : vector<1x128xf32>
    %886 = arith.subf %883, %885 : vector<1x128xf32>
    %887 = vector.broadcast %835 : f32 to vector<1x128xf32>
    %888 = arith.addf %886, %887 : vector<1x128xf32>
    %889 = vector.broadcast %823 : f32 to vector<1x128xf32>
    %890 = arith.mulf %889, %790 : vector<1x128xf32>
    %891 = vector.broadcast %825 : f32 to vector<1x128xf32>
    %892 = arith.mulf %891, %787 : vector<1x128xf32>
    %893 = arith.addf %890, %892 : vector<1x128xf32>
    %894 = vector.broadcast %829 : f32 to vector<1x128xf32>
    %895 = arith.mulf %894, %793 : vector<1x128xf32>
    %896 = arith.addf %893, %895 : vector<1x128xf32>
    %897 = vector.broadcast %827 : f32 to vector<1x128xf32>
    %898 = arith.mulf %897, %796 : vector<1x128xf32>
    %899 = arith.subf %896, %898 : vector<1x128xf32>
    %900 = vector.broadcast %831 : f32 to vector<1x128xf32>
    %901 = arith.mulf %900, %784 : vector<1x128xf32>
    %902 = arith.addf %899, %901 : vector<1x128xf32>
    %903 = vector.broadcast %833 : f32 to vector<1x128xf32>
    %904 = arith.mulf %903, %765 : vector<1x128xf32>
    %905 = arith.addf %902, %904 : vector<1x128xf32>
    %906 = vector.broadcast %837 : f32 to vector<1x128xf32>
    %907 = arith.addf %905, %906 : vector<1x128xf32>
    %908 = vector.broadcast %839 : f32 to vector<1x128xf32>
    %909 = arith.mulf %908, %787 : vector<1x128xf32>
    %910 = vector.broadcast %841 : f32 to vector<1x128xf32>
    %911 = arith.mulf %910, %790 : vector<1x128xf32>
    %912 = arith.addf %909, %911 : vector<1x128xf32>
    %913 = vector.broadcast %843 : f32 to vector<1x128xf32>
    %914 = arith.mulf %913, %793 : vector<1x128xf32>
    %915 = arith.addf %912, %914 : vector<1x128xf32>
    %916 = vector.broadcast %845 : f32 to vector<1x128xf32>
    %917 = arith.mulf %916, %796 : vector<1x128xf32>
    %918 = arith.subf %915, %917 : vector<1x128xf32>
    %919 = vector.broadcast %847 : f32 to vector<1x128xf32>
    %920 = arith.mulf %919, %765 : vector<1x128xf32>
    %921 = arith.addf %918, %920 : vector<1x128xf32>
    %922 = vector.broadcast %849 : f32 to vector<1x128xf32>
    %923 = arith.mulf %922, %784 : vector<1x128xf32>
    %924 = arith.subf %921, %923 : vector<1x128xf32>
    %925 = vector.broadcast %851 : f32 to vector<1x128xf32>
    %926 = arith.addf %924, %925 : vector<1x128xf32>
    %927 = vector.broadcast %841 : f32 to vector<1x128xf32>
    %928 = arith.mulf %927, %787 : vector<1x128xf32>
    %929 = vector.broadcast %839 : f32 to vector<1x128xf32>
    %930 = arith.mulf %929, %790 : vector<1x128xf32>
    %931 = arith.subf %928, %930 : vector<1x128xf32>
    %932 = vector.broadcast %843 : f32 to vector<1x128xf32>
    %933 = arith.mulf %932, %796 : vector<1x128xf32>
    %934 = arith.addf %931, %933 : vector<1x128xf32>
    %935 = vector.broadcast %845 : f32 to vector<1x128xf32>
    %936 = arith.mulf %935, %793 : vector<1x128xf32>
    %937 = arith.addf %934, %936 : vector<1x128xf32>
    %938 = vector.broadcast %847 : f32 to vector<1x128xf32>
    %939 = arith.mulf %938, %784 : vector<1x128xf32>
    %940 = arith.addf %937, %939 : vector<1x128xf32>
    %941 = vector.broadcast %849 : f32 to vector<1x128xf32>
    %942 = arith.mulf %941, %765 : vector<1x128xf32>
    %943 = arith.addf %940, %942 : vector<1x128xf32>
    %944 = vector.broadcast %853 : f32 to vector<1x128xf32>
    %945 = arith.addf %943, %944 : vector<1x128xf32>
    %946 = vector.broadcast %855 : f32 to vector<1x128xf32>
    %947 = arith.mulf %946, %787 : vector<1x128xf32>
    %948 = vector.broadcast %857 : f32 to vector<1x128xf32>
    %949 = arith.mulf %948, %790 : vector<1x128xf32>
    %950 = arith.subf %947, %949 : vector<1x128xf32>
    %951 = vector.broadcast %859 : f32 to vector<1x128xf32>
    %952 = arith.mulf %951, %793 : vector<1x128xf32>
    %953 = arith.addf %950, %952 : vector<1x128xf32>
    %954 = vector.broadcast %861 : f32 to vector<1x128xf32>
    %955 = arith.mulf %954, %796 : vector<1x128xf32>
    %956 = arith.subf %953, %955 : vector<1x128xf32>
    %957 = vector.broadcast %863 : f32 to vector<1x128xf32>
    %958 = arith.mulf %957, %765 : vector<1x128xf32>
    %959 = arith.addf %956, %958 : vector<1x128xf32>
    %960 = vector.broadcast %865 : f32 to vector<1x128xf32>
    %961 = arith.mulf %960, %784 : vector<1x128xf32>
    %962 = arith.subf %959, %961 : vector<1x128xf32>
    %963 = vector.broadcast %867 : f32 to vector<1x128xf32>
    %964 = arith.addf %962, %963 : vector<1x128xf32>
    %965 = vector.broadcast %857 : f32 to vector<1x128xf32>
    %966 = arith.mulf %965, %787 : vector<1x128xf32>
    %967 = vector.broadcast %855 : f32 to vector<1x128xf32>
    %968 = arith.mulf %967, %790 : vector<1x128xf32>
    %969 = arith.addf %966, %968 : vector<1x128xf32>
    %970 = vector.broadcast %861 : f32 to vector<1x128xf32>
    %971 = arith.mulf %970, %793 : vector<1x128xf32>
    %972 = arith.addf %969, %971 : vector<1x128xf32>
    %973 = vector.broadcast %859 : f32 to vector<1x128xf32>
    %974 = arith.mulf %973, %796 : vector<1x128xf32>
    %975 = arith.addf %972, %974 : vector<1x128xf32>
    %976 = vector.broadcast %865 : f32 to vector<1x128xf32>
    %977 = arith.mulf %976, %765 : vector<1x128xf32>
    %978 = arith.addf %975, %977 : vector<1x128xf32>
    %979 = vector.broadcast %863 : f32 to vector<1x128xf32>
    %980 = arith.mulf %979, %784 : vector<1x128xf32>
    %981 = arith.addf %978, %980 : vector<1x128xf32>
    %982 = vector.broadcast %869 : f32 to vector<1x128xf32>
    %983 = arith.addf %981, %982 : vector<1x128xf32>
    %c1_i32_196 = arith.constant 1 : i32
    %984 = tpu.dynamic_rotate %888 by %c1_i32_196 dim 1 : vector<1x128xf32>, i32 -> vector<1x128xf32>
    %cst_197 = arith.constant 0.000000e+00 : f32
    %985 = vector.broadcast %cst_197 : f32 to vector<1x128xf32>
    %986 = arith.select %7, %985, %984 : vector<1x128xi1>, vector<1x128xf32>
    %c1_i32_198 = arith.constant 1 : i32
    %987 = tpu.dynamic_rotate %907 by %c1_i32_198 dim 1 : vector<1x128xf32>, i32 -> vector<1x128xf32>
    %cst_199 = arith.constant 0.000000e+00 : f32
    %988 = vector.broadcast %cst_199 : f32 to vector<1x128xf32>
    %989 = arith.select %7, %988, %987 : vector<1x128xi1>, vector<1x128xf32>
    %c127_i32_200 = arith.constant 127 : i32
    %990 = tpu.dynamic_rotate %926 by %c127_i32_200 dim 1 : vector<1x128xf32>, i32 -> vector<1x128xf32>
    %cst_201 = arith.constant 0.000000e+00 : f32
    %991 = vector.broadcast %cst_201 : f32 to vector<1x128xf32>
    %992 = arith.select %9, %991, %990 : vector<1x128xi1>, vector<1x128xf32>
    %c127_i32_202 = arith.constant 127 : i32
    %993 = tpu.dynamic_rotate %945 by %c127_i32_202 dim 1 : vector<1x128xf32>, i32 -> vector<1x128xf32>
    %cst_203 = arith.constant 0.000000e+00 : f32
    %994 = vector.broadcast %cst_203 : f32 to vector<1x128xf32>
    %995 = arith.select %9, %994, %993 : vector<1x128xi1>, vector<1x128xf32>
    %996 = arith.index_cast %c4_i32 : i32 to index
    %c0_204 = arith.constant 0 : index
    %c0_205 = arith.constant 0 : index
    %997 = vector.load %arg2[%996, %c0_204, %c0_205] : memref<8x8x128xf32, #tpu.memory_space<vmem>>, vector<1x1x128xf32>
    %998 = vector.shape_cast %997 : vector<1x1x128xf32> to vector<1x128xf32>
    %999 = vector.shape_cast %986 : vector<1x128xf32> to vector<1x1x128xf32>
    tpu.vector_store %arg2[%996, %c0_204, %c0_205], %999 {strides = array<i32>} : memref<8x8x128xf32, #tpu.memory_space<vmem>>, vector<1x1x128xf32>,
    %1000 = arith.index_cast %c4_i32 : i32 to index
    %c1_206 = arith.constant 1 : index
    %c0_207 = arith.constant 0 : index
    %1001 = vector.load %arg2[%1000, %c1_206, %c0_207] : memref<8x8x128xf32, #tpu.memory_space<vmem>>, vector<1x1x128xf32>
    %1002 = vector.shape_cast %1001 : vector<1x1x128xf32> to vector<1x128xf32>
    %1003 = vector.shape_cast %989 : vector<1x128xf32> to vector<1x1x128xf32>
    tpu.vector_store %arg2[%1000, %c1_206, %c0_207], %1003 {strides = array<i32>} : memref<8x8x128xf32, #tpu.memory_space<vmem>>, vector<1x1x128xf32>,
    %1004 = arith.index_cast %c4_i32 : i32 to index
    %c2_208 = arith.constant 2 : index
    %c0_209 = arith.constant 0 : index
    %1005 = vector.load %arg2[%1004, %c2_208, %c0_209] : memref<8x8x128xf32, #tpu.memory_space<vmem>>, vector<1x1x128xf32>
    %1006 = vector.shape_cast %1005 : vector<1x1x128xf32> to vector<1x128xf32>
    %1007 = vector.shape_cast %992 : vector<1x128xf32> to vector<1x1x128xf32>
    tpu.vector_store %arg2[%1004, %c2_208, %c0_209], %1007 {strides = array<i32>} : memref<8x8x128xf32, #tpu.memory_space<vmem>>, vector<1x1x128xf32>,
    %1008 = arith.index_cast %c4_i32 : i32 to index
    %c3_210 = arith.constant 3 : index
    %c0_211 = arith.constant 0 : index
    %1009 = vector.load %arg2[%1008, %c3_210, %c0_211] : memref<8x8x128xf32, #tpu.memory_space<vmem>>, vector<1x1x128xf32>
    %1010 = vector.shape_cast %1009 : vector<1x1x128xf32> to vector<1x128xf32>
    %1011 = vector.shape_cast %995 : vector<1x128xf32> to vector<1x1x128xf32>
    tpu.vector_store %arg2[%1008, %c3_210, %c0_211], %1011 {strides = array<i32>} : memref<8x8x128xf32, #tpu.memory_space<vmem>>, vector<1x1x128xf32>,
    %1012 = arith.index_cast %c4_i32 : i32 to index
    %c4_212 = arith.constant 4 : index
    %c0_213 = arith.constant 0 : index
    %1013 = vector.load %arg2[%1012, %c4_212, %c0_213] : memref<8x8x128xf32, #tpu.memory_space<vmem>>, vector<1x1x128xf32>
    %1014 = vector.shape_cast %1013 : vector<1x1x128xf32> to vector<1x128xf32>
    %1015 = vector.shape_cast %964 : vector<1x128xf32> to vector<1x1x128xf32>
    tpu.vector_store %arg2[%1012, %c4_212, %c0_213], %1015 {strides = array<i32>} : memref<8x8x128xf32, #tpu.memory_space<vmem>>, vector<1x1x128xf32>,
    %1016 = arith.index_cast %c4_i32 : i32 to index
    %c5_214 = arith.constant 5 : index
    %c0_215 = arith.constant 0 : index
    %1017 = vector.load %arg2[%1016, %c5_214, %c0_215] : memref<8x8x128xf32, #tpu.memory_space<vmem>>, vector<1x1x128xf32>
    %1018 = vector.shape_cast %1017 : vector<1x1x128xf32> to vector<1x128xf32>
    %1019 = vector.shape_cast %983 : vector<1x128xf32> to vector<1x1x128xf32>
    tpu.vector_store %arg2[%1016, %c5_214, %c0_215], %1019 {strides = array<i32>} : memref<8x8x128xf32, #tpu.memory_space<vmem>>, vector<1x1x128xf32>,
    %c5_i32 = arith.constant 5 : i32
    %1020 = arith.addi %0, %c5_i32 : i32
    %c0_216 = arith.constant 0 : index
    %1021 = arith.index_cast %1020 : i32 to index
    %1022 = memref.load %arg1[%c0_216, %1021] : memref<24x8xf32, #tpu.memory_space<smem>>
    %c1_217 = arith.constant 1 : index
    %1023 = arith.index_cast %1020 : i32 to index
    %1024 = memref.load %arg1[%c1_217, %1023] : memref<24x8xf32, #tpu.memory_space<smem>>
    %c2_218 = arith.constant 2 : index
    %1025 = arith.index_cast %1020 : i32 to index
    %1026 = memref.load %arg1[%c2_218, %1025] : memref<24x8xf32, #tpu.memory_space<smem>>
    %c3_219 = arith.constant 3 : index
    %1027 = arith.index_cast %1020 : i32 to index
    %1028 = memref.load %arg1[%c3_219, %1027] : memref<24x8xf32, #tpu.memory_space<smem>>
    %c4_220 = arith.constant 4 : index
    %1029 = arith.index_cast %1020 : i32 to index
    %1030 = memref.load %arg1[%c4_220, %1029] : memref<24x8xf32, #tpu.memory_space<smem>>
    %c5_221 = arith.constant 5 : index
    %1031 = arith.index_cast %1020 : i32 to index
    %1032 = memref.load %arg1[%c5_221, %1031] : memref<24x8xf32, #tpu.memory_space<smem>>
    %c6_222 = arith.constant 6 : index
    %1033 = arith.index_cast %1020 : i32 to index
    %1034 = memref.load %arg1[%c6_222, %1033] : memref<24x8xf32, #tpu.memory_space<smem>>
    %c7_223 = arith.constant 7 : index
    %1035 = arith.index_cast %1020 : i32 to index
    %1036 = memref.load %arg1[%c7_223, %1035] : memref<24x8xf32, #tpu.memory_space<smem>>
    %c8_224 = arith.constant 8 : index
    %1037 = arith.index_cast %1020 : i32 to index
    %1038 = memref.load %arg1[%c8_224, %1037] : memref<24x8xf32, #tpu.memory_space<smem>>
    %c9_225 = arith.constant 9 : index
    %1039 = arith.index_cast %1020 : i32 to index
    %1040 = memref.load %arg1[%c9_225, %1039] : memref<24x8xf32, #tpu.memory_space<smem>>
    %c10_226 = arith.constant 10 : index
    %1041 = arith.index_cast %1020 : i32 to index
    %1042 = memref.load %arg1[%c10_226, %1041] : memref<24x8xf32, #tpu.memory_space<smem>>
    %c11_227 = arith.constant 11 : index
    %1043 = arith.index_cast %1020 : i32 to index
    %1044 = memref.load %arg1[%c11_227, %1043] : memref<24x8xf32, #tpu.memory_space<smem>>
    %c12_228 = arith.constant 12 : index
    %1045 = arith.index_cast %1020 : i32 to index
    %1046 = memref.load %arg1[%c12_228, %1045] : memref<24x8xf32, #tpu.memory_space<smem>>
    %c13_229 = arith.constant 13 : index
    %1047 = arith.index_cast %1020 : i32 to index
    %1048 = memref.load %arg1[%c13_229, %1047] : memref<24x8xf32, #tpu.memory_space<smem>>
    %c14_230 = arith.constant 14 : index
    %1049 = arith.index_cast %1020 : i32 to index
    %1050 = memref.load %arg1[%c14_230, %1049] : memref<24x8xf32, #tpu.memory_space<smem>>
    %c15_231 = arith.constant 15 : index
    %1051 = arith.index_cast %1020 : i32 to index
    %1052 = memref.load %arg1[%c15_231, %1051] : memref<24x8xf32, #tpu.memory_space<smem>>
    %c16_232 = arith.constant 16 : index
    %1053 = arith.index_cast %1020 : i32 to index
    %1054 = memref.load %arg1[%c16_232, %1053] : memref<24x8xf32, #tpu.memory_space<smem>>
    %c17_233 = arith.constant 17 : index
    %1055 = arith.index_cast %1020 : i32 to index
    %1056 = memref.load %arg1[%c17_233, %1055] : memref<24x8xf32, #tpu.memory_space<smem>>
    %c18_234 = arith.constant 18 : index
    %1057 = arith.index_cast %1020 : i32 to index
    %1058 = memref.load %arg1[%c18_234, %1057] : memref<24x8xf32, #tpu.memory_space<smem>>
    %c19_235 = arith.constant 19 : index
    %1059 = arith.index_cast %1020 : i32 to index
    %1060 = memref.load %arg1[%c19_235, %1059] : memref<24x8xf32, #tpu.memory_space<smem>>
    %c20_236 = arith.constant 20 : index
    %1061 = arith.index_cast %1020 : i32 to index
    %1062 = memref.load %arg1[%c20_236, %1061] : memref<24x8xf32, #tpu.memory_space<smem>>
    %c21_237 = arith.constant 21 : index
    %1063 = arith.index_cast %1020 : i32 to index
    %1064 = memref.load %arg1[%c21_237, %1063] : memref<24x8xf32, #tpu.memory_space<smem>>
    %c22_238 = arith.constant 22 : index
    %1065 = arith.index_cast %1020 : i32 to index
    %1066 = memref.load %arg1[%c22_238, %1065] : memref<24x8xf32, #tpu.memory_space<smem>>
    %c23_239 = arith.constant 23 : index
    %1067 = arith.index_cast %1020 : i32 to index
    %1068 = memref.load %arg1[%c23_239, %1067] : memref<24x8xf32, #tpu.memory_space<smem>>
    %1069 = vector.broadcast %1022 : f32 to vector<1x128xf32>
    %1070 = arith.mulf %1069, %986 : vector<1x128xf32>
    %1071 = vector.broadcast %1024 : f32 to vector<1x128xf32>
    %1072 = arith.mulf %1071, %989 : vector<1x128xf32>
    %1073 = arith.subf %1070, %1072 : vector<1x128xf32>
    %1074 = vector.broadcast %1026 : f32 to vector<1x128xf32>
    %1075 = arith.mulf %1074, %992 : vector<1x128xf32>
    %1076 = arith.addf %1073, %1075 : vector<1x128xf32>
    %1077 = vector.broadcast %1028 : f32 to vector<1x128xf32>
    %1078 = arith.mulf %1077, %995 : vector<1x128xf32>
    %1079 = arith.addf %1076, %1078 : vector<1x128xf32>
    %1080 = vector.broadcast %1030 : f32 to vector<1x128xf32>
    %1081 = arith.mulf %1080, %964 : vector<1x128xf32>
    %1082 = arith.addf %1079, %1081 : vector<1x128xf32>
    %1083 = vector.broadcast %1032 : f32 to vector<1x128xf32>
    %1084 = arith.mulf %1083, %983 : vector<1x128xf32>
    %1085 = arith.subf %1082, %1084 : vector<1x128xf32>
    %1086 = vector.broadcast %1034 : f32 to vector<1x128xf32>
    %1087 = arith.addf %1085, %1086 : vector<1x128xf32>
    %1088 = vector.broadcast %1022 : f32 to vector<1x128xf32>
    %1089 = arith.mulf %1088, %989 : vector<1x128xf32>
    %1090 = vector.broadcast %1024 : f32 to vector<1x128xf32>
    %1091 = arith.mulf %1090, %986 : vector<1x128xf32>
    %1092 = arith.addf %1089, %1091 : vector<1x128xf32>
    %1093 = vector.broadcast %1028 : f32 to vector<1x128xf32>
    %1094 = arith.mulf %1093, %992 : vector<1x128xf32>
    %1095 = arith.addf %1092, %1094 : vector<1x128xf32>
    %1096 = vector.broadcast %1026 : f32 to vector<1x128xf32>
    %1097 = arith.mulf %1096, %995 : vector<1x128xf32>
    %1098 = arith.subf %1095, %1097 : vector<1x128xf32>
    %1099 = vector.broadcast %1030 : f32 to vector<1x128xf32>
    %1100 = arith.mulf %1099, %983 : vector<1x128xf32>
    %1101 = arith.addf %1098, %1100 : vector<1x128xf32>
    %1102 = vector.broadcast %1032 : f32 to vector<1x128xf32>
    %1103 = arith.mulf %1102, %964 : vector<1x128xf32>
    %1104 = arith.addf %1101, %1103 : vector<1x128xf32>
    %1105 = vector.broadcast %1036 : f32 to vector<1x128xf32>
    %1106 = arith.addf %1104, %1105 : vector<1x128xf32>
    %1107 = vector.broadcast %1038 : f32 to vector<1x128xf32>
    %1108 = arith.mulf %1107, %986 : vector<1x128xf32>
    %1109 = vector.broadcast %1040 : f32 to vector<1x128xf32>
    %1110 = arith.mulf %1109, %989 : vector<1x128xf32>
    %1111 = arith.addf %1108, %1110 : vector<1x128xf32>
    %1112 = vector.broadcast %1042 : f32 to vector<1x128xf32>
    %1113 = arith.mulf %1112, %992 : vector<1x128xf32>
    %1114 = arith.addf %1111, %1113 : vector<1x128xf32>
    %1115 = vector.broadcast %1044 : f32 to vector<1x128xf32>
    %1116 = arith.mulf %1115, %995 : vector<1x128xf32>
    %1117 = arith.subf %1114, %1116 : vector<1x128xf32>
    %1118 = vector.broadcast %1046 : f32 to vector<1x128xf32>
    %1119 = arith.mulf %1118, %964 : vector<1x128xf32>
    %1120 = arith.addf %1117, %1119 : vector<1x128xf32>
    %1121 = vector.broadcast %1048 : f32 to vector<1x128xf32>
    %1122 = arith.mulf %1121, %983 : vector<1x128xf32>
    %1123 = arith.subf %1120, %1122 : vector<1x128xf32>
    %1124 = vector.broadcast %1050 : f32 to vector<1x128xf32>
    %1125 = arith.addf %1123, %1124 : vector<1x128xf32>
    %1126 = vector.broadcast %1040 : f32 to vector<1x128xf32>
    %1127 = arith.mulf %1126, %986 : vector<1x128xf32>
    %1128 = vector.broadcast %1038 : f32 to vector<1x128xf32>
    %1129 = arith.mulf %1128, %989 : vector<1x128xf32>
    %1130 = arith.subf %1127, %1129 : vector<1x128xf32>
    %1131 = vector.broadcast %1042 : f32 to vector<1x128xf32>
    %1132 = arith.mulf %1131, %995 : vector<1x128xf32>
    %1133 = arith.addf %1130, %1132 : vector<1x128xf32>
    %1134 = vector.broadcast %1044 : f32 to vector<1x128xf32>
    %1135 = arith.mulf %1134, %992 : vector<1x128xf32>
    %1136 = arith.addf %1133, %1135 : vector<1x128xf32>
    %1137 = vector.broadcast %1046 : f32 to vector<1x128xf32>
    %1138 = arith.mulf %1137, %983 : vector<1x128xf32>
    %1139 = arith.addf %1136, %1138 : vector<1x128xf32>
    %1140 = vector.broadcast %1048 : f32 to vector<1x128xf32>
    %1141 = arith.mulf %1140, %964 : vector<1x128xf32>
    %1142 = arith.addf %1139, %1141 : vector<1x128xf32>
    %1143 = vector.broadcast %1052 : f32 to vector<1x128xf32>
    %1144 = arith.addf %1142, %1143 : vector<1x128xf32>
    %1145 = vector.broadcast %1054 : f32 to vector<1x128xf32>
    %1146 = arith.mulf %1145, %986 : vector<1x128xf32>
    %1147 = vector.broadcast %1056 : f32 to vector<1x128xf32>
    %1148 = arith.mulf %1147, %989 : vector<1x128xf32>
    %1149 = arith.subf %1146, %1148 : vector<1x128xf32>
    %1150 = vector.broadcast %1058 : f32 to vector<1x128xf32>
    %1151 = arith.mulf %1150, %992 : vector<1x128xf32>
    %1152 = arith.addf %1149, %1151 : vector<1x128xf32>
    %1153 = vector.broadcast %1060 : f32 to vector<1x128xf32>
    %1154 = arith.mulf %1153, %995 : vector<1x128xf32>
    %1155 = arith.subf %1152, %1154 : vector<1x128xf32>
    %1156 = vector.broadcast %1062 : f32 to vector<1x128xf32>
    %1157 = arith.mulf %1156, %964 : vector<1x128xf32>
    %1158 = arith.addf %1155, %1157 : vector<1x128xf32>
    %1159 = vector.broadcast %1064 : f32 to vector<1x128xf32>
    %1160 = arith.mulf %1159, %983 : vector<1x128xf32>
    %1161 = arith.subf %1158, %1160 : vector<1x128xf32>
    %1162 = vector.broadcast %1066 : f32 to vector<1x128xf32>
    %1163 = arith.addf %1161, %1162 : vector<1x128xf32>
    %1164 = vector.broadcast %1056 : f32 to vector<1x128xf32>
    %1165 = arith.mulf %1164, %986 : vector<1x128xf32>
    %1166 = vector.broadcast %1054 : f32 to vector<1x128xf32>
    %1167 = arith.mulf %1166, %989 : vector<1x128xf32>
    %1168 = arith.addf %1165, %1167 : vector<1x128xf32>
    %1169 = vector.broadcast %1060 : f32 to vector<1x128xf32>
    %1170 = arith.mulf %1169, %992 : vector<1x128xf32>
    %1171 = arith.addf %1168, %1170 : vector<1x128xf32>
    %1172 = vector.broadcast %1058 : f32 to vector<1x128xf32>
    %1173 = arith.mulf %1172, %995 : vector<1x128xf32>
    %1174 = arith.addf %1171, %1173 : vector<1x128xf32>
    %1175 = vector.broadcast %1064 : f32 to vector<1x128xf32>
    %1176 = arith.mulf %1175, %964 : vector<1x128xf32>
    %1177 = arith.addf %1174, %1176 : vector<1x128xf32>
    %1178 = vector.broadcast %1062 : f32 to vector<1x128xf32>
    %1179 = arith.mulf %1178, %983 : vector<1x128xf32>
    %1180 = arith.addf %1177, %1179 : vector<1x128xf32>
    %1181 = vector.broadcast %1068 : f32 to vector<1x128xf32>
    %1182 = arith.addf %1180, %1181 : vector<1x128xf32>
    %c1_i32_240 = arith.constant 1 : i32
    %1183 = tpu.dynamic_rotate %1087 by %c1_i32_240 dim 1 : vector<1x128xf32>, i32 -> vector<1x128xf32>
    %cst_241 = arith.constant 0.000000e+00 : f32
    %1184 = vector.broadcast %cst_241 : f32 to vector<1x128xf32>
    %1185 = arith.select %7, %1184, %1183 : vector<1x128xi1>, vector<1x128xf32>
    %c1_i32_242 = arith.constant 1 : i32
    %1186 = tpu.dynamic_rotate %1106 by %c1_i32_242 dim 1 : vector<1x128xf32>, i32 -> vector<1x128xf32>
    %cst_243 = arith.constant 0.000000e+00 : f32
    %1187 = vector.broadcast %cst_243 : f32 to vector<1x128xf32>
    %1188 = arith.select %7, %1187, %1186 : vector<1x128xi1>, vector<1x128xf32>
    %c127_i32_244 = arith.constant 127 : i32
    %1189 = tpu.dynamic_rotate %1125 by %c127_i32_244 dim 1 : vector<1x128xf32>, i32 -> vector<1x128xf32>
    %cst_245 = arith.constant 0.000000e+00 : f32
    %1190 = vector.broadcast %cst_245 : f32 to vector<1x128xf32>
    %1191 = arith.select %9, %1190, %1189 : vector<1x128xi1>, vector<1x128xf32>
    %c127_i32_246 = arith.constant 127 : i32
    %1192 = tpu.dynamic_rotate %1144 by %c127_i32_246 dim 1 : vector<1x128xf32>, i32 -> vector<1x128xf32>
    %cst_247 = arith.constant 0.000000e+00 : f32
    %1193 = vector.broadcast %cst_247 : f32 to vector<1x128xf32>
    %1194 = arith.select %9, %1193, %1192 : vector<1x128xi1>, vector<1x128xf32>
    %1195 = arith.index_cast %c5_i32 : i32 to index
    %c0_248 = arith.constant 0 : index
    %c0_249 = arith.constant 0 : index
    %1196 = vector.load %arg2[%1195, %c0_248, %c0_249] : memref<8x8x128xf32, #tpu.memory_space<vmem>>, vector<1x1x128xf32>
    %1197 = vector.shape_cast %1196 : vector<1x1x128xf32> to vector<1x128xf32>
    %1198 = vector.shape_cast %1185 : vector<1x128xf32> to vector<1x1x128xf32>
    tpu.vector_store %arg2[%1195, %c0_248, %c0_249], %1198 {strides = array<i32>} : memref<8x8x128xf32, #tpu.memory_space<vmem>>, vector<1x1x128xf32>,
    %1199 = arith.index_cast %c5_i32 : i32 to index
    %c1_250 = arith.constant 1 : index
    %c0_251 = arith.constant 0 : index
    %1200 = vector.load %arg2[%1199, %c1_250, %c0_251] : memref<8x8x128xf32, #tpu.memory_space<vmem>>, vector<1x1x128xf32>
    %1201 = vector.shape_cast %1200 : vector<1x1x128xf32> to vector<1x128xf32>
    %1202 = vector.shape_cast %1188 : vector<1x128xf32> to vector<1x1x128xf32>
    tpu.vector_store %arg2[%1199, %c1_250, %c0_251], %1202 {strides = array<i32>} : memref<8x8x128xf32, #tpu.memory_space<vmem>>, vector<1x1x128xf32>,
    %1203 = arith.index_cast %c5_i32 : i32 to index
    %c2_252 = arith.constant 2 : index
    %c0_253 = arith.constant 0 : index
    %1204 = vector.load %arg2[%1203, %c2_252, %c0_253] : memref<8x8x128xf32, #tpu.memory_space<vmem>>, vector<1x1x128xf32>
    %1205 = vector.shape_cast %1204 : vector<1x1x128xf32> to vector<1x128xf32>
    %1206 = vector.shape_cast %1191 : vector<1x128xf32> to vector<1x1x128xf32>
    tpu.vector_store %arg2[%1203, %c2_252, %c0_253], %1206 {strides = array<i32>} : memref<8x8x128xf32, #tpu.memory_space<vmem>>, vector<1x1x128xf32>,
    %1207 = arith.index_cast %c5_i32 : i32 to index
    %c3_254 = arith.constant 3 : index
    %c0_255 = arith.constant 0 : index
    %1208 = vector.load %arg2[%1207, %c3_254, %c0_255] : memref<8x8x128xf32, #tpu.memory_space<vmem>>, vector<1x1x128xf32>
    %1209 = vector.shape_cast %1208 : vector<1x1x128xf32> to vector<1x128xf32>
    %1210 = vector.shape_cast %1194 : vector<1x128xf32> to vector<1x1x128xf32>
    tpu.vector_store %arg2[%1207, %c3_254, %c0_255], %1210 {strides = array<i32>} : memref<8x8x128xf32, #tpu.memory_space<vmem>>, vector<1x1x128xf32>,
    %1211 = arith.index_cast %c5_i32 : i32 to index
    %c4_256 = arith.constant 4 : index
    %c0_257 = arith.constant 0 : index
    %1212 = vector.load %arg2[%1211, %c4_256, %c0_257] : memref<8x8x128xf32, #tpu.memory_space<vmem>>, vector<1x1x128xf32>
    %1213 = vector.shape_cast %1212 : vector<1x1x128xf32> to vector<1x128xf32>
    %1214 = vector.shape_cast %1163 : vector<1x128xf32> to vector<1x1x128xf32>
    tpu.vector_store %arg2[%1211, %c4_256, %c0_257], %1214 {strides = array<i32>} : memref<8x8x128xf32, #tpu.memory_space<vmem>>, vector<1x1x128xf32>,
    %1215 = arith.index_cast %c5_i32 : i32 to index
    %c5_258 = arith.constant 5 : index
    %c0_259 = arith.constant 0 : index
    %1216 = vector.load %arg2[%1215, %c5_258, %c0_259] : memref<8x8x128xf32, #tpu.memory_space<vmem>>, vector<1x1x128xf32>
    %1217 = vector.shape_cast %1216 : vector<1x1x128xf32> to vector<1x128xf32>
    %1218 = vector.shape_cast %1182 : vector<1x128xf32> to vector<1x1x128xf32>
    tpu.vector_store %arg2[%1215, %c5_258, %c0_259], %1218 {strides = array<i32>} : memref<8x8x128xf32, #tpu.memory_space<vmem>>, vector<1x1x128xf32>,
    %c6_i32 = arith.constant 6 : i32
    %1219 = arith.addi %0, %c6_i32 : i32
    %c0_260 = arith.constant 0 : index
    %1220 = arith.index_cast %1219 : i32 to index
    %1221 = memref.load %arg1[%c0_260, %1220] : memref<24x8xf32, #tpu.memory_space<smem>>
    %c1_261 = arith.constant 1 : index
    %1222 = arith.index_cast %1219 : i32 to index
    %1223 = memref.load %arg1[%c1_261, %1222] : memref<24x8xf32, #tpu.memory_space<smem>>
    %c2_262 = arith.constant 2 : index
    %1224 = arith.index_cast %1219 : i32 to index
    %1225 = memref.load %arg1[%c2_262, %1224] : memref<24x8xf32, #tpu.memory_space<smem>>
    %c3_263 = arith.constant 3 : index
    %1226 = arith.index_cast %1219 : i32 to index
    %1227 = memref.load %arg1[%c3_263, %1226] : memref<24x8xf32, #tpu.memory_space<smem>>
    %c4_264 = arith.constant 4 : index
    %1228 = arith.index_cast %1219 : i32 to index
    %1229 = memref.load %arg1[%c4_264, %1228] : memref<24x8xf32, #tpu.memory_space<smem>>
    %c5_265 = arith.constant 5 : index
    %1230 = arith.index_cast %1219 : i32 to index
    %1231 = memref.load %arg1[%c5_265, %1230] : memref<24x8xf32, #tpu.memory_space<smem>>
    %c6_266 = arith.constant 6 : index
    %1232 = arith.index_cast %1219 : i32 to index
    %1233 = memref.load %arg1[%c6_266, %1232] : memref<24x8xf32, #tpu.memory_space<smem>>
    %c7_267 = arith.constant 7 : index
    %1234 = arith.index_cast %1219 : i32 to index
    %1235 = memref.load %arg1[%c7_267, %1234] : memref<24x8xf32, #tpu.memory_space<smem>>
    %c8_268 = arith.constant 8 : index
    %1236 = arith.index_cast %1219 : i32 to index
    %1237 = memref.load %arg1[%c8_268, %1236] : memref<24x8xf32, #tpu.memory_space<smem>>
    %c9_269 = arith.constant 9 : index
    %1238 = arith.index_cast %1219 : i32 to index
    %1239 = memref.load %arg1[%c9_269, %1238] : memref<24x8xf32, #tpu.memory_space<smem>>
    %c10_270 = arith.constant 10 : index
    %1240 = arith.index_cast %1219 : i32 to index
    %1241 = memref.load %arg1[%c10_270, %1240] : memref<24x8xf32, #tpu.memory_space<smem>>
    %c11_271 = arith.constant 11 : index
    %1242 = arith.index_cast %1219 : i32 to index
    %1243 = memref.load %arg1[%c11_271, %1242] : memref<24x8xf32, #tpu.memory_space<smem>>
    %c12_272 = arith.constant 12 : index
    %1244 = arith.index_cast %1219 : i32 to index
    %1245 = memref.load %arg1[%c12_272, %1244] : memref<24x8xf32, #tpu.memory_space<smem>>
    %c13_273 = arith.constant 13 : index
    %1246 = arith.index_cast %1219 : i32 to index
    %1247 = memref.load %arg1[%c13_273, %1246] : memref<24x8xf32, #tpu.memory_space<smem>>
    %c14_274 = arith.constant 14 : index
    %1248 = arith.index_cast %1219 : i32 to index
    %1249 = memref.load %arg1[%c14_274, %1248] : memref<24x8xf32, #tpu.memory_space<smem>>
    %c15_275 = arith.constant 15 : index
    %1250 = arith.index_cast %1219 : i32 to index
    %1251 = memref.load %arg1[%c15_275, %1250] : memref<24x8xf32, #tpu.memory_space<smem>>
    %c16_276 = arith.constant 16 : index
    %1252 = arith.index_cast %1219 : i32 to index
    %1253 = memref.load %arg1[%c16_276, %1252] : memref<24x8xf32, #tpu.memory_space<smem>>
    %c17_277 = arith.constant 17 : index
    %1254 = arith.index_cast %1219 : i32 to index
    %1255 = memref.load %arg1[%c17_277, %1254] : memref<24x8xf32, #tpu.memory_space<smem>>
    %c18_278 = arith.constant 18 : index
    %1256 = arith.index_cast %1219 : i32 to index
    %1257 = memref.load %arg1[%c18_278, %1256] : memref<24x8xf32, #tpu.memory_space<smem>>
    %c19_279 = arith.constant 19 : index
    %1258 = arith.index_cast %1219 : i32 to index
    %1259 = memref.load %arg1[%c19_279, %1258] : memref<24x8xf32, #tpu.memory_space<smem>>
    %c20_280 = arith.constant 20 : index
    %1260 = arith.index_cast %1219 : i32 to index
    %1261 = memref.load %arg1[%c20_280, %1260] : memref<24x8xf32, #tpu.memory_space<smem>>
    %c21_281 = arith.constant 21 : index
    %1262 = arith.index_cast %1219 : i32 to index
    %1263 = memref.load %arg1[%c21_281, %1262] : memref<24x8xf32, #tpu.memory_space<smem>>
    %c22_282 = arith.constant 22 : index
    %1264 = arith.index_cast %1219 : i32 to index
    %1265 = memref.load %arg1[%c22_282, %1264] : memref<24x8xf32, #tpu.memory_space<smem>>
    %c23_283 = arith.constant 23 : index
    %1266 = arith.index_cast %1219 : i32 to index
    %1267 = memref.load %arg1[%c23_283, %1266] : memref<24x8xf32, #tpu.memory_space<smem>>
    %1268 = vector.broadcast %1221 : f32 to vector<1x128xf32>
    %1269 = arith.mulf %1268, %1185 : vector<1x128xf32>
    %1270 = vector.broadcast %1223 : f32 to vector<1x128xf32>
    %1271 = arith.mulf %1270, %1188 : vector<1x128xf32>
    %1272 = arith.subf %1269, %1271 : vector<1x128xf32>
    %1273 = vector.broadcast %1225 : f32 to vector<1x128xf32>
    %1274 = arith.mulf %1273, %1191 : vector<1x128xf32>
    %1275 = arith.addf %1272, %1274 : vector<1x128xf32>
    %1276 = vector.broadcast %1227 : f32 to vector<1x128xf32>
    %1277 = arith.mulf %1276, %1194 : vector<1x128xf32>
    %1278 = arith.addf %1275, %1277 : vector<1x128xf32>
    %1279 = vector.broadcast %1229 : f32 to vector<1x128xf32>
    %1280 = arith.mulf %1279, %1163 : vector<1x128xf32>
    %1281 = arith.addf %1278, %1280 : vector<1x128xf32>
    %1282 = vector.broadcast %1231 : f32 to vector<1x128xf32>
    %1283 = arith.mulf %1282, %1182 : vector<1x128xf32>
    %1284 = arith.subf %1281, %1283 : vector<1x128xf32>
    %1285 = vector.broadcast %1233 : f32 to vector<1x128xf32>
    %1286 = arith.addf %1284, %1285 : vector<1x128xf32>
    %1287 = vector.broadcast %1221 : f32 to vector<1x128xf32>
    %1288 = arith.mulf %1287, %1188 : vector<1x128xf32>
    %1289 = vector.broadcast %1223 : f32 to vector<1x128xf32>
    %1290 = arith.mulf %1289, %1185 : vector<1x128xf32>
    %1291 = arith.addf %1288, %1290 : vector<1x128xf32>
    %1292 = vector.broadcast %1227 : f32 to vector<1x128xf32>
    %1293 = arith.mulf %1292, %1191 : vector<1x128xf32>
    %1294 = arith.addf %1291, %1293 : vector<1x128xf32>
    %1295 = vector.broadcast %1225 : f32 to vector<1x128xf32>
    %1296 = arith.mulf %1295, %1194 : vector<1x128xf32>
    %1297 = arith.subf %1294, %1296 : vector<1x128xf32>
    %1298 = vector.broadcast %1229 : f32 to vector<1x128xf32>
    %1299 = arith.mulf %1298, %1182 : vector<1x128xf32>
    %1300 = arith.addf %1297, %1299 : vector<1x128xf32>
    %1301 = vector.broadcast %1231 : f32 to vector<1x128xf32>
    %1302 = arith.mulf %1301, %1163 : vector<1x128xf32>
    %1303 = arith.addf %1300, %1302 : vector<1x128xf32>
    %1304 = vector.broadcast %1235 : f32 to vector<1x128xf32>
    %1305 = arith.addf %1303, %1304 : vector<1x128xf32>
    %1306 = vector.broadcast %1237 : f32 to vector<1x128xf32>
    %1307 = arith.mulf %1306, %1185 : vector<1x128xf32>
    %1308 = vector.broadcast %1239 : f32 to vector<1x128xf32>
    %1309 = arith.mulf %1308, %1188 : vector<1x128xf32>
    %1310 = arith.addf %1307, %1309 : vector<1x128xf32>
    %1311 = vector.broadcast %1241 : f32 to vector<1x128xf32>
    %1312 = arith.mulf %1311, %1191 : vector<1x128xf32>
    %1313 = arith.addf %1310, %1312 : vector<1x128xf32>
    %1314 = vector.broadcast %1243 : f32 to vector<1x128xf32>
    %1315 = arith.mulf %1314, %1194 : vector<1x128xf32>
    %1316 = arith.subf %1313, %1315 : vector<1x128xf32>
    %1317 = vector.broadcast %1245 : f32 to vector<1x128xf32>
    %1318 = arith.mulf %1317, %1163 : vector<1x128xf32>
    %1319 = arith.addf %1316, %1318 : vector<1x128xf32>
    %1320 = vector.broadcast %1247 : f32 to vector<1x128xf32>
    %1321 = arith.mulf %1320, %1182 : vector<1x128xf32>
    %1322 = arith.subf %1319, %1321 : vector<1x128xf32>
    %1323 = vector.broadcast %1249 : f32 to vector<1x128xf32>
    %1324 = arith.addf %1322, %1323 : vector<1x128xf32>
    %1325 = vector.broadcast %1239 : f32 to vector<1x128xf32>
    %1326 = arith.mulf %1325, %1185 : vector<1x128xf32>
    %1327 = vector.broadcast %1237 : f32 to vector<1x128xf32>
    %1328 = arith.mulf %1327, %1188 : vector<1x128xf32>
    %1329 = arith.subf %1326, %1328 : vector<1x128xf32>
    %1330 = vector.broadcast %1241 : f32 to vector<1x128xf32>
    %1331 = arith.mulf %1330, %1194 : vector<1x128xf32>
    %1332 = arith.addf %1329, %1331 : vector<1x128xf32>
    %1333 = vector.broadcast %1243 : f32 to vector<1x128xf32>
    %1334 = arith.mulf %1333, %1191 : vector<1x128xf32>
    %1335 = arith.addf %1332, %1334 : vector<1x128xf32>
    %1336 = vector.broadcast %1245 : f32 to vector<1x128xf32>
    %1337 = arith.mulf %1336, %1182 : vector<1x128xf32>
    %1338 = arith.addf %1335, %1337 : vector<1x128xf32>
    %1339 = vector.broadcast %1247 : f32 to vector<1x128xf32>
    %1340 = arith.mulf %1339, %1163 : vector<1x128xf32>
    %1341 = arith.addf %1338, %1340 : vector<1x128xf32>
    %1342 = vector.broadcast %1251 : f32 to vector<1x128xf32>
    %1343 = arith.addf %1341, %1342 : vector<1x128xf32>
    %1344 = vector.broadcast %1253 : f32 to vector<1x128xf32>
    %1345 = arith.mulf %1344, %1185 : vector<1x128xf32>
    %1346 = vector.broadcast %1255 : f32 to vector<1x128xf32>
    %1347 = arith.mulf %1346, %1188 : vector<1x128xf32>
    %1348 = arith.subf %1345, %1347 : vector<1x128xf32>
    %1349 = vector.broadcast %1257 : f32 to vector<1x128xf32>
    %1350 = arith.mulf %1349, %1191 : vector<1x128xf32>
    %1351 = arith.addf %1348, %1350 : vector<1x128xf32>
    %1352 = vector.broadcast %1259 : f32 to vector<1x128xf32>
    %1353 = arith.mulf %1352, %1194 : vector<1x128xf32>
    %1354 = arith.subf %1351, %1353 : vector<1x128xf32>
    %1355 = vector.broadcast %1261 : f32 to vector<1x128xf32>
    %1356 = arith.mulf %1355, %1163 : vector<1x128xf32>
    %1357 = arith.addf %1354, %1356 : vector<1x128xf32>
    %1358 = vector.broadcast %1263 : f32 to vector<1x128xf32>
    %1359 = arith.mulf %1358, %1182 : vector<1x128xf32>
    %1360 = arith.subf %1357, %1359 : vector<1x128xf32>
    %1361 = vector.broadcast %1265 : f32 to vector<1x128xf32>
    %1362 = arith.addf %1360, %1361 : vector<1x128xf32>
    %1363 = vector.broadcast %1255 : f32 to vector<1x128xf32>
    %1364 = arith.mulf %1363, %1185 : vector<1x128xf32>
    %1365 = vector.broadcast %1253 : f32 to vector<1x128xf32>
    %1366 = arith.mulf %1365, %1188 : vector<1x128xf32>
    %1367 = arith.addf %1364, %1366 : vector<1x128xf32>
    %1368 = vector.broadcast %1259 : f32 to vector<1x128xf32>
    %1369 = arith.mulf %1368, %1191 : vector<1x128xf32>
    %1370 = arith.addf %1367, %1369 : vector<1x128xf32>
    %1371 = vector.broadcast %1257 : f32 to vector<1x128xf32>
    %1372 = arith.mulf %1371, %1194 : vector<1x128xf32>
    %1373 = arith.addf %1370, %1372 : vector<1x128xf32>
    %1374 = vector.broadcast %1263 : f32 to vector<1x128xf32>
    %1375 = arith.mulf %1374, %1163 : vector<1x128xf32>
    %1376 = arith.addf %1373, %1375 : vector<1x128xf32>
    %1377 = vector.broadcast %1261 : f32 to vector<1x128xf32>
    %1378 = arith.mulf %1377, %1182 : vector<1x128xf32>
    %1379 = arith.addf %1376, %1378 : vector<1x128xf32>
    %1380 = vector.broadcast %1267 : f32 to vector<1x128xf32>
    %1381 = arith.addf %1379, %1380 : vector<1x128xf32>
    %c1_i32_284 = arith.constant 1 : i32
    %1382 = tpu.dynamic_rotate %1286 by %c1_i32_284 dim 1 : vector<1x128xf32>, i32 -> vector<1x128xf32>
    %cst_285 = arith.constant 0.000000e+00 : f32
    %1383 = vector.broadcast %cst_285 : f32 to vector<1x128xf32>
    %1384 = arith.select %7, %1383, %1382 : vector<1x128xi1>, vector<1x128xf32>
    %c1_i32_286 = arith.constant 1 : i32
    %1385 = tpu.dynamic_rotate %1305 by %c1_i32_286 dim 1 : vector<1x128xf32>, i32 -> vector<1x128xf32>
    %cst_287 = arith.constant 0.000000e+00 : f32
    %1386 = vector.broadcast %cst_287 : f32 to vector<1x128xf32>
    %1387 = arith.select %7, %1386, %1385 : vector<1x128xi1>, vector<1x128xf32>
    %c127_i32_288 = arith.constant 127 : i32
    %1388 = tpu.dynamic_rotate %1324 by %c127_i32_288 dim 1 : vector<1x128xf32>, i32 -> vector<1x128xf32>
    %cst_289 = arith.constant 0.000000e+00 : f32
    %1389 = vector.broadcast %cst_289 : f32 to vector<1x128xf32>
    %1390 = arith.select %9, %1389, %1388 : vector<1x128xi1>, vector<1x128xf32>
    %c127_i32_290 = arith.constant 127 : i32
    %1391 = tpu.dynamic_rotate %1343 by %c127_i32_290 dim 1 : vector<1x128xf32>, i32 -> vector<1x128xf32>
    %cst_291 = arith.constant 0.000000e+00 : f32
    %1392 = vector.broadcast %cst_291 : f32 to vector<1x128xf32>
    %1393 = arith.select %9, %1392, %1391 : vector<1x128xi1>, vector<1x128xf32>
    %1394 = arith.index_cast %c6_i32 : i32 to index
    %c0_292 = arith.constant 0 : index
    %c0_293 = arith.constant 0 : index
    %1395 = vector.load %arg2[%1394, %c0_292, %c0_293] : memref<8x8x128xf32, #tpu.memory_space<vmem>>, vector<1x1x128xf32>
    %1396 = vector.shape_cast %1395 : vector<1x1x128xf32> to vector<1x128xf32>
    %1397 = vector.shape_cast %1384 : vector<1x128xf32> to vector<1x1x128xf32>
    tpu.vector_store %arg2[%1394, %c0_292, %c0_293], %1397 {strides = array<i32>} : memref<8x8x128xf32, #tpu.memory_space<vmem>>, vector<1x1x128xf32>,
    %1398 = arith.index_cast %c6_i32 : i32 to index
    %c1_294 = arith.constant 1 : index
    %c0_295 = arith.constant 0 : index
    %1399 = vector.load %arg2[%1398, %c1_294, %c0_295] : memref<8x8x128xf32, #tpu.memory_space<vmem>>, vector<1x1x128xf32>
    %1400 = vector.shape_cast %1399 : vector<1x1x128xf32> to vector<1x128xf32>
    %1401 = vector.shape_cast %1387 : vector<1x128xf32> to vector<1x1x128xf32>
    tpu.vector_store %arg2[%1398, %c1_294, %c0_295], %1401 {strides = array<i32>} : memref<8x8x128xf32, #tpu.memory_space<vmem>>, vector<1x1x128xf32>,
    %1402 = arith.index_cast %c6_i32 : i32 to index
    %c2_296 = arith.constant 2 : index
    %c0_297 = arith.constant 0 : index
    %1403 = vector.load %arg2[%1402, %c2_296, %c0_297] : memref<8x8x128xf32, #tpu.memory_space<vmem>>, vector<1x1x128xf32>
    %1404 = vector.shape_cast %1403 : vector<1x1x128xf32> to vector<1x128xf32>
    %1405 = vector.shape_cast %1390 : vector<1x128xf32> to vector<1x1x128xf32>
    tpu.vector_store %arg2[%1402, %c2_296, %c0_297], %1405 {strides = array<i32>} : memref<8x8x128xf32, #tpu.memory_space<vmem>>, vector<1x1x128xf32>,
    %1406 = arith.index_cast %c6_i32 : i32 to index
    %c3_298 = arith.constant 3 : index
    %c0_299 = arith.constant 0 : index
    %1407 = vector.load %arg2[%1406, %c3_298, %c0_299] : memref<8x8x128xf32, #tpu.memory_space<vmem>>, vector<1x1x128xf32>
    %1408 = vector.shape_cast %1407 : vector<1x1x128xf32> to vector<1x128xf32>
    %1409 = vector.shape_cast %1393 : vector<1x128xf32> to vector<1x1x128xf32>
    tpu.vector_store %arg2[%1406, %c3_298, %c0_299], %1409 {strides = array<i32>} : memref<8x8x128xf32, #tpu.memory_space<vmem>>, vector<1x1x128xf32>,
    %1410 = arith.index_cast %c6_i32 : i32 to index
    %c4_300 = arith.constant 4 : index
    %c0_301 = arith.constant 0 : index
    %1411 = vector.load %arg2[%1410, %c4_300, %c0_301] : memref<8x8x128xf32, #tpu.memory_space<vmem>>, vector<1x1x128xf32>
    %1412 = vector.shape_cast %1411 : vector<1x1x128xf32> to vector<1x128xf32>
    %1413 = vector.shape_cast %1362 : vector<1x128xf32> to vector<1x1x128xf32>
    tpu.vector_store %arg2[%1410, %c4_300, %c0_301], %1413 {strides = array<i32>} : memref<8x8x128xf32, #tpu.memory_space<vmem>>, vector<1x1x128xf32>,
    %1414 = arith.index_cast %c6_i32 : i32 to index
    %c5_302 = arith.constant 5 : index
    %c0_303 = arith.constant 0 : index
    %1415 = vector.load %arg2[%1414, %c5_302, %c0_303] : memref<8x8x128xf32, #tpu.memory_space<vmem>>, vector<1x1x128xf32>
    %1416 = vector.shape_cast %1415 : vector<1x1x128xf32> to vector<1x128xf32>
    %1417 = vector.shape_cast %1381 : vector<1x128xf32> to vector<1x1x128xf32>
    tpu.vector_store %arg2[%1414, %c5_302, %c0_303], %1417 {strides = array<i32>} : memref<8x8x128xf32, #tpu.memory_space<vmem>>, vector<1x1x128xf32>,
    %c7_i32 = arith.constant 7 : i32
    %1418 = arith.addi %0, %c7_i32 : i32
    %c0_304 = arith.constant 0 : index
    %1419 = arith.index_cast %1418 : i32 to index
    %1420 = memref.load %arg1[%c0_304, %1419] : memref<24x8xf32, #tpu.memory_space<smem>>
    %c1_305 = arith.constant 1 : index
    %1421 = arith.index_cast %1418 : i32 to index
    %1422 = memref.load %arg1[%c1_305, %1421] : memref<24x8xf32, #tpu.memory_space<smem>>
    %c2_306 = arith.constant 2 : index
    %1423 = arith.index_cast %1418 : i32 to index
    %1424 = memref.load %arg1[%c2_306, %1423] : memref<24x8xf32, #tpu.memory_space<smem>>
    %c3_307 = arith.constant 3 : index
    %1425 = arith.index_cast %1418 : i32 to index
    %1426 = memref.load %arg1[%c3_307, %1425] : memref<24x8xf32, #tpu.memory_space<smem>>
    %c4_308 = arith.constant 4 : index
    %1427 = arith.index_cast %1418 : i32 to index
    %1428 = memref.load %arg1[%c4_308, %1427] : memref<24x8xf32, #tpu.memory_space<smem>>
    %c5_309 = arith.constant 5 : index
    %1429 = arith.index_cast %1418 : i32 to index
    %1430 = memref.load %arg1[%c5_309, %1429] : memref<24x8xf32, #tpu.memory_space<smem>>
    %c6_310 = arith.constant 6 : index
    %1431 = arith.index_cast %1418 : i32 to index
    %1432 = memref.load %arg1[%c6_310, %1431] : memref<24x8xf32, #tpu.memory_space<smem>>
    %c7_311 = arith.constant 7 : index
    %1433 = arith.index_cast %1418 : i32 to index
    %1434 = memref.load %arg1[%c7_311, %1433] : memref<24x8xf32, #tpu.memory_space<smem>>
    %c8_312 = arith.constant 8 : index
    %1435 = arith.index_cast %1418 : i32 to index
    %1436 = memref.load %arg1[%c8_312, %1435] : memref<24x8xf32, #tpu.memory_space<smem>>
    %c9_313 = arith.constant 9 : index
    %1437 = arith.index_cast %1418 : i32 to index
    %1438 = memref.load %arg1[%c9_313, %1437] : memref<24x8xf32, #tpu.memory_space<smem>>
    %c10_314 = arith.constant 10 : index
    %1439 = arith.index_cast %1418 : i32 to index
    %1440 = memref.load %arg1[%c10_314, %1439] : memref<24x8xf32, #tpu.memory_space<smem>>
    %c11_315 = arith.constant 11 : index
    %1441 = arith.index_cast %1418 : i32 to index
    %1442 = memref.load %arg1[%c11_315, %1441] : memref<24x8xf32, #tpu.memory_space<smem>>
    %c12_316 = arith.constant 12 : index
    %1443 = arith.index_cast %1418 : i32 to index
    %1444 = memref.load %arg1[%c12_316, %1443] : memref<24x8xf32, #tpu.memory_space<smem>>
    %c13_317 = arith.constant 13 : index
    %1445 = arith.index_cast %1418 : i32 to index
    %1446 = memref.load %arg1[%c13_317, %1445] : memref<24x8xf32, #tpu.memory_space<smem>>
    %c14_318 = arith.constant 14 : index
    %1447 = arith.index_cast %1418 : i32 to index
    %1448 = memref.load %arg1[%c14_318, %1447] : memref<24x8xf32, #tpu.memory_space<smem>>
    %c15_319 = arith.constant 15 : index
    %1449 = arith.index_cast %1418 : i32 to index
    %1450 = memref.load %arg1[%c15_319, %1449] : memref<24x8xf32, #tpu.memory_space<smem>>
    %c16_320 = arith.constant 16 : index
    %1451 = arith.index_cast %1418 : i32 to index
    %1452 = memref.load %arg1[%c16_320, %1451] : memref<24x8xf32, #tpu.memory_space<smem>>
    %c17_321 = arith.constant 17 : index
    %1453 = arith.index_cast %1418 : i32 to index
    %1454 = memref.load %arg1[%c17_321, %1453] : memref<24x8xf32, #tpu.memory_space<smem>>
    %c18_322 = arith.constant 18 : index
    %1455 = arith.index_cast %1418 : i32 to index
    %1456 = memref.load %arg1[%c18_322, %1455] : memref<24x8xf32, #tpu.memory_space<smem>>
    %c19_323 = arith.constant 19 : index
    %1457 = arith.index_cast %1418 : i32 to index
    %1458 = memref.load %arg1[%c19_323, %1457] : memref<24x8xf32, #tpu.memory_space<smem>>
    %c20_324 = arith.constant 20 : index
    %1459 = arith.index_cast %1418 : i32 to index
    %1460 = memref.load %arg1[%c20_324, %1459] : memref<24x8xf32, #tpu.memory_space<smem>>
    %c21_325 = arith.constant 21 : index
    %1461 = arith.index_cast %1418 : i32 to index
    %1462 = memref.load %arg1[%c21_325, %1461] : memref<24x8xf32, #tpu.memory_space<smem>>
    %c22_326 = arith.constant 22 : index
    %1463 = arith.index_cast %1418 : i32 to index
    %1464 = memref.load %arg1[%c22_326, %1463] : memref<24x8xf32, #tpu.memory_space<smem>>
    %c23_327 = arith.constant 23 : index
    %1465 = arith.index_cast %1418 : i32 to index
    %1466 = memref.load %arg1[%c23_327, %1465] : memref<24x8xf32, #tpu.memory_space<smem>>
    %1467 = vector.broadcast %1420 : f32 to vector<1x128xf32>
    %1468 = arith.mulf %1467, %1384 : vector<1x128xf32>
    %1469 = vector.broadcast %1422 : f32 to vector<1x128xf32>
    %1470 = arith.mulf %1469, %1387 : vector<1x128xf32>
    %1471 = arith.subf %1468, %1470 : vector<1x128xf32>
    %1472 = vector.broadcast %1424 : f32 to vector<1x128xf32>
    %1473 = arith.mulf %1472, %1390 : vector<1x128xf32>
    %1474 = arith.addf %1471, %1473 : vector<1x128xf32>
    %1475 = vector.broadcast %1426 : f32 to vector<1x128xf32>
    %1476 = arith.mulf %1475, %1393 : vector<1x128xf32>
    %1477 = arith.addf %1474, %1476 : vector<1x128xf32>
    %1478 = vector.broadcast %1428 : f32 to vector<1x128xf32>
    %1479 = arith.mulf %1478, %1362 : vector<1x128xf32>
    %1480 = arith.addf %1477, %1479 : vector<1x128xf32>
    %1481 = vector.broadcast %1430 : f32 to vector<1x128xf32>
    %1482 = arith.mulf %1481, %1381 : vector<1x128xf32>
    %1483 = arith.subf %1480, %1482 : vector<1x128xf32>
    %1484 = vector.broadcast %1432 : f32 to vector<1x128xf32>
    %1485 = arith.addf %1483, %1484 : vector<1x128xf32>
    %1486 = vector.broadcast %1420 : f32 to vector<1x128xf32>
    %1487 = arith.mulf %1486, %1387 : vector<1x128xf32>
    %1488 = vector.broadcast %1422 : f32 to vector<1x128xf32>
    %1489 = arith.mulf %1488, %1384 : vector<1x128xf32>
    %1490 = arith.addf %1487, %1489 : vector<1x128xf32>
    %1491 = vector.broadcast %1426 : f32 to vector<1x128xf32>
    %1492 = arith.mulf %1491, %1390 : vector<1x128xf32>
    %1493 = arith.addf %1490, %1492 : vector<1x128xf32>
    %1494 = vector.broadcast %1424 : f32 to vector<1x128xf32>
    %1495 = arith.mulf %1494, %1393 : vector<1x128xf32>
    %1496 = arith.subf %1493, %1495 : vector<1x128xf32>
    %1497 = vector.broadcast %1428 : f32 to vector<1x128xf32>
    %1498 = arith.mulf %1497, %1381 : vector<1x128xf32>
    %1499 = arith.addf %1496, %1498 : vector<1x128xf32>
    %1500 = vector.broadcast %1430 : f32 to vector<1x128xf32>
    %1501 = arith.mulf %1500, %1362 : vector<1x128xf32>
    %1502 = arith.addf %1499, %1501 : vector<1x128xf32>
    %1503 = vector.broadcast %1434 : f32 to vector<1x128xf32>
    %1504 = arith.addf %1502, %1503 : vector<1x128xf32>
    %1505 = vector.broadcast %1436 : f32 to vector<1x128xf32>
    %1506 = arith.mulf %1505, %1384 : vector<1x128xf32>
    %1507 = vector.broadcast %1438 : f32 to vector<1x128xf32>
    %1508 = arith.mulf %1507, %1387 : vector<1x128xf32>
    %1509 = arith.addf %1506, %1508 : vector<1x128xf32>
    %1510 = vector.broadcast %1440 : f32 to vector<1x128xf32>
    %1511 = arith.mulf %1510, %1390 : vector<1x128xf32>
    %1512 = arith.addf %1509, %1511 : vector<1x128xf32>
    %1513 = vector.broadcast %1442 : f32 to vector<1x128xf32>
    %1514 = arith.mulf %1513, %1393 : vector<1x128xf32>
    %1515 = arith.subf %1512, %1514 : vector<1x128xf32>
    %1516 = vector.broadcast %1444 : f32 to vector<1x128xf32>
    %1517 = arith.mulf %1516, %1362 : vector<1x128xf32>
    %1518 = arith.addf %1515, %1517 : vector<1x128xf32>
    %1519 = vector.broadcast %1446 : f32 to vector<1x128xf32>
    %1520 = arith.mulf %1519, %1381 : vector<1x128xf32>
    %1521 = arith.subf %1518, %1520 : vector<1x128xf32>
    %1522 = vector.broadcast %1448 : f32 to vector<1x128xf32>
    %1523 = arith.addf %1521, %1522 : vector<1x128xf32>
    %1524 = vector.broadcast %1438 : f32 to vector<1x128xf32>
    %1525 = arith.mulf %1524, %1384 : vector<1x128xf32>
    %1526 = vector.broadcast %1436 : f32 to vector<1x128xf32>
    %1527 = arith.mulf %1526, %1387 : vector<1x128xf32>
    %1528 = arith.subf %1525, %1527 : vector<1x128xf32>
    %1529 = vector.broadcast %1440 : f32 to vector<1x128xf32>
    %1530 = arith.mulf %1529, %1393 : vector<1x128xf32>
    %1531 = arith.addf %1528, %1530 : vector<1x128xf32>
    %1532 = vector.broadcast %1442 : f32 to vector<1x128xf32>
    %1533 = arith.mulf %1532, %1390 : vector<1x128xf32>
    %1534 = arith.addf %1531, %1533 : vector<1x128xf32>
    %1535 = vector.broadcast %1444 : f32 to vector<1x128xf32>
    %1536 = arith.mulf %1535, %1381 : vector<1x128xf32>
    %1537 = arith.addf %1534, %1536 : vector<1x128xf32>
    %1538 = vector.broadcast %1446 : f32 to vector<1x128xf32>
    %1539 = arith.mulf %1538, %1362 : vector<1x128xf32>
    %1540 = arith.addf %1537, %1539 : vector<1x128xf32>
    %1541 = vector.broadcast %1450 : f32 to vector<1x128xf32>
    %1542 = arith.addf %1540, %1541 : vector<1x128xf32>
    %1543 = vector.broadcast %1452 : f32 to vector<1x128xf32>
    %1544 = arith.mulf %1543, %1384 : vector<1x128xf32>
    %1545 = vector.broadcast %1454 : f32 to vector<1x128xf32>
    %1546 = arith.mulf %1545, %1387 : vector<1x128xf32>
    %1547 = arith.subf %1544, %1546 : vector<1x128xf32>
    %1548 = vector.broadcast %1456 : f32 to vector<1x128xf32>
    %1549 = arith.mulf %1548, %1390 : vector<1x128xf32>
    %1550 = arith.addf %1547, %1549 : vector<1x128xf32>
    %1551 = vector.broadcast %1458 : f32 to vector<1x128xf32>
    %1552 = arith.mulf %1551, %1393 : vector<1x128xf32>
    %1553 = arith.subf %1550, %1552 : vector<1x128xf32>
    %1554 = vector.broadcast %1460 : f32 to vector<1x128xf32>
    %1555 = arith.mulf %1554, %1362 : vector<1x128xf32>
    %1556 = arith.addf %1553, %1555 : vector<1x128xf32>
    %1557 = vector.broadcast %1462 : f32 to vector<1x128xf32>
    %1558 = arith.mulf %1557, %1381 : vector<1x128xf32>
    %1559 = arith.subf %1556, %1558 : vector<1x128xf32>
    %1560 = vector.broadcast %1464 : f32 to vector<1x128xf32>
    %1561 = arith.addf %1559, %1560 : vector<1x128xf32>
    %1562 = vector.broadcast %1454 : f32 to vector<1x128xf32>
    %1563 = arith.mulf %1562, %1384 : vector<1x128xf32>
    %1564 = vector.broadcast %1452 : f32 to vector<1x128xf32>
    %1565 = arith.mulf %1564, %1387 : vector<1x128xf32>
    %1566 = arith.addf %1563, %1565 : vector<1x128xf32>
    %1567 = vector.broadcast %1458 : f32 to vector<1x128xf32>
    %1568 = arith.mulf %1567, %1390 : vector<1x128xf32>
    %1569 = arith.addf %1566, %1568 : vector<1x128xf32>
    %1570 = vector.broadcast %1456 : f32 to vector<1x128xf32>
    %1571 = arith.mulf %1570, %1393 : vector<1x128xf32>
    %1572 = arith.addf %1569, %1571 : vector<1x128xf32>
    %1573 = vector.broadcast %1462 : f32 to vector<1x128xf32>
    %1574 = arith.mulf %1573, %1362 : vector<1x128xf32>
    %1575 = arith.addf %1572, %1574 : vector<1x128xf32>
    %1576 = vector.broadcast %1460 : f32 to vector<1x128xf32>
    %1577 = arith.mulf %1576, %1381 : vector<1x128xf32>
    %1578 = arith.addf %1575, %1577 : vector<1x128xf32>
    %1579 = vector.broadcast %1466 : f32 to vector<1x128xf32>
    %1580 = arith.addf %1578, %1579 : vector<1x128xf32>
    %c1_i32_328 = arith.constant 1 : i32
    %1581 = tpu.dynamic_rotate %1485 by %c1_i32_328 dim 1 : vector<1x128xf32>, i32 -> vector<1x128xf32>
    %cst_329 = arith.constant 0.000000e+00 : f32
    %1582 = vector.broadcast %cst_329 : f32 to vector<1x128xf32>
    %1583 = arith.select %7, %1582, %1581 : vector<1x128xi1>, vector<1x128xf32>
    %c1_i32_330 = arith.constant 1 : i32
    %1584 = tpu.dynamic_rotate %1504 by %c1_i32_330 dim 1 : vector<1x128xf32>, i32 -> vector<1x128xf32>
    %cst_331 = arith.constant 0.000000e+00 : f32
    %1585 = vector.broadcast %cst_331 : f32 to vector<1x128xf32>
    %1586 = arith.select %7, %1585, %1584 : vector<1x128xi1>, vector<1x128xf32>
    %c127_i32_332 = arith.constant 127 : i32
    %1587 = tpu.dynamic_rotate %1523 by %c127_i32_332 dim 1 : vector<1x128xf32>, i32 -> vector<1x128xf32>
    %cst_333 = arith.constant 0.000000e+00 : f32
    %1588 = vector.broadcast %cst_333 : f32 to vector<1x128xf32>
    %1589 = arith.select %9, %1588, %1587 : vector<1x128xi1>, vector<1x128xf32>
    %c127_i32_334 = arith.constant 127 : i32
    %1590 = tpu.dynamic_rotate %1542 by %c127_i32_334 dim 1 : vector<1x128xf32>, i32 -> vector<1x128xf32>
    %cst_335 = arith.constant 0.000000e+00 : f32
    %1591 = vector.broadcast %cst_335 : f32 to vector<1x128xf32>
    %1592 = arith.select %9, %1591, %1590 : vector<1x128xi1>, vector<1x128xf32>
    %1593 = arith.index_cast %c7_i32 : i32 to index
    %c0_336 = arith.constant 0 : index
    %c0_337 = arith.constant 0 : index
    %1594 = vector.load %arg2[%1593, %c0_336, %c0_337] : memref<8x8x128xf32, #tpu.memory_space<vmem>>, vector<1x1x128xf32>
    %1595 = vector.shape_cast %1594 : vector<1x1x128xf32> to vector<1x128xf32>
    %1596 = vector.shape_cast %1583 : vector<1x128xf32> to vector<1x1x128xf32>
    tpu.vector_store %arg2[%1593, %c0_336, %c0_337], %1596 {strides = array<i32>} : memref<8x8x128xf32, #tpu.memory_space<vmem>>, vector<1x1x128xf32>,
    %1597 = arith.index_cast %c7_i32 : i32 to index
    %c1_338 = arith.constant 1 : index
    %c0_339 = arith.constant 0 : index
    %1598 = vector.load %arg2[%1597, %c1_338, %c0_339] : memref<8x8x128xf32, #tpu.memory_space<vmem>>, vector<1x1x128xf32>
    %1599 = vector.shape_cast %1598 : vector<1x1x128xf32> to vector<1x128xf32>
    %1600 = vector.shape_cast %1586 : vector<1x128xf32> to vector<1x1x128xf32>
    tpu.vector_store %arg2[%1597, %c1_338, %c0_339], %1600 {strides = array<i32>} : memref<8x8x128xf32, #tpu.memory_space<vmem>>, vector<1x1x128xf32>,
    %1601 = arith.index_cast %c7_i32 : i32 to index
    %c2_340 = arith.constant 2 : index
    %c0_341 = arith.constant 0 : index
    %1602 = vector.load %arg2[%1601, %c2_340, %c0_341] : memref<8x8x128xf32, #tpu.memory_space<vmem>>, vector<1x1x128xf32>
    %1603 = vector.shape_cast %1602 : vector<1x1x128xf32> to vector<1x128xf32>
    %1604 = vector.shape_cast %1589 : vector<1x128xf32> to vector<1x1x128xf32>
    tpu.vector_store %arg2[%1601, %c2_340, %c0_341], %1604 {strides = array<i32>} : memref<8x8x128xf32, #tpu.memory_space<vmem>>, vector<1x1x128xf32>,
    %1605 = arith.index_cast %c7_i32 : i32 to index
    %c3_342 = arith.constant 3 : index
    %c0_343 = arith.constant 0 : index
    %1606 = vector.load %arg2[%1605, %c3_342, %c0_343] : memref<8x8x128xf32, #tpu.memory_space<vmem>>, vector<1x1x128xf32>
    %1607 = vector.shape_cast %1606 : vector<1x1x128xf32> to vector<1x128xf32>
    %1608 = vector.shape_cast %1592 : vector<1x128xf32> to vector<1x1x128xf32>
    tpu.vector_store %arg2[%1605, %c3_342, %c0_343], %1608 {strides = array<i32>} : memref<8x8x128xf32, #tpu.memory_space<vmem>>, vector<1x1x128xf32>,
    %1609 = arith.index_cast %c7_i32 : i32 to index
    %c4_344 = arith.constant 4 : index
    %c0_345 = arith.constant 0 : index
    %1610 = vector.load %arg2[%1609, %c4_344, %c0_345] : memref<8x8x128xf32, #tpu.memory_space<vmem>>, vector<1x1x128xf32>
    %1611 = vector.shape_cast %1610 : vector<1x1x128xf32> to vector<1x128xf32>
    %1612 = vector.shape_cast %1561 : vector<1x128xf32> to vector<1x1x128xf32>
    tpu.vector_store %arg2[%1609, %c4_344, %c0_345], %1612 {strides = array<i32>} : memref<8x8x128xf32, #tpu.memory_space<vmem>>, vector<1x1x128xf32>,
    %1613 = arith.index_cast %c7_i32 : i32 to index
    %c5_346 = arith.constant 5 : index
    %c0_347 = arith.constant 0 : index
    %1614 = vector.load %arg2[%1613, %c5_346, %c0_347] : memref<8x8x128xf32, #tpu.memory_space<vmem>>, vector<1x1x128xf32>
    %1615 = vector.shape_cast %1614 : vector<1x1x128xf32> to vector<1x128xf32>
    %1616 = vector.shape_cast %1580 : vector<1x128xf32> to vector<1x1x128xf32>
    tpu.vector_store %arg2[%1613, %c5_346, %c0_347], %1616 {strides = array<i32>} : memref<8x8x128xf32, #tpu.memory_space<vmem>>, vector<1x1x128xf32>,
    %c8_i32_348 = arith.constant 8 : i32
    %c0_349 = arith.constant 0 : index
    %c0_350 = arith.constant 0 : index
    %c0_351 = arith.constant 0 : index
    %1617 = vector.load %arg3[%c0_349, %c0_350, %c0_351] : memref<6x1x128xf32, #tpu.memory_space<vmem>>, vector<1x1x128xf32>
    %1618 = vector.shape_cast %1617 : vector<1x1x128xf32> to vector<1x128xf32>
    %1619 = vector.shape_cast %1583 : vector<1x128xf32> to vector<1x1x128xf32>
    tpu.vector_store %arg3[%c0_349, %c0_350, %c0_351], %1619 {strides = array<i32>} : memref<6x1x128xf32, #tpu.memory_space<vmem>>, vector<1x1x128xf32>,
    %c1_352 = arith.constant 1 : index
    %c0_353 = arith.constant 0 : index
    %c0_354 = arith.constant 0 : index
    %1620 = vector.load %arg3[%c1_352, %c0_353, %c0_354] : memref<6x1x128xf32, #tpu.memory_space<vmem>>, vector<1x1x128xf32>
    %1621 = vector.shape_cast %1620 : vector<1x1x128xf32> to vector<1x128xf32>
    %1622 = vector.shape_cast %1586 : vector<1x128xf32> to vector<1x1x128xf32>
    tpu.vector_store %arg3[%c1_352, %c0_353, %c0_354], %1622 {strides = array<i32>} : memref<6x1x128xf32, #tpu.memory_space<vmem>>, vector<1x1x128xf32>,
    %c2_355 = arith.constant 2 : index
    %c0_356 = arith.constant 0 : index
    %c0_357 = arith.constant 0 : index
    %1623 = vector.load %arg3[%c2_355, %c0_356, %c0_357] : memref<6x1x128xf32, #tpu.memory_space<vmem>>, vector<1x1x128xf32>
    %1624 = vector.shape_cast %1623 : vector<1x1x128xf32> to vector<1x128xf32>
    %1625 = vector.shape_cast %1589 : vector<1x128xf32> to vector<1x1x128xf32>
    tpu.vector_store %arg3[%c2_355, %c0_356, %c0_357], %1625 {strides = array<i32>} : memref<6x1x128xf32, #tpu.memory_space<vmem>>, vector<1x1x128xf32>,
    %c3_358 = arith.constant 3 : index
    %c0_359 = arith.constant 0 : index
    %c0_360 = arith.constant 0 : index
    %1626 = vector.load %arg3[%c3_358, %c0_359, %c0_360] : memref<6x1x128xf32, #tpu.memory_space<vmem>>, vector<1x1x128xf32>
    %1627 = vector.shape_cast %1626 : vector<1x1x128xf32> to vector<1x128xf32>
    %1628 = vector.shape_cast %1592 : vector<1x128xf32> to vector<1x1x128xf32>
    tpu.vector_store %arg3[%c3_358, %c0_359, %c0_360], %1628 {strides = array<i32>} : memref<6x1x128xf32, #tpu.memory_space<vmem>>, vector<1x1x128xf32>,
    %c4_361 = arith.constant 4 : index
    %c0_362 = arith.constant 0 : index
    %c0_363 = arith.constant 0 : index
    %1629 = vector.load %arg3[%c4_361, %c0_362, %c0_363] : memref<6x1x128xf32, #tpu.memory_space<vmem>>, vector<1x1x128xf32>
    %1630 = vector.shape_cast %1629 : vector<1x1x128xf32> to vector<1x128xf32>
    %1631 = vector.shape_cast %1561 : vector<1x128xf32> to vector<1x1x128xf32>
    tpu.vector_store %arg3[%c4_361, %c0_362, %c0_363], %1631 {strides = array<i32>} : memref<6x1x128xf32, #tpu.memory_space<vmem>>, vector<1x1x128xf32>,
    %c5_364 = arith.constant 5 : index
    %c0_365 = arith.constant 0 : index
    %c0_366 = arith.constant 0 : index
    %1632 = vector.load %arg3[%c5_364, %c0_365, %c0_366] : memref<6x1x128xf32, #tpu.memory_space<vmem>>, vector<1x1x128xf32>
    %1633 = vector.shape_cast %1632 : vector<1x1x128xf32> to vector<1x128xf32>
    %1634 = vector.shape_cast %1580 : vector<1x128xf32> to vector<1x1x128xf32>
    tpu.vector_store %arg3[%c5_364, %c0_365, %c0_366], %1634 {strides = array<i32>} : memref<6x1x128xf32, #tpu.memory_space<vmem>>, vector<1x1x128xf32>,
    return
  }
  func.func @transform_0(%arg0: i32, %arg1: memref<24x8xf32, #tpu.memory_space<smem>>) -> (i32, i32, i32) {
    %c0_i32 = arith.constant 0 : i32
    %c0_i32_0 = arith.constant 0 : i32
    %c0_i32_1 = arith.constant 0 : i32
    return %arg0, %c0_i32, %c0_i32_0 : i32, i32, i32
  }
}

</mosaic_0001>

<llo_original>
// kernel: tpu_custom_call.1
$region0: #{tpu_custom_call.1}
  #allocation0 [shape = 'u32[]', space=smem, size = 0x4, offset = 0x4, fixed_abs, tag = 'smem constant byte address 0x4 - core index']
  #allocation1 [shape = 'u32[144,128]{1,0:T(1,128)}', space=vmem, size = 0x12000, scoped, tag = 'internal scratch']
  #allocation2 [shape = 'f32[6,1,128]{2,1,0:T(1,128)}', space=vmem, size = 0xc00, scoped, tag = 'scratch operand']
  #allocation3 [shape = 's32[1]{0}', space=sflag, size = 0x4, scoped, tag = 'scoped memory for tpu_custom_call.1']
  #allocation4 [shape = 'u8[12288]{0}', space=smem, size = 0x3000, scoped, tag = 'prefetched SMEM operand 0']
  %s0 = inlined_call_operand.vmem [shape: f32[24,8], index: 0, kind: input, shape index: {}]
  %s1 = inlined_call_operand.hbm [shape: f32[8,8,128], index: 1, kind: output, shape index: {}]
  %s2 = sld [smem:[#allocation0]]
  $region14: #{tpu_custom_call.1} parent=0
    _
  %s4 = ssub.s32 1, %s2
  %s5 = scalar_select 0, %s4, %s2
  %s6 = sshll.u32 %s0, 4
  %s7 = int_to_ptr.vmem [resolvable:$true] %s6
  %9 = dma.vmem_to_smem %s7, 384, [#allocation4], [#allocation3]
  %10 = dma.done [#allocation3], 384
  %11 = sfence
  $region1: #{tpu_custom_call.1} parent=0
    #allocation5 [shape = 'u8[32768]{0}', space=vmem, size = 0x8000, scoped, tag = 'output window, operand 0, single buffered']
    #allocation6 [shape = 's32[1]{0}', space=sflag, size = 0x4, scoped, tag = 'scoped memory for tpu_custom_call.1']
    %12 = vsyncpa [#allocation6], 0
    %s13 = smul.u32 0, 8
    %v14 = vlaneseq
    %v15 = vand.u32 %v14, 127
    %vm16 = vcmp.eq.s32.totalorder %v15, 0
    %vm17 = vcmp.ge.s32.totalorder %v15, 21
    %vm18 = vmor %vm16, %vm17
    %vm19 = vcmp.ge.s32.totalorder %v15, 20
    %p20 = scmp.eq.s32.totalorder 0, 0
    // Predicated region
    $region2: #{tpu_custom_call.1} parent=1 // pred_check
      %p21 = pneg %p20
    $region3: #{tpu_custom_call.1} parent=1 // pred_check_branch
      %23 = sbr.rel (%p21) target = $region5
    $region4: #{tpu_custom_call.1} parent=1 // pred_region
      %24 = vst [vmem:[#allocation2] sm:$0x1] 0.0
      %s25 = scalar_lea.vmem [#allocation2], 1
      %26 = vst [vmem:[%s25] sm:$0x1] 0.0
      %s27 = scalar_lea.vmem [#allocation2], 2
      %28 = vst [vmem:[%s27] sm:$0x1] 0.0
      %s29 = scalar_lea.vmem [#allocation2], 3
      %30 = vst [vmem:[%s29] sm:$0x1] 0.0
      %s31 = scalar_lea.vmem [#allocation2], 4
      %32 = vst [vmem:[%s31] sm:$0x1] 0.0
      %s33 = scalar_lea.vmem [#allocation2], 5
      %34 = vst [vmem:[%s33] sm:$0x1] 0.0
      %v35 = vsel %vm16, 1.0, 0.0
      %36 = vst [vmem:[%s31] sm:$0x1] %v35
    $region5: #{tpu_custom_call.1} parent=1 // pred_fallthru
      _
    %v37 = vld [vmem:[#allocation2] sm:$0x1]
    %s38 = scalar_lea.vmem [#allocation2], 1
    %v39 = vld [vmem:[%s38] sm:$0x1]
    %s40 = scalar_lea.vmem [#allocation2], 2
    %v41 = vld [vmem:[%s40] sm:$0x1]
    %s42 = scalar_lea.vmem [#allocation2], 3
    %v43 = vld [vmem:[%s42] sm:$0x1]
    %s44 = scalar_lea.vmem [#allocation2], 4
    %v45 = vld [vmem:[%s44] sm:$0x1]
    %s46 = scalar_lea.vmem [#allocation2], 5
    %v47 = vld [vmem:[%s46] sm:$0x1]
    %s48 = sld [smem:[#allocation4 + %s13]]
    %s49 = sshra.s32 %s13, 7
    %s50 = sand.u32 %s13, 127
    %s51 = sadd.s32 %s49, 1
    %s52 = smul.u32 %s51, 128
    %s53 = sshra.s32 %s13, 7
    %s54 = sand.u32 %s13, 127
    %s55 = sadd.s32 %s52, %s54
    %s56 = sld [smem:[#allocation4 + %s55]]
    %s57 = sadd.s32 %s49, 2
    %s58 = smul.u32 %s57, 128
    %s59 = sadd.s32 %s58, %s54
    %s60 = sld [smem:[#allocation4 + %s59]]
    %s61 = sadd.s32 %s49, 3
    %s62 = smul.u32 %s61, 128
    %s63 = sadd.s32 %s62, %s54
    %s64 = sld [smem:[#allocation4 + %s63]]
    %s65 = sadd.s32 %s49, 4
    %s66 = smul.u32 %s65, 128
    %s67 = sadd.s32 %s66, %s54
    %s68 = sld [smem:[#allocation4 + %s67]]
    %s69 = sadd.s32 %s49, 5
    %s70 = smul.u32 %s69, 128
    %s71 = sadd.s32 %s70, %s54
    %s72 = sld [smem:[#allocation4 + %s71]]
    %s73 = sadd.s32 %s49, 6
    %s74 = smul.u32 %s73, 128
    %s75 = sadd.s32 %s74, %s54
    %s76 = sld [smem:[#allocation4 + %s75]]
    %s77 = sadd.s32 %s49, 7
    %s78 = smul.u32 %s77, 128
    %s79 = sadd.s32 %s78, %s54
    %s80 = sld [smem:[#allocation4 + %s79]]
    %s81 = sadd.s32 %s49, 8
    %s82 = smul.u32 %s81, 128
    %s83 = sadd.s32 %s82, %s54
    %s84 = sld [smem:[#allocation4 + %s83]]
    %s85 = sadd.s32 %s49, 9
    %s86 = smul.u32 %s85, 128
    %s87 = sadd.s32 %s86, %s54
    %s88 = sld [smem:[#allocation4 + %s87]]
    %s89 = sadd.s32 %s49, 10
    %s90 = smul.u32 %s89, 128
    %s91 = sadd.s32 %s90, %s54
    %s92 = sld [smem:[#allocation4 + %s91]]
    %s93 = sadd.s32 %s49, 11
    %s94 = smul.u32 %s93, 128
    %s95 = sadd.s32 %s94, %s54
    %s96 = sld [smem:[#allocation4 + %s95]]
    %s97 = sadd.s32 %s49, 12
    %s98 = smul.u32 %s97, 128
    %s99 = sadd.s32 %s98, %s54
    %s100 = sld [smem:[#allocation4 + %s99]]
    %s101 = sadd.s32 %s49, 13
    %s102 = smul.u32 %s101, 128
    %s103 = sadd.s32 %s102, %s54
    %s104 = sld [smem:[#allocation4 + %s103]]
    %s105 = sadd.s32 %s49, 14
    %s106 = smul.u32 %s105, 128
    %s107 = sadd.s32 %s106, %s54
    %s108 = sld [smem:[#allocation4 + %s107]]
    %s109 = sadd.s32 %s49, 15
    %s110 = smul.u32 %s109, 128
    %s111 = sadd.s32 %s110, %s54
    %s112 = sld [smem:[#allocation4 + %s111]]
    %s113 = sadd.s32 %s49, 16
    %s114 = smul.u32 %s113, 128
    %s115 = sadd.s32 %s114, %s54
    %s116 = sld [smem:[#allocation4 + %s115]]
    %s117 = sadd.s32 %s49, 17
    %s118 = smul.u32 %s117, 128
    %s119 = sadd.s32 %s118, %s54
    %s120 = sld [smem:[#allocation4 + %s119]]
    %s121 = sadd.s32 %s49, 18
    %s122 = smul.u32 %s121, 128
    %s123 = sadd.s32 %s122, %s54
    %s124 = sld [smem:[#allocation4 + %s123]]
    %s125 = sadd.s32 %s49, 19
    %s126 = smul.u32 %s125, 128
    %s127 = sadd.s32 %s126, %s54
    %s128 = sld [smem:[#allocation4 + %s127]]
    %s129 = sadd.s32 %s49, 20
    %s130 = smul.u32 %s129, 128
    %s131 = sadd.s32 %s130, %s54
    %s132 = sld [smem:[#allocation4 + %s131]]
    %s133 = sadd.s32 %s49, 21
    %s134 = smul.u32 %s133, 128
    %s135 = sadd.s32 %s134, %s54
    %s136 = sld [smem:[#allocation4 + %s135]]
    %s137 = sadd.s32 %s49, 22
    %s138 = smul.u32 %s137, 128
    %s139 = sadd.s32 %s138, %s54
    %s140 = sld [smem:[#allocation4 + %s139]]
    %s141 = sadd.s32 %s49, 23
    %s142 = smul.u32 %s141, 128
    %s143 = sadd.s32 %s142, %s54
    %s144 = sld [smem:[#allocation4 + %s143]]
    %v145 = vstv %s48
    %v146 = vmul.f32 %v145, %v37
    %v147 = vstv %s56
    %v148 = vmul.f32 %v147, %v39
    %v149 = vsub.f32 %v146, %v148
    %v150 = vstv %s60
    %v151 = vmul.f32 %v150, %v41
    %v152 = vadd.f32 %v149, %v151
    %v153 = vstv %s64
    %v154 = vmul.f32 %v153, %v43
    %v155 = vadd.f32 %v152, %v154
    %v156 = vstv %s68
    %v157 = vmul.f32 %v156, %v45
    %v158 = vadd.f32 %v155, %v157
    %v159 = vstv %s72
    %v160 = vmul.f32 %v159, %v47
    %v161 = vsub.f32 %v158, %v160
    %v162 = vstv %s76
    %v163 = vadd.f32 %v161, %v162
    %v164 = vmul.f32 %v145, %v39
    %v165 = vmul.f32 %v147, %v37
    %v166 = vadd.f32 %v164, %v165
    %v167 = vmul.f32 %v153, %v41
    %v168 = vadd.f32 %v166, %v167
    %v169 = vmul.f32 %v150, %v43
    %v170 = vsub.f32 %v168, %v169
    %v171 = vmul.f32 %v156, %v47
    %v172 = vadd.f32 %v170, %v171
    %v173 = vmul.f32 %v159, %v45
    %v174 = vadd.f32 %v172, %v173
    %v175 = vstv %s80
    %v176 = vadd.f32 %v174, %v175
    %v177 = vstv %s84
    %v178 = vmul.f32 %v177, %v37
    %v179 = vstv %s88
    %v180 = vmul.f32 %v179, %v39
    %v181 = vadd.f32 %v178, %v180
    %v182 = vstv %s92
    %v183 = vmul.f32 %v182, %v41
    %v184 = vadd.f32 %v181, %v183
    %v185 = vstv %s96
    %v186 = vmul.f32 %v185, %v43
    %v187 = vsub.f32 %v184, %v186
    %v188 = vstv %s100
    %v189 = vmul.f32 %v188, %v45
    %v190 = vadd.f32 %v187, %v189
    %v191 = vstv %s104
    %v192 = vmul.f32 %v191, %v47
    %v193 = vsub.f32 %v190, %v192
    %v194 = vstv %s108
    %v195 = vadd.f32 %v193, %v194
    %v196 = vmul.f32 %v179, %v37
    %v197 = vmul.f32 %v177, %v39
    %v198 = vsub.f32 %v196, %v197
    %v199 = vmul.f32 %v182, %v43
    %v200 = vadd.f32 %v198, %v199
    %v201 = vmul.f32 %v185, %v41
    %v202 = vadd.f32 %v200, %v201
    %v203 = vmul.f32 %v188, %v47
    %v204 = vadd.f32 %v202, %v203
    %v205 = vmul.f32 %v191, %v45
    %v206 = vadd.f32 %v204, %v205
    %v207 = vstv %s112
    %v208 = vadd.f32 %v206, %v207
    %v209 = vstv %s116
    %v210 = vmul.f32 %v209, %v37
    %v211 = vstv %s120
    %v212 = vmul.f32 %v211, %v39
    %v213 = vsub.f32 %v210, %v212
    %v214 = vstv %s124
    %v215 = vmul.f32 %v214, %v41
    %v216 = vadd.f32 %v213, %v215
    %v217 = vstv %s128
    %v218 = vmul.f32 %v217, %v43
    %v219 = vsub.f32 %v216, %v218
    %v220 = vstv %s132
    %v221 = vmul.f32 %v220, %v45
    %v222 = vadd.f32 %v219, %v221
    %v223 = vstv %s136
    %v224 = vmul.f32 %v223, %v47
    %v225 = vsub.f32 %v222, %v224
    %v226 = vstv %s140
    %v227 = vadd.f32 %v225, %v226
    %v228 = vmul.f32 %v211, %v37
    %v229 = vmul.f32 %v209, %v39
    %v230 = vadd.f32 %v228, %v229
    %v231 = vmul.f32 %v217, %v41
    %v232 = vadd.f32 %v230, %v231
    %v233 = vmul.f32 %v214, %v43
    %v234 = vadd.f32 %v232, %v233
    %v235 = vmul.f32 %v223, %v45
    %v236 = vadd.f32 %v234, %v235
    %v237 = vmul.f32 %v220, %v47
    %v238 = vadd.f32 %v236, %v237
    %v239 = vstv %s144
    %v240 = vadd.f32 %v238, %v239
    %241 = vrot.lane.b32.xlu0 %v163, 1
    %v242 = vpop.permute.xlu0 %241
    %v243 = vsel %vm18, 0.0, %v242
    %244 = vrot.lane.b32.xlu0 %v176, 1
    %v245 = vpop.permute.xlu0 %244
    %v246 = vsel %vm18, 0.0, %v245
    %247 = vrot.lane.b32.xlu0 %v195, 127
    %v248 = vpop.permute.xlu0 %247
    %v249 = vsel %vm19, 0.0, %v248
    %250 = vrot.lane.b32.xlu0 %v208, 127
    %v251 = vpop.permute.xlu0 %250
    %v252 = vsel %vm19, 0.0, %v251
    %253 = vst [vmem:[#allocation5] sm:$0x1] %v243
    %254 = vst [vmem:[#allocation5 + $0x1] sm:$0x1] %v246
    %255 = vst [vmem:[#allocation5 + $0x2] sm:$0x1] %v249
    %256 = vst [vmem:[#allocation5 + $0x3] sm:$0x1] %v252
    %257 = vst [vmem:[#allocation5 + $0x4] sm:$0x1] %v227
    %258 = vst [vmem:[#allocation5 + $0x5] sm:$0x1] %v240
    %s259 = sadd.s32 %s13, 1
    %s260 = sld [smem:[#allocation4 + %s259]]
    %s261 = sshra.s32 %s259, 7
    %s262 = sand.u32 %s259, 127
    %s263 = sadd.s32 %s261, 1
    %s264 = smul.u32 %s263, 128
    %s265 = sshra.s32 %s259, 7
    %s266 = sand.u32 %s259, 127
    %s267 = sadd.s32 %s264, %s266
    %s268 = sld [smem:[#allocation4 + %s267]]
    %s269 = sadd.s32 %s261, 2
    %s270 = smul.u32 %s269, 128
    %s271 = sadd.s32 %s270, %s266
    %s272 = sld [smem:[#allocation4 + %s271]]
    %s273 = sadd.s32 %s261, 3
    %s274 = smul.u32 %s273, 128
    %s275 = sadd.s32 %s274, %s266
    %s276 = sld [smem:[#allocation4 + %s275]]
    %s277 = sadd.s32 %s261, 4
    %s278 = smul.u32 %s277, 128
    %s279 = sadd.s32 %s278, %s266
    %s280 = sld [smem:[#allocation4 + %s279]]
    %s281 = sadd.s32 %s261, 5
    %s282 = smul.u32 %s281, 128
    %s283 = sadd.s32 %s282, %s266
    %s284 = sld [smem:[#allocation4 + %s283]]
    %s285 = sadd.s32 %s261, 6
    %s286 = smul.u32 %s285, 128
    %s287 = sadd.s32 %s286, %s266
    %s288 = sld [smem:[#allocation4 + %s287]]
    %s289 = sadd.s32 %s261, 7
    %s290 = smul.u32 %s289, 128
    %s291 = sadd.s32 %s290, %s266
    %s292 = sld [smem:[#allocation4 + %s291]]
    %s293 = sadd.s32 %s261, 8
    %s294 = smul.u32 %s293, 128
    %s295 = sadd.s32 %s294, %s266
    %s296 = sld [smem:[#allocation4 + %s295]]
    %s297 = sadd.s32 %s261, 9
    %s298 = smul.u32 %s297, 128
    %s299 = sadd.s32 %s298, %s266
    %s300 = sld [smem:[#allocation4 + %s299]]
    %s301 = sadd.s32 %s261, 10
    %s302 = smul.u32 %s301, 128
    %s303 = sadd.s32 %s302, %s266
    %s304 = sld [smem:[#allocation4 + %s303]]
    %s305 = sadd.s32 %s261, 11
    %s306 = smul.u32 %s305, 128
    %s307 = sadd.s32 %s306, %s266
    %s308 = sld [smem:[#allocation4 + %s307]]
    %s309 = sadd.s32 %s261, 12
    %s310 = smul.u32 %s309, 128
    %s311 = sadd.s32 %s310, %s266
    %s312 = sld [smem:[#allocation4 + %s311]]
    %s313 = sadd.s32 %s261, 13
    %s314 = smul.u32 %s313, 128
    %s315 = sadd.s32 %s314, %s266
    %s316 = sld [smem:[#allocation4 + %s315]]
    %s317 = sadd.s32 %s261, 14
    %s318 = smul.u32 %s317, 128
    %s319 = sadd.s32 %s318, %s266
    %s320 = sld [smem:[#allocation4 + %s319]]
    %s321 = sadd.s32 %s261, 15
    %s322 = smul.u32 %s321, 128
    %s323 = sadd.s32 %s322, %s266
    %s324 = sld [smem:[#allocation4 + %s323]]
    %s325 = sadd.s32 %s261, 16
    %s326 = smul.u32 %s325, 128
    %s327 = sadd.s32 %s326, %s266
    %s328 = sld [smem:[#allocation4 + %s327]]
    %s329 = sadd.s32 %s261, 17
    %s330 = smul.u32 %s329, 128
    %s331 = sadd.s32 %s330, %s266
    %s332 = sld [smem:[#allocation4 + %s331]]
    %s333 = sadd.s32 %s261, 18
    %s334 = smul.u32 %s333, 128
    %s335 = sadd.s32 %s334, %s266
    %s336 = sld [smem:[#allocation4 + %s335]]
    %s337 = sadd.s32 %s261, 19
    %s338 = smul.u32 %s337, 128
    %s339 = sadd.s32 %s338, %s266
    %s340 = sld [smem:[#allocation4 + %s339]]
    %s341 = sadd.s32 %s261, 20
    %s342 = smul.u32 %s341, 128
    %s343 = sadd.s32 %s342, %s266
    %s344 = sld [smem:[#allocation4 + %s343]]
    %s345 = sadd.s32 %s261, 21
    %s346 = smul.u32 %s345, 128
    %s347 = sadd.s32 %s346, %s266
    %s348 = sld [smem:[#allocation4 + %s347]]
    %s349 = sadd.s32 %s261, 22
    %s350 = smul.u32 %s349, 128
    %s351 = sadd.s32 %s350, %s266
    %s352 = sld [smem:[#allocation4 + %s351]]
    %s353 = sadd.s32 %s261, 23
    %s354 = smul.u32 %s353, 128
    %s355 = sadd.s32 %s354, %s266
    %s356 = sld [smem:[#allocation4 + %s355]]
    %v357 = vstv %s260
    %v358 = vmul.f32 %v357, %v243
    %v359 = vstv %s268
    %v360 = vmul.f32 %v359, %v246
    %v361 = vsub.f32 %v358, %v360
    %v362 = vstv %s272
    %v363 = vmul.f32 %v362, %v249
    %v364 = vadd.f32 %v361, %v363
    %v365 = vstv %s276
    %v366 = vmul.f32 %v365, %v252
    %v367 = vadd.f32 %v364, %v366
    %v368 = vstv %s280
    %v369 = vmul.f32 %v368, %v227
    %v370 = vadd.f32 %v367, %v369
    %v371 = vstv %s284
    %v372 = vmul.f32 %v371, %v240
    %v373 = vsub.f32 %v370, %v372
    %v374 = vstv %s288
    %v375 = vadd.f32 %v373, %v374
    %v376 = vmul.f32 %v357, %v246
    %v377 = vmul.f32 %v359, %v243
    %v378 = vadd.f32 %v376, %v377
    %v379 = vmul.f32 %v365, %v249
    %v380 = vadd.f32 %v378, %v379
    %v381 = vmul.f32 %v362, %v252
    %v382 = vsub.f32 %v380, %v381
    %v383 = vmul.f32 %v368, %v240
    %v384 = vadd.f32 %v382, %v383
    %v385 = vmul.f32 %v371, %v227
    %v386 = vadd.f32 %v384, %v385
    %v387 = vstv %s292
    %v388 = vadd.f32 %v386, %v387
    %v389 = vstv %s296
    %v390 = vmul.f32 %v389, %v243
    %v391 = vstv %s300
    %v392 = vmul.f32 %v391, %v246
    %v393 = vadd.f32 %v390, %v392
    %v394 = vstv %s304
    %v395 = vmul.f32 %v394, %v249
    %v396 = vadd.f32 %v393, %v395
    %v397 = vstv %s308
    %v398 = vmul.f32 %v397, %v252
    %v399 = vsub.f32 %v396, %v398
    %v400 = vstv %s312
    %v401 = vmul.f32 %v400, %v227
    %v402 = vadd.f32 %v399, %v401
    %v403 = vstv %s316
    %v404 = vmul.f32 %v403, %v240
    %v405 = vsub.f32 %v402, %v404
    %v406 = vstv %s320
    %v407 = vadd.f32 %v405, %v406
    %v408 = vmul.f32 %v391, %v243
    %v409 = vmul.f32 %v389, %v246
    %v410 = vsub.f32 %v408, %v409
    %v411 = vmul.f32 %v394, %v252
    %v412 = vadd.f32 %v410, %v411
    %v413 = vmul.f32 %v397, %v249
    %v414 = vadd.f32 %v412, %v413
    %v415 = vmul.f32 %v400, %v240
    %v416 = vadd.f32 %v414, %v415
    %v417 = vmul.f32 %v403, %v227
    %v418 = vadd.f32 %v416, %v417
    %v419 = vstv %s324
    %v420 = vadd.f32 %v418, %v419
    %v421 = vstv %s328
    %v422 = vmul.f32 %v421, %v243
    %v423 = vstv %s332
    %v424 = vmul.f32 %v423, %v246
    %v425 = vsub.f32 %v422, %v424
    %v426 = vstv %s336
    %v427 = vmul.f32 %v426, %v249
    %v428 = vadd.f32 %v425, %v427
    %v429 = vstv %s340
    %v430 = vmul.f32 %v429, %v252
    %v431 = vsub.f32 %v428, %v430
    %v432 = vstv %s344
    %v433 = vmul.f32 %v432, %v227
    %v434 = vadd.f32 %v431, %v433
    %v435 = vstv %s348
    %v436 = vmul.f32 %v435, %v240
    %v437 = vsub.f32 %v434, %v436
    %v438 = vstv %s352
    %v439 = vadd.f32 %v437, %v438
    %v440 = vmul.f32 %v423, %v243
    %v441 = vmul.f32 %v421, %v246
    %v442 = vadd.f32 %v440, %v441
    %v443 = vmul.f32 %v429, %v249
    %v444 = vadd.f32 %v442, %v443
    %v445 = vmul.f32 %v426, %v252
    %v446 = vadd.f32 %v444, %v445
    %v447 = vmul.f32 %v435, %v227
    %v448 = vadd.f32 %v446, %v447
    %v449 = vmul.f32 %v432, %v240
    %v450 = vadd.f32 %v448, %v449
    %v451 = vstv %s356
    %v452 = vadd.f32 %v450, %v451
    %453 = vrot.lane.b32.xlu0 %v375, 1
    %v454 = vpop.permute.xlu0 %453
    %v455 = vsel %vm18, 0.0, %v454
    %456 = vrot.lane.b32.xlu0 %v388, 1
    %v457 = vpop.permute.xlu0 %456
    %v458 = vsel %vm18, 0.0, %v457
    %459 = vrot.lane.b32.xlu0 %v407, 127
    %v460 = vpop.permute.xlu0 %459
    %v461 = vsel %vm19, 0.0, %v460
    %462 = vrot.lane.b32.xlu0 %v420, 127
    %v463 = vpop.permute.xlu0 %462
    %v464 = vsel %vm19, 0.0, %v463
    %s465 = scalar_lea.vmem [#allocation5], 8
    %466 = vst [vmem:[%s465] sm:$0x1] %v455
    %467 = vst [vmem:[%s465 + $0x1] sm:$0x1] %v458
    %468 = vst [vmem:[%s465 + $0x2] sm:$0x1] %v461
    %469 = vst [vmem:[%s465 + $0x3] sm:$0x1] %v464
    %470 = vst [vmem:[%s465 + $0x4] sm:$0x1] %v439
    %471 = vst [vmem:[%s465 + $0x5] sm:$0x1] %v452
    %s472 = sadd.s32 %s13, 2
    %s473 = sld [smem:[#allocation4 + %s472]]
    %s474 = sshra.s32 %s472, 7
    %s475 = sand.u32 %s472, 127
    %s476 = sadd.s32 %s474, 1
    %s477 = smul.u32 %s476, 128
    %s478 = sshra.s32 %s472, 7
    %s479 = sand.u32 %s472, 127
    %s480 = sadd.s32 %s477, %s479
    %s481 = sld [smem:[#allocation4 + %s480]]
    %s482 = sadd.s32 %s474, 2
    %s483 = smul.u32 %s482, 128
    %s484 = sadd.s32 %s483, %s479
    %s485 = sld [smem:[#allocation4 + %s484]]
    %s486 = sadd.s32 %s474, 3
    %s487 = smul.u32 %s486, 128
    %s488 = sadd.s32 %s487, %s479
    %s489 = sld [smem:[#allocation4 + %s488]]
    %s490 = sadd.s32 %s474, 4
    %s491 = smul.u32 %s490, 128
    %s492 = sadd.s32 %s491, %s479
    %s493 = sld [smem:[#allocation4 + %s492]]
    %s494 = sadd.s32 %s474, 5
    %s495 = smul.u32 %s494, 128
    %s496 = sadd.s32 %s495, %s479
    %s497 = sld [smem:[#allocation4 + %s496]]
    %s498 = sadd.s32 %s474, 6
    %s499 = smul.u32 %s498, 128
    %s500 = sadd.s32 %s499, %s479
    %s501 = sld [smem:[#allocation4 + %s500]]
    %s502 = sadd.s32 %s474, 7
    %s503 = smul.u32 %s502, 128
    %s504 = sadd.s32 %s503, %s479
    %s505 = sld [smem:[#allocation4 + %s504]]
    %s506 = sadd.s32 %s474, 8
    %s507 = smul.u32 %s506, 128
    %s508 = sadd.s32 %s507, %s479
    %s509 = sld [smem:[#allocation4 + %s508]]
    %s510 = sadd.s32 %s474, 9
    %s511 = smul.u32 %s510, 128
    %s512 = sadd.s32 %s511, %s479
    %s513 = sld [smem:[#allocation4 + %s512]]
    %s514 = sadd.s32 %s474, 10
    %s515 = smul.u32 %s514, 128
    %s516 = sadd.s32 %s515, %s479
    %s517 = sld [smem:[#allocation4 + %s516]]
    %s518 = sadd.s32 %s474, 11
    %s519 = smul.u32 %s518, 128
    %s520 = sadd.s32 %s519, %s479
    %s521 = sld [smem:[#allocation4 + %s520]]
    %s522 = sadd.s32 %s474, 12
    %s523 = smul.u32 %s522, 128
    %s524 = sadd.s32 %s523, %s479
    %s525 = sld [smem:[#allocation4 + %s524]]
    %s526 = sadd.s32 %s474, 13
    %s527 = smul.u32 %s526, 128
    %s528 = sadd.s32 %s527, %s479
    %s529 = sld [smem:[#allocation4 + %s528]]
    %s530 = sadd.s32 %s474, 14
    %s531 = smul.u32 %s530, 128
    %s532 = sadd.s32 %s531, %s479
    %s533 = sld [smem:[#allocation4 + %s532]]
    %s534 = sadd.s32 %s474, 15
    %s535 = smul.u32 %s534, 128
    %s536 = sadd.s32 %s535, %s479
    %s537 = sld [smem:[#allocation4 + %s536]]
    %s538 = sadd.s32 %s474, 16
    %s539 = smul.u32 %s538, 128
    %s540 = sadd.s32 %s539, %s479
    %s541 = sld [smem:[#allocation4 + %s540]]
    %s542 = sadd.s32 %s474, 17
    %s543 = smul.u32 %s542, 128
    %s544 = sadd.s32 %s543, %s479
    %s545 = sld [smem:[#allocation4 + %s544]]
    %s546 = sadd.s32 %s474, 18
    %s547 = smul.u32 %s546, 128
    %s548 = sadd.s32 %s547, %s479
    %s549 = sld [smem:[#allocation4 + %s548]]
    %s550 = sadd.s32 %s474, 19
    %s551 = smul.u32 %s550, 128
    %s552 = sadd.s32 %s551, %s479
    %s553 = sld [smem:[#allocation4 + %s552]]
    %s554 = sadd.s32 %s474, 20
    %s555 = smul.u32 %s554, 128
    %s556 = sadd.s32 %s555, %s479
    %s557 = sld [smem:[#allocation4 + %s556]]
    %s558 = sadd.s32 %s474, 21
    %s559 = smul.u32 %s558, 128
    %s560 = sadd.s32 %s559, %s479
    %s561 = sld [smem:[#allocation4 + %s560]]
    %s562 = sadd.s32 %s474, 22
    %s563 = smul.u32 %s562, 128
    %s564 = sadd.s32 %s563, %s479
    %s565 = sld [smem:[#allocation4 + %s564]]
    %s566 = sadd.s32 %s474, 23
    %s567 = smul.u32 %s566, 128
    %s568 = sadd.s32 %s567, %s479
    %s569 = sld [smem:[#allocation4 + %s568]]
    %v570 = vstv %s473
    %v571 = vmul.f32 %v570, %v455
    %v572 = vstv %s481
    %v573 = vmul.f32 %v572, %v458
    %v574 = vsub.f32 %v571, %v573
    %v575 = vstv %s485
    %v576 = vmul.f32 %v575, %v461
    %v577 = vadd.f32 %v574, %v576
    %v578 = vstv %s489
    %v579 = vmul.f32 %v578, %v464
    %v580 = vadd.f32 %v577, %v579
    %v581 = vstv %s493
    %v582 = vmul.f32 %v581, %v439
    %v583 = vadd.f32 %v580, %v582
    %v584 = vstv %s497
    %v585 = vmul.f32 %v584, %v452
    %v586 = vsub.f32 %v583, %v585
    %v587 = vstv %s501
    %v588 = vadd.f32 %v586, %v587
    %v589 = vmul.f32 %v570, %v458
    %v590 = vmul.f32 %v572, %v455
    %v591 = vadd.f32 %v589, %v590
    %v592 = vmul.f32 %v578, %v461
    %v593 = vadd.f32 %v591, %v592
    %v594 = vmul.f32 %v575, %v464
    %v595 = vsub.f32 %v593, %v594
    %v596 = vmul.f32 %v581, %v452
    %v597 = vadd.f32 %v595, %v596
    %v598 = vmul.f32 %v584, %v439
    %v599 = vadd.f32 %v597, %v598
    %v600 = vstv %s505
    %v601 = vadd.f32 %v599, %v600
    %v602 = vstv %s509
    %v603 = vmul.f32 %v602, %v455
    %v604 = vstv %s513
    %v605 = vmul.f32 %v604, %v458
    %v606 = vadd.f32 %v603, %v605
    %v607 = vstv %s517
    %v608 = vmul.f32 %v607, %v461
    %v609 = vadd.f32 %v606, %v608
    %v610 = vstv %s521
    %v611 = vmul.f32 %v610, %v464
    %v612 = vsub.f32 %v609, %v611
    %v613 = vstv %s525
    %v614 = vmul.f32 %v613, %v439
    %v615 = vadd.f32 %v612, %v614
    %v616 = vstv %s529
    %v617 = vmul.f32 %v616, %v452
    %v618 = vsub.f32 %v615, %v617
    %v619 = vstv %s533
    %v620 = vadd.f32 %v618, %v619
    %v621 = vmul.f32 %v604, %v455
    %v622 = vmul.f32 %v602, %v458
    %v623 = vsub.f32 %v621, %v622
    %v624 = vmul.f32 %v607, %v464
    %v625 = vadd.f32 %v623, %v624
    %v626 = vmul.f32 %v610, %v461
    %v627 = vadd.f32 %v625, %v626
    %v628 = vmul.f32 %v613, %v452
    %v629 = vadd.f32 %v627, %v628
    %v630 = vmul.f32 %v616, %v439
    %v631 = vadd.f32 %v629, %v630
    %v632 = vstv %s537
    %v633 = vadd.f32 %v631, %v632
    %v634 = vstv %s541
    %v635 = vmul.f32 %v634, %v455
    %v636 = vstv %s545
    %v637 = vmul.f32 %v636, %v458
    %v638 = vsub.f32 %v635, %v637
    %v639 = vstv %s549
    %v640 = vmul.f32 %v639, %v461
    %v641 = vadd.f32 %v638, %v640
    %v642 = vstv %s553
    %v643 = vmul.f32 %v642, %v464
    %v644 = vsub.f32 %v641, %v643
    %v645 = vstv %s557
    %v646 = vmul.f32 %v645, %v439
    %v647 = vadd.f32 %v644, %v646
    %v648 = vstv %s561
    %v649 = vmul.f32 %v648, %v452
    %v650 = vsub.f32 %v647, %v649
    %v651 = vstv %s565
    %v652 = vadd.f32 %v650, %v651
    %v653 = vmul.f32 %v636, %v455
    %v654 = vmul.f32 %v634, %v458
    %v655 = vadd.f32 %v653, %v654
    %v656 = vmul.f32 %v642, %v461
    %v657 = vadd.f32 %v655, %v656
    %v658 = vmul.f32 %v639, %v464
    %v659 = vadd.f32 %v657, %v658
    %v660 = vmul.f32 %v648, %v439
    %v661 = vadd.f32 %v659, %v660
    %v662 = vmul.f32 %v645, %v452
    %v663 = vadd.f32 %v661, %v662
    %v664 = vstv %s569
    %v665 = vadd.f32 %v663, %v664
    %666 = vrot.lane.b32.xlu0 %v588, 1
    %v667 = vpop.permute.xlu0 %666
    %v668 = vsel %vm18, 0.0, %v667
    %669 = vrot.lane.b32.xlu0 %v601, 1
    %v670 = vpop.permute.xlu0 %669
    %v671 = vsel %vm18, 0.0, %v670
    %672 = vrot.lane.b32.xlu0 %v620, 127
    %v673 = vpop.permute.xlu0 %672
    %v674 = vsel %vm19, 0.0, %v673
    %675 = vrot.lane.b32.xlu0 %v633, 127
    %v676 = vpop.permute.xlu0 %675
    %v677 = vsel %vm19, 0.0, %v676
    %s678 = scalar_lea.vmem [#allocation5], 16
    %679 = vst [vmem:[%s678] sm:$0x1] %v668
    %680 = vst [vmem:[%s678 + $0x1] sm:$0x1] %v671
    %681 = vst [vmem:[%s678 + $0x2] sm:$0x1] %v674
    %682 = vst [vmem:[%s678 + $0x3] sm:$0x1] %v677
    %683 = vst [vmem:[%s678 + $0x4] sm:$0x1] %v652
    %684 = vst [vmem:[%s678 + $0x5] sm:$0x1] %v665
    %s685 = sadd.s32 %s13, 3
    %s686 = sld [smem:[#allocation4 + %s685]]
    %s687 = sshra.s32 %s685, 7
    %s688 = sand.u32 %s685, 127
    %s689 = sadd.s32 %s687, 1
    %s690 = smul.u32 %s689, 128
    %s691 = sshra.s32 %s685, 7
    %s692 = sand.u32 %s685, 127
    %s693 = sadd.s32 %s690, %s692
    %s694 = sld [smem:[#allocation4 + %s693]]
    %s695 = sadd.s32 %s687, 2
    %s696 = smul.u32 %s695, 128
    %s697 = sadd.s32 %s696, %s692
    %s698 = sld [smem:[#allocation4 + %s697]]
    %s699 = sadd.s32 %s687, 3
    %s700 = smul.u32 %s699, 128
    %s701 = sadd.s32 %s700, %s692
    %s702 = sld [smem:[#allocation4 + %s701]]
    %s703 = sadd.s32 %s687, 4
    %s704 = smul.u32 %s703, 128
    %s705 = sadd.s32 %s704, %s692
    %s706 = sld [smem:[#allocation4 + %s705]]
    %s707 = sadd.s32 %s687, 5
    %s708 = smul.u32 %s707, 128
    %s709 = sadd.s32 %s708, %s692
    %s710 = sld [smem:[#allocation4 + %s709]]
    %s711 = sadd.s32 %s687, 6
    %s712 = smul.u32 %s711, 128
    %s713 = sadd.s32 %s712, %s692
    %s714 = sld [smem:[#allocation4 + %s713]]
    %s715 = sadd.s32 %s687, 7
    %s716 = smul.u32 %s715, 128
    %s717 = sadd.s32 %s716, %s692
    %s718 = sld [smem:[#allocation4 + %s717]]
    %s719 = sadd.s32 %s687, 8
    %s720 = smul.u32 %s719, 128
    %s721 = sadd.s32 %s720, %s692
    %s722 = sld [smem:[#allocation4 + %s721]]
    %s723 = sadd.s32 %s687, 9
    %s724 = smul.u32 %s723, 128
    %s725 = sadd.s32 %s724, %s692
    %s726 = sld [smem:[#allocation4 + %s725]]
    %s727 = sadd.s32 %s687, 10
    %s728 = smul.u32 %s727, 128
    %s729 = sadd.s32 %s728, %s692
    %s730 = sld [smem:[#allocation4 + %s729]]
    %s731 = sadd.s32 %s687, 11
    %s732 = smul.u32 %s731, 128
    %s733 = sadd.s32 %s732, %s692
    %s734 = sld [smem:[#allocation4 + %s733]]
    %s735 = sadd.s32 %s687, 12
    %s736 = smul.u32 %s735, 128
    %s737 = sadd.s32 %s736, %s692
    %s738 = sld [smem:[#allocation4 + %s737]]
    %s739 = sadd.s32 %s687, 13
    %s740 = smul.u32 %s739, 128
    %s741 = sadd.s32 %s740, %s692
    %s742 = sld [smem:[#allocation4 + %s741]]
    %s743 = sadd.s32 %s687, 14
    %s744 = smul.u32 %s743, 128
    %s745 = sadd.s32 %s744, %s692
    %s746 = sld [smem:[#allocation4 + %s745]]
    %s747 = sadd.s32 %s687, 15
    %s748 = smul.u32 %s747, 128
    %s749 = sadd.s32 %s748, %s692
    %s750 = sld [smem:[#allocation4 + %s749]]
    %s751 = sadd.s32 %s687, 16
    %s752 = smul.u32 %s751, 128
    %s753 = sadd.s32 %s752, %s692
    %s754 = sld [smem:[#allocation4 + %s753]]
    %s755 = sadd.s32 %s687, 17
    %s756 = smul.u32 %s755, 128
    %s757 = sadd.s32 %s756, %s692
    %s758 = sld [smem:[#allocation4 + %s757]]
    %s759 = sadd.s32 %s687, 18
    %s760 = smul.u32 %s759, 128
    %s761 = sadd.s32 %s760, %s692
    %s762 = sld [smem:[#allocation4 + %s761]]
    %s763 = sadd.s32 %s687, 19
    %s764 = smul.u32 %s763, 128
    %s765 = sadd.s32 %s764, %s692
    %s766 = sld [smem:[#allocation4 + %s765]]
    %s767 = sadd.s32 %s687, 20
    %s768 = smul.u32 %s767, 128
    %s769 = sadd.s32 %s768, %s692
    %s770 = sld [smem:[#allocation4 + %s769]]
    %s771 = sadd.s32 %s687, 21
    %s772 = smul.u32 %s771, 128
    %s773 = sadd.s32 %s772, %s692
    %s774 = sld [smem:[#allocation4 + %s773]]
    %s775 = sadd.s32 %s687, 22
    %s776 = smul.u32 %s775, 128
    %s777 = sadd.s32 %s776, %s692
    %s778 = sld [smem:[#allocation4 + %s777]]
    %s779 = sadd.s32 %s687, 23
    %s780 = smul.u32 %s779, 128
    %s781 = sadd.s32 %s780, %s692
    %s782 = sld [smem:[#allocation4 + %s781]]
    %v783 = vstv %s686
    %v784 = vmul.f32 %v783, %v668
    %v785 = vstv %s694
    %v786 = vmul.f32 %v785, %v671
    %v787 = vsub.f32 %v784, %v786
    %v788 = vstv %s698
    %v789 = vmul.f32 %v788, %v674
    %v790 = vadd.f32 %v787, %v789
    %v791 = vstv %s702
    %v792 = vmul.f32 %v791, %v677
    %v793 = vadd.f32 %v790, %v792
    %v794 = vstv %s706
    %v795 = vmul.f32 %v794, %v652
    %v796 = vadd.f32 %v793, %v795
    %v797 = vstv %s710
    %v798 = vmul.f32 %v797, %v665
    %v799 = vsub.f32 %v796, %v798
    %v800 = vstv %s714
    %v801 = vadd.f32 %v799, %v800
    %v802 = vmul.f32 %v783, %v671
    %v803 = vmul.f32 %v785, %v668
    %v804 = vadd.f32 %v802, %v803
    %v805 = vmul.f32 %v791, %v674
    %v806 = vadd.f32 %v804, %v805
    %v807 = vmul.f32 %v788, %v677
    %v808 = vsub.f32 %v806, %v807
    %v809 = vmul.f32 %v794, %v665
    %v810 = vadd.f32 %v808, %v809
    %v811 = vmul.f32 %v797, %v652
    %v812 = vadd.f32 %v810, %v811
    %v813 = vstv %s718
    %v814 = vadd.f32 %v812, %v813
    %v815 = vstv %s722
    %v816 = vmul.f32 %v815, %v668
    %v817 = vstv %s726
    %v818 = vmul.f32 %v817, %v671
    %v819 = vadd.f32 %v816, %v818
    %v820 = vstv %s730
    %v821 = vmul.f32 %v820, %v674
    %v822 = vadd.f32 %v819, %v821
    %v823 = vstv %s734
    %v824 = vmul.f32 %v823, %v677
    %v825 = vsub.f32 %v822, %v824
    %v826 = vstv %s738
    %v827 = vmul.f32 %v826, %v652
    %v828 = vadd.f32 %v825, %v827
    %v829 = vstv %s742
    %v830 = vmul.f32 %v829, %v665
    %v831 = vsub.f32 %v828, %v830
    %v832 = vstv %s746
    %v833 = vadd.f32 %v831, %v832
    %v834 = vmul.f32 %v817, %v668
    %v835 = vmul.f32 %v815, %v671
    %v836 = vsub.f32 %v834, %v835
    %v837 = vmul.f32 %v820, %v677
    %v838 = vadd.f32 %v836, %v837
    %v839 = vmul.f32 %v823, %v674
    %v840 = vadd.f32 %v838, %v839
    %v841 = vmul.f32 %v826, %v665
    %v842 = vadd.f32 %v840, %v841
    %v843 = vmul.f32 %v829, %v652
    %v844 = vadd.f32 %v842, %v843
    %v845 = vstv %s750
    %v846 = vadd.f32 %v844, %v845
    %v847 = vstv %s754
    %v848 = vmul.f32 %v847, %v668
    %v849 = vstv %s758
    %v850 = vmul.f32 %v849, %v671
    %v851 = vsub.f32 %v848, %v850
    %v852 = vstv %s762
    %v853 = vmul.f32 %v852, %v674
    %v854 = vadd.f32 %v851, %v853
    %v855 = vstv %s766
    %v856 = vmul.f32 %v855, %v677
    %v857 = vsub.f32 %v854, %v856
    %v858 = vstv %s770
    %v859 = vmul.f32 %v858, %v652
    %v860 = vadd.f32 %v857, %v859
    %v861 = vstv %s774
    %v862 = vmul.f32 %v861, %v665
    %v863 = vsub.f32 %v860, %v862
    %v864 = vstv %s778
    %v865 = vadd.f32 %v863, %v864
    %v866 = vmul.f32 %v849, %v668
    %v867 = vmul.f32 %v847, %v671
    %v868 = vadd.f32 %v866, %v867
    %v869 = vmul.f32 %v855, %v674
    %v870 = vadd.f32 %v868, %v869
    %v871 = vmul.f32 %v852, %v677
    %v872 = vadd.f32 %v870, %v871
    %v873 = vmul.f32 %v861, %v652
    %v874 = vadd.f32 %v872, %v873
    %v875 = vmul.f32 %v858, %v665
    %v876 = vadd.f32 %v874, %v875
    %v877 = vstv %s782
    %v878 = vadd.f32 %v876, %v877
    %879 = vrot.lane.b32.xlu0 %v801, 1
    %v880 = vpop.permute.xlu0 %879
    %v881 = vsel %vm18, 0.0, %v880
    %882 = vrot.lane.b32.xlu0 %v814, 1
    %v883 = vpop.permute.xlu0 %882
    %v884 = vsel %vm18, 0.0, %v883
    %885 = vrot.lane.b32.xlu0 %v833, 127
    %v886 = vpop.permute.xlu0 %885
    %v887 = vsel %vm19, 0.0, %v886
    %888 = vrot.lane.b32.xlu0 %v846, 127
    %v889 = vpop.permute.xlu0 %888
    %v890 = vsel %vm19, 0.0, %v889
    %s891 = scalar_lea.vmem [#allocation5], 24
    %892 = vst [vmem:[%s891] sm:$0x1] %v881
    %893 = vst [vmem:[%s891 + $0x1] sm:$0x1] %v884
    %894 = vst [vmem:[%s891 + $0x2] sm:$0x1] %v887
    %895 = vst [vmem:[%s891 + $0x3] sm:$0x1] %v890
    %896 = vst [vmem:[%s891 + $0x4] sm:$0x1] %v865
    %897 = vst [vmem:[%s891 + $0x5] sm:$0x1] %v878
    %s898 = sadd.s32 %s13, 4
    %s899 = sld [smem:[#allocation4 + %s898]]
    %s900 = sshra.s32 %s898, 7
    %s901 = sand.u32 %s898, 127
    %s902 = sadd.s32 %s900, 1
    %s903 = smul.u32 %s902, 128
    %s904 = sshra.s32 %s898, 7
    %s905 = sand.u32 %s898, 127
    %s906 = sadd.s32 %s903, %s905
    %s907 = sld [smem:[#allocation4 + %s906]]
    %s908 = sadd.s32 %s900, 2
    %s909 = smul.u32 %s908, 128
    %s910 = sadd.s32 %s909, %s905
    %s911 = sld [smem:[#allocation4 + %s910]]
    %s912 = sadd.s32 %s900, 3
    %s913 = smul.u32 %s912, 128
    %s914 = sadd.s32 %s913, %s905
    %s915 = sld [smem:[#allocation4 + %s914]]
    %s916 = sadd.s32 %s900, 4
    %s917 = smul.u32 %s916, 128
    %s918 = sadd.s32 %s917, %s905
    %s919 = sld [smem:[#allocation4 + %s918]]
    %s920 = sadd.s32 %s900, 5
    %s921 = smul.u32 %s920, 128
    %s922 = sadd.s32 %s921, %s905
    %s923 = sld [smem:[#allocation4 + %s922]]
    %s924 = sadd.s32 %s900, 6
    %s925 = smul.u32 %s924, 128
    %s926 = sadd.s32 %s925, %s905
    %s927 = sld [smem:[#allocation4 + %s926]]
    %s928 = sadd.s32 %s900, 7
    %s929 = smul.u32 %s928, 128
    %s930 = sadd.s32 %s929, %s905
    %s931 = sld [smem:[#allocation4 + %s930]]
    %s932 = sadd.s32 %s900, 8
    %s933 = smul.u32 %s932, 128
    %s934 = sadd.s32 %s933, %s905
    %s935 = sld [smem:[#allocation4 + %s934]]
    %s936 = sadd.s32 %s900, 9
    %s937 = smul.u32 %s936, 128
    %s938 = sadd.s32 %s937, %s905
    %s939 = sld [smem:[#allocation4 + %s938]]
    %s940 = sadd.s32 %s900, 10
    %s941 = smul.u32 %s940, 128
    %s942 = sadd.s32 %s941, %s905
    %s943 = sld [smem:[#allocation4 + %s942]]
    %s944 = sadd.s32 %s900, 11
    %s945 = smul.u32 %s944, 128
    %s946 = sadd.s32 %s945, %s905
    %s947 = sld [smem:[#allocation4 + %s946]]
    %s948 = sadd.s32 %s900, 12
    %s949 = smul.u32 %s948, 128
    %s950 = sadd.s32 %s949, %s905
    %s951 = sld [smem:[#allocation4 + %s950]]
    %s952 = sadd.s32 %s900, 13
    %s953 = smul.u32 %s952, 128
    %s954 = sadd.s32 %s953, %s905
    %s955 = sld [smem:[#allocation4 + %s954]]
    %s956 = sadd.s32 %s900, 14
    %s957 = smul.u32 %s956, 128
    %s958 = sadd.s32 %s957, %s905
    %s959 = sld [smem:[#allocation4 + %s958]]
    %s960 = sadd.s32 %s900, 15
    %s961 = smul.u32 %s960, 128
    %s962 = sadd.s32 %s961, %s905
    %s963 = sld [smem:[#allocation4 + %s962]]
    %s964 = sadd.s32 %s900, 16
    %s965 = smul.u32 %s964, 128
    %s966 = sadd.s32 %s965, %s905
    %s967 = sld [smem:[#allocation4 + %s966]]
    %s968 = sadd.s32 %s900, 17
    %s969 = smul.u32 %s968, 128
    %s970 = sadd.s32 %s969, %s905
    %s971 = sld [smem:[#allocation4 + %s970]]
    %s972 = sadd.s32 %s900, 18
    %s973 = smul.u32 %s972, 128
    %s974 = sadd.s32 %s973, %s905
    %s975 = sld [smem:[#allocation4 + %s974]]
    %s976 = sadd.s32 %s900, 19
    %s977 = smul.u32 %s976, 128
    %s978 = sadd.s32 %s977, %s905
    %s979 = sld [smem:[#allocation4 + %s978]]
    %s980 = sadd.s32 %s900, 20
    %s981 = smul.u32 %s980, 128
    %s982 = sadd.s32 %s981, %s905
    %s983 = sld [smem:[#allocation4 + %s982]]
    %s984 = sadd.s32 %s900, 21
    %s985 = smul.u32 %s984, 128
    %s986 = sadd.s32 %s985, %s905
    %s987 = sld [smem:[#allocation4 + %s986]]
    %s988 = sadd.s32 %s900, 22
    %s989 = smul.u32 %s988, 128
    %s990 = sadd.s32 %s989, %s905
    %s991 = sld [smem:[#allocation4 + %s990]]
    %s992 = sadd.s32 %s900, 23
    %s993 = smul.u32 %s992, 128
    %s994 = sadd.s32 %s993, %s905
    %s995 = sld [smem:[#allocation4 + %s994]]
    %v996 = vstv %s899
    %v997 = vmul.f32 %v996, %v881
    %v998 = vstv %s907
    %v999 = vmul.f32 %v998, %v884
    %v1000 = vsub.f32 %v997, %v999
    %v1001 = vstv %s911
    %v1002 = vmul.f32 %v1001, %v887
    %v1003 = vadd.f32 %v1000, %v1002
    %v1004 = vstv %s915
    %v1005 = vmul.f32 %v1004, %v890
    %v1006 = vadd.f32 %v1003, %v1005
    %v1007 = vstv %s919
    %v1008 = vmul.f32 %v1007, %v865
    %v1009 = vadd.f32 %v1006, %v1008
    %v1010 = vstv %s923
    %v1011 = vmul.f32 %v1010, %v878
    %v1012 = vsub.f32 %v1009, %v1011
    %v1013 = vstv %s927
    %v1014 = vadd.f32 %v1012, %v1013
    %v1015 = vmul.f32 %v996, %v884
    %v1016 = vmul.f32 %v998, %v881
    %v1017 = vadd.f32 %v1015, %v1016
    %v1018 = vmul.f32 %v1004, %v887
    %v1019 = vadd.f32 %v1017, %v1018
    %v1020 = vmul.f32 %v1001, %v890
    %v1021 = vsub.f32 %v1019, %v1020
    %v1022 = vmul.f32 %v1007, %v878
    %v1023 = vadd.f32 %v1021, %v1022
    %v1024 = vmul.f32 %v1010, %v865
    %v1025 = vadd.f32 %v1023, %v1024
    %v1026 = vstv %s931
    %v1027 = vadd.f32 %v1025, %v1026
    %v1028 = vstv %s935
    %v1029 = vmul.f32 %v1028, %v881
    %v1030 = vstv %s939
    %v1031 = vmul.f32 %v1030, %v884
    %v1032 = vadd.f32 %v1029, %v1031
    %v1033 = vstv %s943
    %v1034 = vmul.f32 %v1033, %v887
    %v1035 = vadd.f32 %v1032, %v1034
    %v1036 = vstv %s947
    %v1037 = vmul.f32 %v1036, %v890
    %v1038 = vsub.f32 %v1035, %v1037
    %v1039 = vstv %s951
    %v1040 = vmul.f32 %v1039, %v865
    %v1041 = vadd.f32 %v1038, %v1040
    %v1042 = vstv %s955
    %v1043 = vmul.f32 %v1042, %v878
    %v1044 = vsub.f32 %v1041, %v1043
    %v1045 = vstv %s959
    %v1046 = vadd.f32 %v1044, %v1045
    %v1047 = vmul.f32 %v1030, %v881
    %v1048 = vmul.f32 %v1028, %v884
    %v1049 = vsub.f32 %v1047, %v1048
    %v1050 = vmul.f32 %v1033, %v890
    %v1051 = vadd.f32 %v1049, %v1050
    %v1052 = vmul.f32 %v1036, %v887
    %v1053 = vadd.f32 %v1051, %v1052
    %v1054 = vmul.f32 %v1039, %v878
    %v1055 = vadd.f32 %v1053, %v1054
    %v1056 = vmul.f32 %v1042, %v865
    %v1057 = vadd.f32 %v1055, %v1056
    %v1058 = vstv %s963
    %v1059 = vadd.f32 %v1057, %v1058
    %v1060 = vstv %s967
    %v1061 = vmul.f32 %v1060, %v881
    %v1062 = vstv %s971
    %v1063 = vmul.f32 %v1062, %v884
    %v1064 = vsub.f32 %v1061, %v1063
    %v1065 = vstv %s975
    %v1066 = vmul.f32 %v1065, %v887
    %v1067 = vadd.f32 %v1064, %v1066
    %v1068 = vstv %s979
    %v1069 = vmul.f32 %v1068, %v890
    %v1070 = vsub.f32 %v1067, %v1069
    %v1071 = vstv %s983
    %v1072 = vmul.f32 %v1071, %v865
    %v1073 = vadd.f32 %v1070, %v1072
    %v1074 = vstv %s987
    %v1075 = vmul.f32 %v1074, %v878
    %v1076 = vsub.f32 %v1073, %v1075
    %v1077 = vstv %s991
    %v1078 = vadd.f32 %v1076, %v1077
    %v1079 = vmul.f32 %v1062, %v881
    %v1080 = vmul.f32 %v1060, %v884
    %v1081 = vadd.f32 %v1079, %v1080
    %v1082 = vmul.f32 %v1068, %v887
    %v1083 = vadd.f32 %v1081, %v1082
    %v1084 = vmul.f32 %v1065, %v890
    %v1085 = vadd.f32 %v1083, %v1084
    %v1086 = vmul.f32 %v1074, %v865
    %v1087 = vadd.f32 %v1085, %v1086
    %v1088 = vmul.f32 %v1071, %v878
    %v1089 = vadd.f32 %v1087, %v1088
    %v1090 = vstv %s995
    %v1091 = vadd.f32 %v1089, %v1090
    %1092 = vrot.lane.b32.xlu0 %v1014, 1
    %v1093 = vpop.permute.xlu0 %1092
    %v1094 = vsel %vm18, 0.0, %v1093
    %1095 = vrot.lane.b32.xlu0 %v1027, 1
    %v1096 = vpop.permute.xlu0 %1095
    %v1097 = vsel %vm18, 0.0, %v1096
    %1098 = vrot.lane.b32.xlu0 %v1046, 127
    %v1099 = vpop.permute.xlu0 %1098
    %v1100 = vsel %vm19, 0.0, %v1099
    %1101 = vrot.lane.b32.xlu0 %v1059, 127
    %v1102 = vpop.permute.xlu0 %1101
    %v1103 = vsel %vm19, 0.0, %v1102
    %s1104 = scalar_lea.vmem [#allocation5], 32
    %1105 = vst [vmem:[%s1104] sm:$0x1] %v1094
    %1106 = vst [vmem:[%s1104 + $0x1] sm:$0x1] %v1097
    %1107 = vst [vmem:[%s1104 + $0x2] sm:$0x1] %v1100
    %1108 = vst [vmem:[%s1104 + $0x3] sm:$0x1] %v1103
    %1109 = vst [vmem:[%s1104 + $0x4] sm:$0x1] %v1078
    %1110 = vst [vmem:[%s1104 + $0x5] sm:$0x1] %v1091
    %s1111 = sadd.s32 %s13, 5
    %s1112 = sld [smem:[#allocation4 + %s1111]]
    %s1113 = sshra.s32 %s1111, 7
    %s1114 = sand.u32 %s1111, 127
    %s1115 = sadd.s32 %s1113, 1
    %s1116 = smul.u32 %s1115, 128
    %s1117 = sshra.s32 %s1111, 7
    %s1118 = sand.u32 %s1111, 127
    %s1119 = sadd.s32 %s1116, %s1118
    %s1120 = sld [smem:[#allocation4 + %s1119]]
    %s1121 = sadd.s32 %s1113, 2
    %s1122 = smul.u32 %s1121, 128
    %s1123 = sadd.s32 %s1122, %s1118
    %s1124 = sld [smem:[#allocation4 + %s1123]]
    %s1125 = sadd.s32 %s1113, 3
    %s1126 = smul.u32 %s1125, 128
    %s1127 = sadd.s32 %s1126, %s1118
    %s1128 = sld [smem:[#allocation4 + %s1127]]
    %s1129 = sadd.s32 %s1113, 4
    %s1130 = smul.u32 %s1129, 128
    %s1131 = sadd.s32 %s1130, %s1118
    %s1132 = sld [smem:[#allocation4 + %s1131]]
    %s1133 = sadd.s32 %s1113, 5
    %s1134 = smul.u32 %s1133, 128
    %s1135 = sadd.s32 %s1134, %s1118
    %s1136 = sld [smem:[#allocation4 + %s1135]]
    %s1137 = sadd.s32 %s1113, 6
    %s1138 = smul.u32 %s1137, 128
    %s1139 = sadd.s32 %s1138, %s1118
    %s1140 = sld [smem:[#allocation4 + %s1139]]
    %s1141 = sadd.s32 %s1113, 7
    %s1142 = smul.u32 %s1141, 128
    %s1143 = sadd.s32 %s1142, %s1118
    %s1144 = sld [smem:[#allocation4 + %s1143]]
    %s1145 = sadd.s32 %s1113, 8
    %s1146 = smul.u32 %s1145, 128
    %s1147 = sadd.s32 %s1146, %s1118
    %s1148 = sld [smem:[#allocation4 + %s1147]]
    %s1149 = sadd.s32 %s1113, 9
    %s1150 = smul.u32 %s1149, 128
    %s1151 = sadd.s32 %s1150, %s1118
    %s1152 = sld [smem:[#allocation4 + %s1151]]
    %s1153 = sadd.s32 %s1113, 10
    %s1154 = smul.u32 %s1153, 128
    %s1155 = sadd.s32 %s1154, %s1118
    %s1156 = sld [smem:[#allocation4 + %s1155]]
    %s1157 = sadd.s32 %s1113, 11
    %s1158 = smul.u32 %s1157, 128
    %s1159 = sadd.s32 %s1158, %s1118
    %s1160 = sld [smem:[#allocation4 + %s1159]]
    %s1161 = sadd.s32 %s1113, 12
    %s1162 = smul.u32 %s1161, 128
    %s1163 = sadd.s32 %s1162, %s1118
    %s1164 = sld [smem:[#allocation4 + %s1163]]
    %s1165 = sadd.s32 %s1113, 13
    %s1166 = smul.u32 %s1165, 128
    %s1167 = sadd.s32 %s1166, %s1118
    %s1168 = sld [smem:[#allocation4 + %s1167]]
    %s1169 = sadd.s32 %s1113, 14
    %s1170 = smul.u32 %s1169, 128
    %s1171 = sadd.s32 %s1170, %s1118
    %s1172 = sld [smem:[#allocation4 + %s1171]]
    %s1173 = sadd.s32 %s1113, 15
    %s1174 = smul.u32 %s1173, 128
    %s1175 = sadd.s32 %s1174, %s1118
    %s1176 = sld [smem:[#allocation4 + %s1175]]
    %s1177 = sadd.s32 %s1113, 16
    %s1178 = smul.u32 %s1177, 128
    %s1179 = sadd.s32 %s1178, %s1118
    %s1180 = sld [smem:[#allocation4 + %s1179]]
    %s1181 = sadd.s32 %s1113, 17
    %s1182 = smul.u32 %s1181, 128
    %s1183 = sadd.s32 %s1182, %s1118
    %s1184 = sld [smem:[#allocation4 + %s1183]]
    %s1185 = sadd.s32 %s1113, 18
    %s1186 = smul.u32 %s1185, 128
    %s1187 = sadd.s32 %s1186, %s1118
    %s1188 = sld [smem:[#allocation4 + %s1187]]
    %s1189 = sadd.s32 %s1113, 19
    %s1190 = smul.u32 %s1189, 128
    %s1191 = sadd.s32 %s1190, %s1118
    %s1192 = sld [smem:[#allocation4 + %s1191]]
    %s1193 = sadd.s32 %s1113, 20
    %s1194 = smul.u32 %s1193, 128
    %s1195 = sadd.s32 %s1194, %s1118
    %s1196 = sld [smem:[#allocation4 + %s1195]]
    %s1197 = sadd.s32 %s1113, 21
    %s1198 = smul.u32 %s1197, 128
    %s1199 = sadd.s32 %s1198, %s1118
    %s1200 = sld [smem:[#allocation4 + %s1199]]
    %s1201 = sadd.s32 %s1113, 22
    %s1202 = smul.u32 %s1201, 128
    %s1203 = sadd.s32 %s1202, %s1118
    %s1204 = sld [smem:[#allocation4 + %s1203]]
    %s1205 = sadd.s32 %s1113, 23
    %s1206 = smul.u32 %s1205, 128
    %s1207 = sadd.s32 %s1206, %s1118
    %s1208 = sld [smem:[#allocation4 + %s1207]]
    %v1209 = vstv %s1112
    %v1210 = vmul.f32 %v1209, %v1094
    %v1211 = vstv %s1120
    %v1212 = vmul.f32 %v1211, %v1097
    %v1213 = vsub.f32 %v1210, %v1212
    %v1214 = vstv %s1124
    %v1215 = vmul.f32 %v1214, %v1100
    %v1216 = vadd.f32 %v1213, %v1215
    %v1217 = vstv %s1128
    %v1218 = vmul.f32 %v1217, %v1103
    %v1219 = vadd.f32 %v1216, %v1218
    %v1220 = vstv %s1132
    %v1221 = vmul.f32 %v1220, %v1078
    %v1222 = vadd.f32 %v1219, %v1221
    %v1223 = vstv %s1136
    %v1224 = vmul.f32 %v1223, %v1091
    %v1225 = vsub.f32 %v1222, %v1224
    %v1226 = vstv %s1140
    %v1227 = vadd.f32 %v1225, %v1226
    %v1228 = vmul.f32 %v1209, %v1097
    %v1229 = vmul.f32 %v1211, %v1094
    %v1230 = vadd.f32 %v1228, %v1229
    %v1231 = vmul.f32 %v1217, %v1100
    %v1232 = vadd.f32 %v1230, %v1231
    %v1233 = vmul.f32 %v1214, %v1103
    %v1234 = vsub.f32 %v1232, %v1233
    %v1235 = vmul.f32 %v1220, %v1091
    %v1236 = vadd.f32 %v1234, %v1235
    %v1237 = vmul.f32 %v1223, %v1078
    %v1238 = vadd.f32 %v1236, %v1237
    %v1239 = vstv %s1144
    %v1240 = vadd.f32 %v1238, %v1239
    %v1241 = vstv %s1148
    %v1242 = vmul.f32 %v1241, %v1094
    %v1243 = vstv %s1152
    %v1244 = vmul.f32 %v1243, %v1097
    %v1245 = vadd.f32 %v1242, %v1244
    %v1246 = vstv %s1156
    %v1247 = vmul.f32 %v1246, %v1100
    %v1248 = vadd.f32 %v1245, %v1247
    %v1249 = vstv %s1160
    %v1250 = vmul.f32 %v1249, %v1103
    %v1251 = vsub.f32 %v1248, %v1250
    %v1252 = vstv %s1164
    %v1253 = vmul.f32 %v1252, %v1078
    %v1254 = vadd.f32 %v1251, %v1253
    %v1255 = vstv %s1168
    %v1256 = vmul.f32 %v1255, %v1091
    %v1257 = vsub.f32 %v1254, %v1256
    %v1258 = vstv %s1172
    %v1259 = vadd.f32 %v1257, %v1258
    %v1260 = vmul.f32 %v1243, %v1094
    %v1261 = vmul.f32 %v1241, %v1097
    %v1262 = vsub.f32 %v1260, %v1261
    %v1263 = vmul.f32 %v1246, %v1103
    %v1264 = vadd.f32 %v1262, %v1263
    %v1265 = vmul.f32 %v1249, %v1100
    %v1266 = vadd.f32 %v1264, %v1265
    %v1267 = vmul.f32 %v1252, %v1091
    %v1268 = vadd.f32 %v1266, %v1267
    %v1269 = vmul.f32 %v1255, %v1078
    %v1270 = vadd.f32 %v1268, %v1269
    %v1271 = vstv %s1176
    %v1272 = vadd.f32 %v1270, %v1271
    %v1273 = vstv %s1180
    %v1274 = vmul.f32 %v1273, %v1094
    %v1275 = vstv %s1184
    %v1276 = vmul.f32 %v1275, %v1097
    %v1277 = vsub.f32 %v1274, %v1276
    %v1278 = vstv %s1188
    %v1279 = vmul.f32 %v1278, %v1100
    %v1280 = vadd.f32 %v1277, %v1279
    %v1281 = vstv %s1192
    %v1282 = vmul.f32 %v1281, %v1103
    %v1283 = vsub.f32 %v1280, %v1282
    %v1284 = vstv %s1196
    %v1285 = vmul.f32 %v1284, %v1078
    %v1286 = vadd.f32 %v1283, %v1285
    %v1287 = vstv %s1200
    %v1288 = vmul.f32 %v1287, %v1091
    %v1289 = vsub.f32 %v1286, %v1288
    %v1290 = vstv %s1204
    %v1291 = vadd.f32 %v1289, %v1290
    %v1292 = vmul.f32 %v1275, %v1094
    %v1293 = vmul.f32 %v1273, %v1097
    %v1294 = vadd.f32 %v1292, %v1293
    %v1295 = vmul.f32 %v1281, %v1100
    %v1296 = vadd.f32 %v1294, %v1295
    %v1297 = vmul.f32 %v1278, %v1103
    %v1298 = vadd.f32 %v1296, %v1297
    %v1299 = vmul.f32 %v1287, %v1078
    %v1300 = vadd.f32 %v1298, %v1299
    %v1301 = vmul.f32 %v1284, %v1091
    %v1302 = vadd.f32 %v1300, %v1301
    %v1303 = vstv %s1208
    %v1304 = vadd.f32 %v1302, %v1303
    %1305 = vrot.lane.b32.xlu0 %v1227, 1
    %v1306 = vpop.permute.xlu0 %1305
    %v1307 = vsel %vm18, 0.0, %v1306
    %1308 = vrot.lane.b32.xlu0 %v1240, 1
    %v1309 = vpop.permute.xlu0 %1308
    %v1310 = vsel %vm18, 0.0, %v1309
    %1311 = vrot.lane.b32.xlu0 %v1259, 127
    %v1312 = vpop.permute.xlu0 %1311
    %v1313 = vsel %vm19, 0.0, %v1312
    %1314 = vrot.lane.b32.xlu0 %v1272, 127
    %v1315 = vpop.permute.xlu0 %1314
    %v1316 = vsel %vm19, 0.0, %v1315
    %s1317 = scalar_lea.vmem [#allocation5], 40
    %1318 = vst [vmem:[%s1317] sm:$0x1] %v1307
    %1319 = vst [vmem:[%s1317 + $0x1] sm:$0x1] %v1310
    %1320 = vst [vmem:[%s1317 + $0x2] sm:$0x1] %v1313
    %1321 = vst [vmem:[%s1317 + $0x3] sm:$0x1] %v1316
    %1322 = vst [vmem:[%s1317 + $0x4] sm:$0x1] %v1291
    %1323 = vst [vmem:[%s1317 + $0x5] sm:$0x1] %v1304
    %s1324 = sadd.s32 %s13, 6
    %s1325 = sld [smem:[#allocation4 + %s1324]]
    %s1326 = sshra.s32 %s1324, 7
    %s1327 = sand.u32 %s1324, 127
    %s1328 = sadd.s32 %s1326, 1
    %s1329 = smul.u32 %s1328, 128
    %s1330 = sshra.s32 %s1324, 7
    %s1331 = sand.u32 %s1324, 127
    %s1332 = sadd.s32 %s1329, %s1331
    %s1333 = sld [smem:[#allocation4 + %s1332]]
    %s1334 = sadd.s32 %s1326, 2
    %s1335 = smul.u32 %s1334, 128
    %s1336 = sadd.s32 %s1335, %s1331
    %s1337 = sld [smem:[#allocation4 + %s1336]]
    %s1338 = sadd.s32 %s1326, 3
    %s1339 = smul.u32 %s1338, 128
    %s1340 = sadd.s32 %s1339, %s1331
    %s1341 = sld [smem:[#allocation4 + %s1340]]
    %s1342 = sadd.s32 %s1326, 4
    %s1343 = smul.u32 %s1342, 128
    %s1344 = sadd.s32 %s1343, %s1331
    %s1345 = sld [smem:[#allocation4 + %s1344]]
    %s1346 = sadd.s32 %s1326, 5
    %s1347 = smul.u32 %s1346, 128
    %s1348 = sadd.s32 %s1347, %s1331
    %s1349 = sld [smem:[#allocation4 + %s1348]]
    %s1350 = sadd.s32 %s1326, 6
    %s1351 = smul.u32 %s1350, 128
    %s1352 = sadd.s32 %s1351, %s1331
    %s1353 = sld [smem:[#allocation4 + %s1352]]
    %s1354 = sadd.s32 %s1326, 7
    %s1355 = smul.u32 %s1354, 128
    %s1356 = sadd.s32 %s1355, %s1331
    %s1357 = sld [smem:[#allocation4 + %s1356]]
    %s1358 = sadd.s32 %s1326, 8
    %s1359 = smul.u32 %s1358, 128
    %s1360 = sadd.s32 %s1359, %s1331
    %s1361 = sld [smem:[#allocation4 + %s1360]]
    %s1362 = sadd.s32 %s1326, 9
    %s1363 = smul.u32 %s1362, 128
    %s1364 = sadd.s32 %s1363, %s1331
    %s1365 = sld [smem:[#allocation4 + %s1364]]
    %s1366 = sadd.s32 %s1326, 10
    %s1367 = smul.u32 %s1366, 128
    %s1368 = sadd.s32 %s1367, %s1331
    %s1369 = sld [smem:[#allocation4 + %s1368]]
    %s1370 = sadd.s32 %s1326, 11
    %s1371 = smul.u32 %s1370, 128
    %s1372 = sadd.s32 %s1371, %s1331
    %s1373 = sld [smem:[#allocation4 + %s1372]]
    %s1374 = sadd.s32 %s1326, 12
    %s1375 = smul.u32 %s1374, 128
    %s1376 = sadd.s32 %s1375, %s1331
    %s1377 = sld [smem:[#allocation4 + %s1376]]
    %s1378 = sadd.s32 %s1326, 13
    %s1379 = smul.u32 %s1378, 128
    %s1380 = sadd.s32 %s1379, %s1331
    %s1381 = sld [smem:[#allocation4 + %s1380]]
    %s1382 = sadd.s32 %s1326, 14
    %s1383 = smul.u32 %s1382, 128
    %s1384 = sadd.s32 %s1383, %s1331
    %s1385 = sld [smem:[#allocation4 + %s1384]]
    %s1386 = sadd.s32 %s1326, 15
    %s1387 = smul.u32 %s1386, 128
    %s1388 = sadd.s32 %s1387, %s1331
    %s1389 = sld [smem:[#allocation4 + %s1388]]
    %s1390 = sadd.s32 %s1326, 16
    %s1391 = smul.u32 %s1390, 128
    %s1392 = sadd.s32 %s1391, %s1331
    %s1393 = sld [smem:[#allocation4 + %s1392]]
    %s1394 = sadd.s32 %s1326, 17
    %s1395 = smul.u32 %s1394, 128
    %s1396 = sadd.s32 %s1395, %s1331
    %s1397 = sld [smem:[#allocation4 + %s1396]]
    %s1398 = sadd.s32 %s1326, 18
    %s1399 = smul.u32 %s1398, 128
    %s1400 = sadd.s32 %s1399, %s1331
    %s1401 = sld [smem:[#allocation4 + %s1400]]
    %s1402 = sadd.s32 %s1326, 19
    %s1403 = smul.u32 %s1402, 128
    %s1404 = sadd.s32 %s1403, %s1331
    %s1405 = sld [smem:[#allocation4 + %s1404]]
    %s1406 = sadd.s32 %s1326, 20
    %s1407 = smul.u32 %s1406, 128
    %s1408 = sadd.s32 %s1407, %s1331
    %s1409 = sld [smem:[#allocation4 + %s1408]]
    %s1410 = sadd.s32 %s1326, 21
    %s1411 = smul.u32 %s1410, 128
    %s1412 = sadd.s32 %s1411, %s1331
    %s1413 = sld [smem:[#allocation4 + %s1412]]
    %s1414 = sadd.s32 %s1326, 22
    %s1415 = smul.u32 %s1414, 128
    %s1416 = sadd.s32 %s1415, %s1331
    %s1417 = sld [smem:[#allocation4 + %s1416]]
    %s1418 = sadd.s32 %s1326, 23
    %s1419 = smul.u32 %s1418, 128
    %s1420 = sadd.s32 %s1419, %s1331
    %s1421 = sld [smem:[#allocation4 + %s1420]]
    %v1422 = vstv %s1325
    %v1423 = vmul.f32 %v1422, %v1307
    %v1424 = vstv %s1333
    %v1425 = vmul.f32 %v1424, %v1310
    %v1426 = vsub.f32 %v1423, %v1425
    %v1427 = vstv %s1337
    %v1428 = vmul.f32 %v1427, %v1313
    %v1429 = vadd.f32 %v1426, %v1428
    %v1430 = vstv %s1341
    %v1431 = vmul.f32 %v1430, %v1316
    %v1432 = vadd.f32 %v1429, %v1431
    %v1433 = vstv %s1345
    %v1434 = vmul.f32 %v1433, %v1291
    %v1435 = vadd.f32 %v1432, %v1434
    %v1436 = vstv %s1349
    %v1437 = vmul.f32 %v1436, %v1304
    %v1438 = vsub.f32 %v1435, %v1437
    %v1439 = vstv %s1353
    %v1440 = vadd.f32 %v1438, %v1439
    %v1441 = vmul.f32 %v1422, %v1310
    %v1442 = vmul.f32 %v1424, %v1307
    %v1443 = vadd.f32 %v1441, %v1442
    %v1444 = vmul.f32 %v1430, %v1313
    %v1445 = vadd.f32 %v1443, %v1444
    %v1446 = vmul.f32 %v1427, %v1316
    %v1447 = vsub.f32 %v1445, %v1446
    %v1448 = vmul.f32 %v1433, %v1304
    %v1449 = vadd.f32 %v1447, %v1448
    %v1450 = vmul.f32 %v1436, %v1291
    %v1451 = vadd.f32 %v1449, %v1450
    %v1452 = vstv %s1357
    %v1453 = vadd.f32 %v1451, %v1452
    %v1454 = vstv %s1361
    %v1455 = vmul.f32 %v1454, %v1307
    %v1456 = vstv %s1365
    %v1457 = vmul.f32 %v1456, %v1310
    %v1458 = vadd.f32 %v1455, %v1457
    %v1459 = vstv %s1369
    %v1460 = vmul.f32 %v1459, %v1313
    %v1461 = vadd.f32 %v1458, %v1460
    %v1462 = vstv %s1373
    %v1463 = vmul.f32 %v1462, %v1316
    %v1464 = vsub.f32 %v1461, %v1463
    %v1465 = vstv %s1377
    %v1466 = vmul.f32 %v1465, %v1291
    %v1467 = vadd.f32 %v1464, %v1466
    %v1468 = vstv %s1381
    %v1469 = vmul.f32 %v1468, %v1304
    %v1470 = vsub.f32 %v1467, %v1469
    %v1471 = vstv %s1385
    %v1472 = vadd.f32 %v1470, %v1471
    %v1473 = vmul.f32 %v1456, %v1307
    %v1474 = vmul.f32 %v1454, %v1310
    %v1475 = vsub.f32 %v1473, %v1474
    %v1476 = vmul.f32 %v1459, %v1316
    %v1477 = vadd.f32 %v1475, %v1476
    %v1478 = vmul.f32 %v1462, %v1313
    %v1479 = vadd.f32 %v1477, %v1478
    %v1480 = vmul.f32 %v1465, %v1304
    %v1481 = vadd.f32 %v1479, %v1480
    %v1482 = vmul.f32 %v1468, %v1291
    %v1483 = vadd.f32 %v1481, %v1482
    %v1484 = vstv %s1389
    %v1485 = vadd.f32 %v1483, %v1484
    %v1486 = vstv %s1393
    %v1487 = vmul.f32 %v1486, %v1307
    %v1488 = vstv %s1397
    %v1489 = vmul.f32 %v1488, %v1310
    %v1490 = vsub.f32 %v1487, %v1489
    %v1491 = vstv %s1401
    %v1492 = vmul.f32 %v1491, %v1313
    %v1493 = vadd.f32 %v1490, %v1492
    %v1494 = vstv %s1405
    %v1495 = vmul.f32 %v1494, %v1316
    %v1496 = vsub.f32 %v1493, %v1495
    %v1497 = vstv %s1409
    %v1498 = vmul.f32 %v1497, %v1291
    %v1499 = vadd.f32 %v1496, %v1498
    %v1500 = vstv %s1413
    %v1501 = vmul.f32 %v1500, %v1304
    %v1502 = vsub.f32 %v1499, %v1501
    %v1503 = vstv %s1417
    %v1504 = vadd.f32 %v1502, %v1503
    %v1505 = vmul.f32 %v1488, %v1307
    %v1506 = vmul.f32 %v1486, %v1310
    %v1507 = vadd.f32 %v1505, %v1506
    %v1508 = vmul.f32 %v1494, %v1313
    %v1509 = vadd.f32 %v1507, %v1508
    %v1510 = vmul.f32 %v1491, %v1316
    %v1511 = vadd.f32 %v1509, %v1510
    %v1512 = vmul.f32 %v1500, %v1291
    %v1513 = vadd.f32 %v1511, %v1512
    %v1514 = vmul.f32 %v1497, %v1304
    %v1515 = vadd.f32 %v1513, %v1514
    %v1516 = vstv %s1421
    %v1517 = vadd.f32 %v1515, %v1516
    %1518 = vrot.lane.b32.xlu0 %v1440, 1
    %v1519 = vpop.permute.xlu0 %1518
    %v1520 = vsel %vm18, 0.0, %v1519
    %1521 = vrot.lane.b32.xlu0 %v1453, 1
    %v1522 = vpop.permute.xlu0 %1521
    %v1523 = vsel %vm18, 0.0, %v1522
    %1524 = vrot.lane.b32.xlu0 %v1472, 127
    %v1525 = vpop.permute.xlu0 %1524
    %v1526 = vsel %vm19, 0.0, %v1525
    %1527 = vrot.lane.b32.xlu0 %v1485, 127
    %v1528 = vpop.permute.xlu0 %1527
    %v1529 = vsel %vm19, 0.0, %v1528
    %s1530 = scalar_lea.vmem [#allocation5], 48
    %1531 = vst [vmem:[%s1530] sm:$0x1] %v1520
    %1532 = vst [vmem:[%s1530 + $0x1] sm:$0x1] %v1523
    %1533 = vst [vmem:[%s1530 + $0x2] sm:$0x1] %v1526
    %1534 = vst [vmem:[%s1530 + $0x3] sm:$0x1] %v1529
    %1535 = vst [vmem:[%s1530 + $0x4] sm:$0x1] %v1504
    %1536 = vst [vmem:[%s1530 + $0x5] sm:$0x1] %v1517
    %s1537 = sadd.s32 %s13, 7
    %s1538 = sld [smem:[#allocation4 + %s1537]]
    %s1539 = sshra.s32 %s1537, 7
    %s1540 = sand.u32 %s1537, 127
    %s1541 = sadd.s32 %s1539, 1
    %s1542 = smul.u32 %s1541, 128
    %s1543 = sshra.s32 %s1537, 7
    %s1544 = sand.u32 %s1537, 127
    %s1545 = sadd.s32 %s1542, %s1544
    %s1546 = sld [smem:[#allocation4 + %s1545]]
    %s1547 = sadd.s32 %s1539, 2
    %s1548 = smul.u32 %s1547, 128
    %s1549 = sadd.s32 %s1548, %s1544
    %s1550 = sld [smem:[#allocation4 + %s1549]]
    %s1551 = sadd.s32 %s1539, 3
    %s1552 = smul.u32 %s1551, 128
    %s1553 = sadd.s32 %s1552, %s1544
    %s1554 = sld [smem:[#allocation4 + %s1553]]
    %s1555 = sadd.s32 %s1539, 4
    %s1556 = smul.u32 %s1555, 128
    %s1557 = sadd.s32 %s1556, %s1544
    %s1558 = sld [smem:[#allocation4 + %s1557]]
    %s1559 = sadd.s32 %s1539, 5
    %s1560 = smul.u32 %s1559, 128
    %s1561 = sadd.s32 %s1560, %s1544
    %s1562 = sld [smem:[#allocation4 + %s1561]]
    %s1563 = sadd.s32 %s1539, 6
    %s1564 = smul.u32 %s1563, 128
    %s1565 = sadd.s32 %s1564, %s1544
    %s1566 = sld [smem:[#allocation4 + %s1565]]
    %s1567 = sadd.s32 %s1539, 7
    %s1568 = smul.u32 %s1567, 128
    %s1569 = sadd.s32 %s1568, %s1544
    %s1570 = sld [smem:[#allocation4 + %s1569]]
    %s1571 = sadd.s32 %s1539, 8
    %s1572 = smul.u32 %s1571, 128
    %s1573 = sadd.s32 %s1572, %s1544
    %s1574 = sld [smem:[#allocation4 + %s1573]]
    %s1575 = sadd.s32 %s1539, 9
    %s1576 = smul.u32 %s1575, 128
    %s1577 = sadd.s32 %s1576, %s1544
    %s1578 = sld [smem:[#allocation4 + %s1577]]
    %s1579 = sadd.s32 %s1539, 10
    %s1580 = smul.u32 %s1579, 128
    %s1581 = sadd.s32 %s1580, %s1544
    %s1582 = sld [smem:[#allocation4 + %s1581]]
    %s1583 = sadd.s32 %s1539, 11
    %s1584 = smul.u32 %s1583, 128
    %s1585 = sadd.s32 %s1584, %s1544
    %s1586 = sld [smem:[#allocation4 + %s1585]]
    %s1587 = sadd.s32 %s1539, 12
    %s1588 = smul.u32 %s1587, 128
    %s1589 = sadd.s32 %s1588, %s1544
    %s1590 = sld [smem:[#allocation4 + %s1589]]
    %s1591 = sadd.s32 %s1539, 13
    %s1592 = smul.u32 %s1591, 128
    %s1593 = sadd.s32 %s1592, %s1544
    %s1594 = sld [smem:[#allocation4 + %s1593]]
    %s1595 = sadd.s32 %s1539, 14
    %s1596 = smul.u32 %s1595, 128
    %s1597 = sadd.s32 %s1596, %s1544
    %s1598 = sld [smem:[#allocation4 + %s1597]]
    %s1599 = sadd.s32 %s1539, 15
    %s1600 = smul.u32 %s1599, 128
    %s1601 = sadd.s32 %s1600, %s1544
    %s1602 = sld [smem:[#allocation4 + %s1601]]
    %s1603 = sadd.s32 %s1539, 16
    %s1604 = smul.u32 %s1603, 128
    %s1605 = sadd.s32 %s1604, %s1544
    %s1606 = sld [smem:[#allocation4 + %s1605]]
    %s1607 = sadd.s32 %s1539, 17
    %s1608 = smul.u32 %s1607, 128
    %s1609 = sadd.s32 %s1608, %s1544
    %s1610 = sld [smem:[#allocation4 + %s1609]]
    %s1611 = sadd.s32 %s1539, 18
    %s1612 = smul.u32 %s1611, 128
    %s1613 = sadd.s32 %s1612, %s1544
    %s1614 = sld [smem:[#allocation4 + %s1613]]
    %s1615 = sadd.s32 %s1539, 19
    %s1616 = smul.u32 %s1615, 128
    %s1617 = sadd.s32 %s1616, %s1544
    %s1618 = sld [smem:[#allocation4 + %s1617]]
    %s1619 = sadd.s32 %s1539, 20
    %s1620 = smul.u32 %s1619, 128
    %s1621 = sadd.s32 %s1620, %s1544
    %s1622 = sld [smem:[#allocation4 + %s1621]]
    %s1623 = sadd.s32 %s1539, 21
    %s1624 = smul.u32 %s1623, 128
    %s1625 = sadd.s32 %s1624, %s1544
    %s1626 = sld [smem:[#allocation4 + %s1625]]
    %s1627 = sadd.s32 %s1539, 22
    %s1628 = smul.u32 %s1627, 128
    %s1629 = sadd.s32 %s1628, %s1544
    %s1630 = sld [smem:[#allocation4 + %s1629]]
    %s1631 = sadd.s32 %s1539, 23
    %s1632 = smul.u32 %s1631, 128
    %s1633 = sadd.s32 %s1632, %s1544
    %s1634 = sld [smem:[#allocation4 + %s1633]]
    %v1635 = vstv %s1538
    %v1636 = vmul.f32 %v1635, %v1520
    %v1637 = vstv %s1546
    %v1638 = vmul.f32 %v1637, %v1523
    %v1639 = vsub.f32 %v1636, %v1638
    %v1640 = vstv %s1550
    %v1641 = vmul.f32 %v1640, %v1526
    %v1642 = vadd.f32 %v1639, %v1641
    %v1643 = vstv %s1554
    %v1644 = vmul.f32 %v1643, %v1529
    %v1645 = vadd.f32 %v1642, %v1644
    %v1646 = vstv %s1558
    %v1647 = vmul.f32 %v1646, %v1504
    %v1648 = vadd.f32 %v1645, %v1647
    %v1649 = vstv %s1562
    %v1650 = vmul.f32 %v1649, %v1517
    %v1651 = vsub.f32 %v1648, %v1650
    %v1652 = vstv %s1566
    %v1653 = vadd.f32 %v1651, %v1652
    %v1654 = vmul.f32 %v1635, %v1523
    %v1655 = vmul.f32 %v1637, %v1520
    %v1656 = vadd.f32 %v1654, %v1655
    %v1657 = vmul.f32 %v1643, %v1526
    %v1658 = vadd.f32 %v1656, %v1657
    %v1659 = vmul.f32 %v1640, %v1529
    %v1660 = vsub.f32 %v1658, %v1659
    %v1661 = vmul.f32 %v1646, %v1517
    %v1662 = vadd.f32 %v1660, %v1661
    %v1663 = vmul.f32 %v1649, %v1504
    %v1664 = vadd.f32 %v1662, %v1663
    %v1665 = vstv %s1570
    %v1666 = vadd.f32 %v1664, %v1665
    %v1667 = vstv %s1574
    %v1668 = vmul.f32 %v1667, %v1520
    %v1669 = vstv %s1578
    %v1670 = vmul.f32 %v1669, %v1523
    %v1671 = vadd.f32 %v1668, %v1670
    %v1672 = vstv %s1582
    %v1673 = vmul.f32 %v1672, %v1526
    %v1674 = vadd.f32 %v1671, %v1673
    %v1675 = vstv %s1586
    %v1676 = vmul.f32 %v1675, %v1529
    %v1677 = vsub.f32 %v1674, %v1676
    %v1678 = vstv %s1590
    %v1679 = vmul.f32 %v1678, %v1504
    %v1680 = vadd.f32 %v1677, %v1679
    %v1681 = vstv %s1594
    %v1682 = vmul.f32 %v1681, %v1517
    %v1683 = vsub.f32 %v1680, %v1682
    %v1684 = vstv %s1598
    %v1685 = vadd.f32 %v1683, %v1684
    %v1686 = vmul.f32 %v1669, %v1520
    %v1687 = vmul.f32 %v1667, %v1523
    %v1688 = vsub.f32 %v1686, %v1687
    %v1689 = vmul.f32 %v1672, %v1529
    %v1690 = vadd.f32 %v1688, %v1689
    %v1691 = vmul.f32 %v1675, %v1526
    %v1692 = vadd.f32 %v1690, %v1691
    %v1693 = vmul.f32 %v1678, %v1517
    %v1694 = vadd.f32 %v1692, %v1693
    %v1695 = vmul.f32 %v1681, %v1504
    %v1696 = vadd.f32 %v1694, %v1695
    %v1697 = vstv %s1602
    %v1698 = vadd.f32 %v1696, %v1697
    %v1699 = vstv %s1606
    %v1700 = vmul.f32 %v1699, %v1520
    %v1701 = vstv %s1610
    %v1702 = vmul.f32 %v1701, %v1523
    %v1703 = vsub.f32 %v1700, %v1702
    %v1704 = vstv %s1614
    %v1705 = vmul.f32 %v1704, %v1526
    %v1706 = vadd.f32 %v1703, %v1705
    %v1707 = vstv %s1618
    %v1708 = vmul.f32 %v1707, %v1529
    %v1709 = vsub.f32 %v1706, %v1708
    %v1710 = vstv %s1622
    %v1711 = vmul.f32 %v1710, %v1504
    %v1712 = vadd.f32 %v1709, %v1711
    %v1713 = vstv %s1626
    %v1714 = vmul.f32 %v1713, %v1517
    %v1715 = vsub.f32 %v1712, %v1714
    %v1716 = vstv %s1630
    %v1717 = vadd.f32 %v1715, %v1716
    %v1718 = vmul.f32 %v1701, %v1520
    %v1719 = vmul.f32 %v1699, %v1523
    %v1720 = vadd.f32 %v1718, %v1719
    %v1721 = vmul.f32 %v1707, %v1526
    %v1722 = vadd.f32 %v1720, %v1721
    %v1723 = vmul.f32 %v1704, %v1529
    %v1724 = vadd.f32 %v1722, %v1723
    %v1725 = vmul.f32 %v1713, %v1504
    %v1726 = vadd.f32 %v1724, %v1725
    %v1727 = vmul.f32 %v1710, %v1517
    %v1728 = vadd.f32 %v1726, %v1727
    %v1729 = vstv %s1634
    %v1730 = vadd.f32 %v1728, %v1729
    %1731 = vrot.lane.b32.xlu0 %v1653, 1
    %v1732 = vpop.permute.xlu0 %1731
    %v1733 = vsel %vm18, 0.0, %v1732
    %1734 = vrot.lane.b32.xlu0 %v1666, 1
    %v1735 = vpop.permute.xlu0 %1734
    %v1736 = vsel %vm18, 0.0, %v1735
    %1737 = vrot.lane.b32.xlu0 %v1685, 127
    %v1738 = vpop.permute.xlu0 %1737
    %v1739 = vsel %vm19, 0.0, %v1738
    %1740 = vrot.lane.b32.xlu0 %v1698, 127
    %v1741 = vpop.permute.xlu0 %1740
    %v1742 = vsel %vm19, 0.0, %v1741
    %s1743 = scalar_lea.vmem [#allocation5], 56
    %1744 = vst [vmem:[%s1743] sm:$0x1] %v1733
    %1745 = vst [vmem:[%s1743 + $0x1] sm:$0x1] %v1736
    %1746 = vst [vmem:[%s1743 + $0x2] sm:$0x1] %v1739
    %1747 = vst [vmem:[%s1743 + $0x3] sm:$0x1] %v1742
    %1748 = vst [vmem:[%s1743 + $0x4] sm:$0x1] %v1717
    %1749 = vst [vmem:[%s1743 + $0x5] sm:$0x1] %v1730
    %1750 = vst [vmem:[#allocation2] sm:$0x1] %v1733
    %1751 = vst [vmem:[%s38] sm:$0x1] %v1736
    %1752 = vst [vmem:[%s40] sm:$0x1] %v1739
    %1753 = vst [vmem:[%s42] sm:$0x1] %v1742
    %1754 = vst [vmem:[%s44] sm:$0x1] %v1717
    %1755 = vst [vmem:[%s46] sm:$0x1] %v1730
    // Predicated region
    $region6: #{tpu_custom_call.1} parent=1 // pred_check
      _
    $region7: #{tpu_custom_call.1} parent=1 // pred_check_branch
      %1757 = sbr.rel (0) target = $region9
    $region8: #{tpu_custom_call.1} parent=1 // pred_region
      %s1759 = ssub.s32 1024, 1024
      %1760 = vsyncadd [#allocation6], %s1759
      %s1761 = sshll.u32 [#allocation5], 4
      %s1762 = int_to_ptr.vmem [resolvable:$true] %s1761
      %1767 = dma.vmem_to_hbm [thread:$0]  %s1762, 1024, %s1, [#allocation6], 128, 128, 8
    $region9: #{tpu_custom_call.1} parent=1 // pred_fallthru
      _
    // Predicated region
    $region10: #{tpu_custom_call.1} parent=1 // pred_check
      _
    $region11: #{tpu_custom_call.1} parent=1 // pred_check_branch
      %1769 = sbr.rel (0) target = $region13
    $region12: #{tpu_custom_call.1} parent=1 // pred_region
      %1770 = dma.done [#allocation6], 1024
    $region13: #{tpu_custom_call.1} parent=1 // pred_fallthru
      _
    %1771 = vsyncpa [#allocation6], 1

</llo_original>
